<compile_context>
chip_gen: v6e
topology: v6e:2x2x1
jax: 0.10.0
libtpu: 0.0.40
codegen_flags: <defaults>
</compile_context>

<pallas_src>
import functools

import jax
import jax.numpy as jnp
import numpy as np
from jax.experimental import pallas as pl
from jax.experimental.pallas import tpu as pltpu


def _blurpool_conv_kernel(x_ref, w_ref, m_ref, o_ref, ext_ref,
                          *, W, Cin, Cout, M, PAD):
    """One grid step = TN whole images, rows r=(n,h,w), lanes = channels.

    x_ref  : (M, Cin)          unpadded NHWC activations (row-major over n,h,w)
    w_ref  : (3, 3, Cin, Cout) conv weight taps, bf16
    m_ref  : (M, 4)            0/1 masks [j-1 ok, j+1 ok, i-1 ok, i+1 ok]
    o_ref  : (M, Cout)         conv output
    ext_ref: (M+2*PAD, Cin)    f32 scratch with PAD zero halo rows on both ends
    """
    zeros_halo = jnp.zeros((PAD, Cin), jnp.float32)
    # Re-zero only the halo rows each step (cheap) instead of the whole scratch;
    # doing it every step keeps correctness when the parallel grid axis is
    # sharded across TensorCores (a program_id==0-only init would not run on
    # the second core).
    ext_ref[0:PAD, :] = zeros_halo
    ext_ref[PAD + M:PAD + M + PAD, :] = zeros_halo

    jl = m_ref[:, 0:1]    # j-1 in range
    jr = m_ref[:, 1:2]    # j+1 in range
    iu = m_ref[:, 2:3]    # i-1 in range
    idn = m_ref[:, 3:4]   # i+1 in range

    def tap(d):           # rows r -> source row r+d (zero outside the block)
        return ext_ref[PAD + d:PAD + d + M, :]

    # --- separable [1,2,1]/4 blur with zero padding (all f32 on the VPU) ---
    x = x_ref[...].astype(jnp.float32)
    ext_ref[PAD:PAD + M, :] = x
    th = 0.5 * x + 0.25 * (jl * tap(-1) + jr * tap(1))        # horizontal pass
    ext_ref[PAD:PAD + M, :] = th
    blur = 0.5 * th + 0.25 * (iu * tap(-W) + idn * tap(W))    # vertical pass
    ext_ref[PAD:PAD + M, :] = blur

    # --- 3x3 conv (pad 1): 9 exact-FLOPs per-tap MXU dots, bf16 in / f32 acc ---
    acc = jnp.zeros((M, Cout), jnp.float32)
    for kh in range(3):
        vm = None if kh == 1 else (iu if kh == 0 else idn)
        for kw in range(3):
            hm = None if kw == 1 else (jl if kw == 0 else jr)
            mask = vm if hm is None else (hm if vm is None else vm * hm)
            t = blur if (kh == 1 and kw == 1) else tap((kh - 1) * W + (kw - 1))
            if mask is not None:
                t = t * mask
            acc = acc + jnp.dot(t.astype(jnp.bfloat16), w_ref[kh, kw],
                                preferred_element_type=jnp.float32)
    o_ref[...] = acc.astype(o_ref.dtype)


def _pick_tn(N, H, W, Cin, Cout):
    """Images per grid step: smallest divisor of N whose row count TN*H*W is
    8-aligned and >= 256 (fills the MXU M dimension), capped so the per-step
    f32 working set stays well inside v7x's 64 MiB VMEM.  Taking the smallest
    such TN keeps the 'parallel' grid axis long (both v7x TensorCores busy)."""
    rows_img = H * W
    bytes_per_img = rows_img * 4 * (6 * Cin + 2 * Cout)   # rough working set
    cap = max(1, (24 * 1024 * 1024) // max(bytes_per_img, 1))
    choice = N
    for tn in range(1, N + 1):
        if N % tn:
            continue
        rows = tn * rows_img
        if tn != N and rows % 8 != 0:
            continue
        choice = tn
        if rows >= 256 or tn >= cap:
            break
    return choice


def blurpool_conv2d(x_nchw, conv_w_oihw):
    """Forward of BlurPoolConv2d: depthwise [1,2,1]^2/16 blur (pad 1), then the
    wrapped Conv2d(3x3, stride 1, pad 1, bias=False)."""
    N, Cin, H, W = x_nchw.shape
    Cout, Cin_w, KH, KW = conv_w_oihw.shape
    assert Cin_w == Cin and (KH, KW) == (3, 3)

    TN = _pick_tn(N, H, W, Cin, Cout)
    G = N // TN
    M = TN * H * W
    PAD = -(-(W + 1) // 8) * 8            # halo rows (>= W+1, 8-aligned)

    # glue: NCHW -> NHWC -> (N*H*W, Cin); channels land on the lane axis.
    # TODO(synk): the NCHW<->NHWC transposes remain XLA glue; folding them in
    # would require an in-kernel channel transpose.
    x_rows = jnp.transpose(x_nchw, (0, 2, 3, 1)).reshape(N * H * W, Cin)

    # conv weight (Cout,Cin,3,3) -> (kh,kw,Cin,Cout), bf16 for the MXU.
    w_taps = jnp.transpose(conv_w_oihw, (2, 3, 1, 0)).astype(jnp.bfloat16)

    # 0/1 border-validity masks per row of a block (identical for every block).
    r = np.arange(M)
    jj = r % W
    ii = (r // W) % H
    masks = jnp.asarray(np.stack([jj >= 1, jj <= W - 2, ii >= 1, ii <= H - 2],
                                 axis=1).astype(np.float32))

    kernel = functools.partial(_blurpool_conv_kernel,
                               W=W, Cin=Cin, Cout=Cout, M=M, PAD=PAD)

    cost = pl.CostEstimate(
        flops=N * H * W * (2 * 9 * Cin * Cout + 12 * Cin),
        transcendentals=0,
        bytes_accessed=(N * H * W * (Cin + Cout) * x_nchw.dtype.itemsize
                        + int(w_taps.size) * 2 + int(masks.size) * 4))

    out_rows = pl.pallas_call(
        kernel,
        out_shape=jax.ShapeDtypeStruct((N * H * W, Cout), x_nchw.dtype),
        grid=(G,),
        in_specs=[
            pl.BlockSpec((M, Cin), lambda g: (g, 0)),
            pl.BlockSpec((3, 3, Cin, Cout), lambda g: (0, 0, 0, 0),
                         pipeline_mode=pl.Buffered(1)),     # grid-invariant
            pl.BlockSpec((M, 4), lambda g: (0, 0),
                         pipeline_mode=pl.Buffered(1)),     # grid-invariant
        ],
        out_specs=pl.BlockSpec((M, Cout), lambda g: (g, 0)),
        scratch_shapes=[pltpu.VMEM((M + 2 * PAD, Cin), jnp.float32)],
        compiler_params=pltpu.CompilerParams(
            dimension_semantics=("parallel",),
            vmem_limit_bytes=48 * 1024 * 1024),
        cost_estimate=cost,
    )(x_rows, w_taps, masks)

    # glue: (N*H*W, Cout) -> NCHW
    return jnp.transpose(out_rows.reshape(N, H, W, Cout), (0, 3, 1, 2))


def _reference(x_nchw, conv_w_oihw):
    """Pure-JAX (f32) reference mirroring the PyTorch forward."""
    Cin = x_nchw.shape[1]
    blur = jnp.array([[1., 2., 1.], [2., 4., 2.], [1., 2., 1.]], jnp.float32) / 16.0
    blur = jnp.broadcast_to(blur, (Cin, 1, 3, 3))
    blurred = jax.lax.conv_general_dilated(
        x_nchw, blur, window_strides=(1, 1), padding=((1, 1), (1, 1)),
        feature_group_count=Cin, dimension_numbers=("NCHW", "OIHW", "NCHW"))
    return jax.lax.conv_general_dilated(
        blurred, conv_w_oihw, window_strides=(1, 1), padding=((1, 1), (1, 1)),
        dimension_numbers=("NCHW", "OIHW", "NCHW"))


if __name__ == "__main__":
    N, Cin, H, W, Cout = 2, 4, 16, 16, 8
    key = jax.random.PRNGKey(0)
    kx, kw = jax.random.split(key)
    x = jax.random.normal(kx, (N, Cin, H, W), jnp.float32)
    # deterministic Kaiming-like init for the wrapped conv's weight (bias=False)
    conv_w = jax.random.normal(kw, (Cout, Cin, 3, 3), jnp.float32) * (2.0 / (Cin * 9)) ** 0.5

    out = jax.block_until_ready(blurpool_conv2d(x, conv_w))
    ref = jax.block_until_ready(_reference(x, conv_w))

    assert out.shape == (N, Cout, H, W), out.shape
    # bf16 MXU operands with f32 accumulation: ~0.3-0.5% relative error vs the
    # all-f32 XLA reference, hence the loosened tolerance.
    np.testing.assert_allclose(np.asarray(out), np.asarray(ref), rtol=2e-2, atol=2e-2)
    print("KERNEL_OK")
</pallas_src>

<mosaic_0001>
module attributes {stable_mosaic.version = 11 : i64} {
  func.func @_blurpool_conv_kernel(%arg0: i32, %arg1: memref<256x4xf32, #tpu.memory_space<vmem>>, %arg2: memref<3x3x4x8xbf16, #tpu.memory_space<vmem>>, %arg3: memref<256x4xf32, #tpu.memory_space<vmem>>, %arg4: memref<256x8xf32, #tpu.memory_space<vmem>>, %arg5: memref<304x4xf32, #tpu.memory_space<vmem>>) attributes {dimension_semantics = [#tpu.dimension_semantics<parallel>], iteration_bounds = array<i64: 2>, scalar_prefetch = 0 : i64, scratch_operands = 1 : i64, tpu.core_type = #tpu.core_type<tc>, window_params = [{transform_indices = @transform_0, window_bounds = array<i64: 256, 4>}, {pipeline_mode = #tpu.pipeline_mode<synchronous>, transform_indices = @transform_1, window_bounds = array<i64: 3, 3, 4, 8>}, {pipeline_mode = #tpu.pipeline_mode<synchronous>, transform_indices = @transform_2, window_bounds = array<i64: 256, 4>}, {transform_indices = @transform_3, window_bounds = array<i64: 256, 8>}]} {
    %cst = arith.constant 0.000000e+00 : f32
    %0 = vector.broadcast %cst : f32 to vector<24x4xf32>
    %c0 = arith.constant 0 : index
    %c0_0 = arith.constant 0 : index
    %1 = vector.load %arg5[%c0, %c0_0] : memref<304x4xf32, #tpu.memory_space<vmem>>, vector<24x4xf32>
    tpu.vector_store %arg5[%c0, %c0_0], %0 {strides = array<i32>} : memref<304x4xf32, #tpu.memory_space<vmem>>, vector<24x4xf32>,
    %c280 = arith.constant 280 : index
    %c0_1 = arith.constant 0 : index
    %2 = vector.load %arg5[%c280, %c0_1] : memref<304x4xf32, #tpu.memory_space<vmem>>, vector<24x4xf32>
    tpu.vector_store %arg5[%c280, %c0_1], %0 {strides = array<i32>} : memref<304x4xf32, #tpu.memory_space<vmem>>, vector<24x4xf32>,
    %c0_2 = arith.constant 0 : index
    %c0_3 = arith.constant 0 : index
    %3 = vector.load %arg3[%c0_2, %c0_3] : memref<256x4xf32, #tpu.memory_space<vmem>>, vector<256x1xf32>
    %c0_4 = arith.constant 0 : index
    %c1 = arith.constant 1 : index
    %4 = vector.load %arg3[%c0_4, %c1] : memref<256x4xf32, #tpu.memory_space<vmem>>, vector<256x1xf32>
    %c0_5 = arith.constant 0 : index
    %c2 = arith.constant 2 : index
    %5 = vector.load %arg3[%c0_5, %c2] : memref<256x4xf32, #tpu.memory_space<vmem>>, vector<256x1xf32>
    %c0_6 = arith.constant 0 : index
    %c3 = arith.constant 3 : index
    %6 = vector.load %arg3[%c0_6, %c3] : memref<256x4xf32, #tpu.memory_space<vmem>>, vector<256x1xf32>
    %c0_7 = arith.constant 0 : index
    %c0_8 = arith.constant 0 : index
    %7 = vector.load %arg1[%c0_7, %c0_8] : memref<256x4xf32, #tpu.memory_space<vmem>>, vector<256x4xf32>
    %c24 = arith.constant 24 : index
    %c0_9 = arith.constant 0 : index
    %8 = vector.load %arg5[%c24, %c0_9] : memref<304x4xf32, #tpu.memory_space<vmem>>, vector<256x4xf32>
    tpu.vector_store %arg5[%c24, %c0_9], %7 {strides = array<i32>} : memref<304x4xf32, #tpu.memory_space<vmem>>, vector<256x4xf32>,
    %cst_10 = arith.constant 5.000000e-01 : f32
    %9 = vector.broadcast %cst_10 : f32 to vector<256x4xf32>
    %10 = arith.mulf %9, %7 : vector<256x4xf32>
    %c23 = arith.constant 23 : index
    %c0_11 = arith.constant 0 : index
    %11 = vector.load %arg5[%c23, %c0_11] : memref<304x4xf32, #tpu.memory_space<vmem>>, vector<256x4xf32>
    %12 = vector.broadcast %3 : vector<256x1xf32> to vector<256x4xf32>
    %13 = arith.mulf %12, %11 : vector<256x4xf32>
    %c25 = arith.constant 25 : index
    %c0_12 = arith.constant 0 : index
    %14 = vector.load %arg5[%c25, %c0_12] : memref<304x4xf32, #tpu.memory_space<vmem>>, vector<256x4xf32>
    %15 = vector.broadcast %4 : vector<256x1xf32> to vector<256x4xf32>
    %16 = arith.mulf %15, %14 : vector<256x4xf32>
    %17 = arith.addf %13, %16 : vector<256x4xf32>
    %cst_13 = arith.constant 2.500000e-01 : f32
    %18 = vector.broadcast %cst_13 : f32 to vector<256x4xf32>
    %19 = arith.mulf %18, %17 : vector<256x4xf32>
    %20 = arith.addf %10, %19 : vector<256x4xf32>
    %c24_14 = arith.constant 24 : index
    %c0_15 = arith.constant 0 : index
    %21 = vector.load %arg5[%c24_14, %c0_15] : memref<304x4xf32, #tpu.memory_space<vmem>>, vector<256x4xf32>
    tpu.vector_store %arg5[%c24_14, %c0_15], %20 {strides = array<i32>} : memref<304x4xf32, #tpu.memory_space<vmem>>, vector<256x4xf32>,
    %cst_16 = arith.constant 5.000000e-01 : f32
    %22 = vector.broadcast %cst_16 : f32 to vector<256x4xf32>
    %23 = arith.mulf %22, %20 : vector<256x4xf32>
    %c8 = arith.constant 8 : index
    %c0_17 = arith.constant 0 : index
    %24 = vector.load %arg5[%c8, %c0_17] : memref<304x4xf32, #tpu.memory_space<vmem>>, vector<256x4xf32>
    %25 = vector.broadcast %5 : vector<256x1xf32> to vector<256x4xf32>
    %26 = arith.mulf %25, %24 : vector<256x4xf32>
    %c40 = arith.constant 40 : index
    %c0_18 = arith.constant 0 : index
    %27 = vector.load %arg5[%c40, %c0_18] : memref<304x4xf32, #tpu.memory_space<vmem>>, vector<256x4xf32>
    %28 = vector.broadcast %6 : vector<256x1xf32> to vector<256x4xf32>
    %29 = arith.mulf %28, %27 : vector<256x4xf32>
    %30 = arith.addf %26, %29 : vector<256x4xf32>
    %cst_19 = arith.constant 2.500000e-01 : f32
    %31 = vector.broadcast %cst_19 : f32 to vector<256x4xf32>
    %32 = arith.mulf %31, %30 : vector<256x4xf32>
    %33 = arith.addf %23, %32 : vector<256x4xf32>
    %c24_20 = arith.constant 24 : index
    %c0_21 = arith.constant 0 : index
    %34 = vector.load %arg5[%c24_20, %c0_21] : memref<304x4xf32, #tpu.memory_space<vmem>>, vector<256x4xf32>
    tpu.vector_store %arg5[%c24_20, %c0_21], %33 {strides = array<i32>} : memref<304x4xf32, #tpu.memory_space<vmem>>, vector<256x4xf32>,
    %cst_22 = arith.constant 0.000000e+00 : f32
    %35 = vector.broadcast %cst_22 : f32 to vector<256x8xf32>
    %36 = arith.mulf %5, %3 : vector<256x1xf32>
    %c7 = arith.constant 7 : index
    %c0_23 = arith.constant 0 : index
    %37 = vector.load %arg5[%c7, %c0_23] : memref<304x4xf32, #tpu.memory_space<vmem>>, vector<256x4xf32>
    %38 = vector.broadcast %36 : vector<256x1xf32> to vector<256x4xf32>
    %39 = arith.mulf %37, %38 : vector<256x4xf32>
    %40 = arith.truncf %39 : vector<256x4xf32> to vector<256x4xbf16>
    %c0_24 = arith.constant 0 : index
    %c0_25 = arith.constant 0 : index
    %c0_26 = arith.constant 0 : index
    %c0_27 = arith.constant 0 : index
    %41 = vector.load %arg2[%c0_24, %c0_25, %c0_26, %c0_27] : memref<3x3x4x8xbf16, #tpu.memory_space<vmem>>, vector<1x1x4x8xbf16>
    %42 = vector.shape_cast %41 : vector<1x1x4x8xbf16> to vector<4x8xbf16>
    %cst_28 = arith.constant dense<0.000000e+00> : vector<256x8xf32>
    %43 = tpu.matmul %40, %42, %cst_28 {dimension_numbers = #tpu.dot_dimension_numbers<[1], [0], [0], [1], [0, 0, 1, 1], [], []>} : vector<256x4xbf16>, vector<4x8xbf16>, vector<256x8xf32> -> vector<256x8xf32>
    %44 = arith.addf %35, %43 : vector<256x8xf32>
    %c8_29 = arith.constant 8 : index
    %c0_30 = arith.constant 0 : index
    %45 = vector.load %arg5[%c8_29, %c0_30] : memref<304x4xf32, #tpu.memory_space<vmem>>, vector<256x4xf32>
    %46 = vector.broadcast %5 : vector<256x1xf32> to vector<256x4xf32>
    %47 = arith.mulf %45, %46 : vector<256x4xf32>
    %48 = arith.truncf %47 : vector<256x4xf32> to vector<256x4xbf16>
    %c0_31 = arith.constant 0 : index
    %c1_32 = arith.constant 1 : index
    %c0_33 = arith.constant 0 : index
    %c0_34 = arith.constant 0 : index
    %49 = vector.load %arg2[%c0_31, %c1_32, %c0_33, %c0_34] : memref<3x3x4x8xbf16, #tpu.memory_space<vmem>>, vector<1x1x4x8xbf16>
    %50 = vector.shape_cast %49 : vector<1x1x4x8xbf16> to vector<4x8xbf16>
    %cst_35 = arith.constant dense<0.000000e+00> : vector<256x8xf32>
    %51 = tpu.matmul %48, %50, %cst_35 {dimension_numbers = #tpu.dot_dimension_numbers<[1], [0], [0], [1], [0, 0, 1, 1], [], []>} : vector<256x4xbf16>, vector<4x8xbf16>, vector<256x8xf32> -> vector<256x8xf32>
    %52 = arith.addf %44, %51 : vector<256x8xf32>
    %53 = arith.mulf %5, %4 : vector<256x1xf32>
    %c9 = arith.constant 9 : index
    %c0_36 = arith.constant 0 : index
    %54 = vector.load %arg5[%c9, %c0_36] : memref<304x4xf32, #tpu.memory_space<vmem>>, vector<256x4xf32>
    %55 = vector.broadcast %53 : vector<256x1xf32> to vector<256x4xf32>
    %56 = arith.mulf %54, %55 : vector<256x4xf32>
    %57 = arith.truncf %56 : vector<256x4xf32> to vector<256x4xbf16>
    %c0_37 = arith.constant 0 : index
    %c2_38 = arith.constant 2 : index
    %c0_39 = arith.constant 0 : index
    %c0_40 = arith.constant 0 : index
    %58 = vector.load %arg2[%c0_37, %c2_38, %c0_39, %c0_40] : memref<3x3x4x8xbf16, #tpu.memory_space<vmem>>, vector<1x1x4x8xbf16>
    %59 = vector.shape_cast %58 : vector<1x1x4x8xbf16> to vector<4x8xbf16>
    %cst_41 = arith.constant dense<0.000000e+00> : vector<256x8xf32>
    %60 = tpu.matmul %57, %59, %cst_41 {dimension_numbers = #tpu.dot_dimension_numbers<[1], [0], [0], [1], [0, 0, 1, 1], [], []>} : vector<256x4xbf16>, vector<4x8xbf16>, vector<256x8xf32> -> vector<256x8xf32>
    %61 = arith.addf %52, %60 : vector<256x8xf32>
    %c23_42 = arith.constant 23 : index
    %c0_43 = arith.constant 0 : index
    %62 = vector.load %arg5[%c23_42, %c0_43] : memref<304x4xf32, #tpu.memory_space<vmem>>, vector<256x4xf32>
    %63 = vector.broadcast %3 : vector<256x1xf32> to vector<256x4xf32>
    %64 = arith.mulf %62, %63 : vector<256x4xf32>
    %65 = arith.truncf %64 : vector<256x4xf32> to vector<256x4xbf16>
    %c1_44 = arith.constant 1 : index
    %c0_45 = arith.constant 0 : index
    %c0_46 = arith.constant 0 : index
    %c0_47 = arith.constant 0 : index
    %66 = vector.load %arg2[%c1_44, %c0_45, %c0_46, %c0_47] : memref<3x3x4x8xbf16, #tpu.memory_space<vmem>>, vector<1x1x4x8xbf16>
    %67 = vector.shape_cast %66 : vector<1x1x4x8xbf16> to vector<4x8xbf16>
    %cst_48 = arith.constant dense<0.000000e+00> : vector<256x8xf32>
    %68 = tpu.matmul %65, %67, %cst_48 {dimension_numbers = #tpu.dot_dimension_numbers<[1], [0], [0], [1], [0, 0, 1, 1], [], []>} : vector<256x4xbf16>, vector<4x8xbf16>, vector<256x8xf32> -> vector<256x8xf32>
    %69 = arith.addf %61, %68 : vector<256x8xf32>
    %70 = arith.truncf %33 : vector<256x4xf32> to vector<256x4xbf16>
    %c1_49 = arith.constant 1 : index
    %c1_50 = arith.constant 1 : index
    %c0_51 = arith.constant 0 : index
    %c0_52 = arith.constant 0 : index
    %71 = vector.load %arg2[%c1_49, %c1_50, %c0_51, %c0_52] : memref<3x3x4x8xbf16, #tpu.memory_space<vmem>>, vector<1x1x4x8xbf16>
    %72 = vector.shape_cast %71 : vector<1x1x4x8xbf16> to vector<4x8xbf16>
    %cst_53 = arith.constant dense<0.000000e+00> : vector<256x8xf32>
    %73 = tpu.matmul %70, %72, %cst_53 {dimension_numbers = #tpu.dot_dimension_numbers<[1], [0], [0], [1], [0, 0, 1, 1], [], []>} : vector<256x4xbf16>, vector<4x8xbf16>, vector<256x8xf32> -> vector<256x8xf32>
    %74 = arith.addf %69, %73 : vector<256x8xf32>
    %c25_54 = arith.constant 25 : index
    %c0_55 = arith.constant 0 : index
    %75 = vector.load %arg5[%c25_54, %c0_55] : memref<304x4xf32, #tpu.memory_space<vmem>>, vector<256x4xf32>
    %76 = vector.broadcast %4 : vector<256x1xf32> to vector<256x4xf32>
    %77 = arith.mulf %75, %76 : vector<256x4xf32>
    %78 = arith.truncf %77 : vector<256x4xf32> to vector<256x4xbf16>
    %c1_56 = arith.constant 1 : index
    %c2_57 = arith.constant 2 : index
    %c0_58 = arith.constant 0 : index
    %c0_59 = arith.constant 0 : index
    %79 = vector.load %arg2[%c1_56, %c2_57, %c0_58, %c0_59] : memref<3x3x4x8xbf16, #tpu.memory_space<vmem>>, vector<1x1x4x8xbf16>
    %80 = vector.shape_cast %79 : vector<1x1x4x8xbf16> to vector<4x8xbf16>
    %cst_60 = arith.constant dense<0.000000e+00> : vector<256x8xf32>
    %81 = tpu.matmul %78, %80, %cst_60 {dimension_numbers = #tpu.dot_dimension_numbers<[1], [0], [0], [1], [0, 0, 1, 1], [], []>} : vector<256x4xbf16>, vector<4x8xbf16>, vector<256x8xf32> -> vector<256x8xf32>
    %82 = arith.addf %74, %81 : vector<256x8xf32>
    %83 = arith.mulf %6, %3 : vector<256x1xf32>
    %c39 = arith.constant 39 : index
    %c0_61 = arith.constant 0 : index
    %84 = vector.load %arg5[%c39, %c0_61] : memref<304x4xf32, #tpu.memory_space<vmem>>, vector<256x4xf32>
    %85 = vector.broadcast %83 : vector<256x1xf32> to vector<256x4xf32>
    %86 = arith.mulf %84, %85 : vector<256x4xf32>
    %87 = arith.truncf %86 : vector<256x4xf32> to vector<256x4xbf16>
    %c2_62 = arith.constant 2 : index
    %c0_63 = arith.constant 0 : index
    %c0_64 = arith.constant 0 : index
    %c0_65 = arith.constant 0 : index
    %88 = vector.load %arg2[%c2_62, %c0_63, %c0_64, %c0_65] : memref<3x3x4x8xbf16, #tpu.memory_space<vmem>>, vector<1x1x4x8xbf16>
    %89 = vector.shape_cast %88 : vector<1x1x4x8xbf16> to vector<4x8xbf16>
    %cst_66 = arith.constant dense<0.000000e+00> : vector<256x8xf32>
    %90 = tpu.matmul %87, %89, %cst_66 {dimension_numbers = #tpu.dot_dimension_numbers<[1], [0], [0], [1], [0, 0, 1, 1], [], []>} : vector<256x4xbf16>, vector<4x8xbf16>, vector<256x8xf32> -> vector<256x8xf32>
    %91 = arith.addf %82, %90 : vector<256x8xf32>
    %c40_67 = arith.constant 40 : index
    %c0_68 = arith.constant 0 : index
    %92 = vector.load %arg5[%c40_67, %c0_68] : memref<304x4xf32, #tpu.memory_space<vmem>>, vector<256x4xf32>
    %93 = vector.broadcast %6 : vector<256x1xf32> to vector<256x4xf32>
    %94 = arith.mulf %92, %93 : vector<256x4xf32>
    %95 = arith.truncf %94 : vector<256x4xf32> to vector<256x4xbf16>
    %c2_69 = arith.constant 2 : index
    %c1_70 = arith.constant 1 : index
    %c0_71 = arith.constant 0 : index
    %c0_72 = arith.constant 0 : index
    %96 = vector.load %arg2[%c2_69, %c1_70, %c0_71, %c0_72] : memref<3x3x4x8xbf16, #tpu.memory_space<vmem>>, vector<1x1x4x8xbf16>
    %97 = vector.shape_cast %96 : vector<1x1x4x8xbf16> to vector<4x8xbf16>
    %cst_73 = arith.constant dense<0.000000e+00> : vector<256x8xf32>
    %98 = tpu.matmul %95, %97, %cst_73 {dimension_numbers = #tpu.dot_dimension_numbers<[1], [0], [0], [1], [0, 0, 1, 1], [], []>} : vector<256x4xbf16>, vector<4x8xbf16>, vector<256x8xf32> -> vector<256x8xf32>
    %99 = arith.addf %91, %98 : vector<256x8xf32>
    %100 = arith.mulf %6, %4 : vector<256x1xf32>
    %c41 = arith.constant 41 : index
    %c0_74 = arith.constant 0 : index
    %101 = vector.load %arg5[%c41, %c0_74] : memref<304x4xf32, #tpu.memory_space<vmem>>, vector<256x4xf32>
    %102 = vector.broadcast %100 : vector<256x1xf32> to vector<256x4xf32>
    %103 = arith.mulf %101, %102 : vector<256x4xf32>
    %104 = arith.truncf %103 : vector<256x4xf32> to vector<256x4xbf16>
    %c2_75 = arith.constant 2 : index
    %c2_76 = arith.constant 2 : index
    %c0_77 = arith.constant 0 : index
    %c0_78 = arith.constant 0 : index
    %105 = vector.load %arg2[%c2_75, %c2_76, %c0_77, %c0_78] : memref<3x3x4x8xbf16, #tpu.memory_space<vmem>>, vector<1x1x4x8xbf16>
    %106 = vector.shape_cast %105 : vector<1x1x4x8xbf16> to vector<4x8xbf16>
    %cst_79 = arith.constant dense<0.000000e+00> : vector<256x8xf32>
    %107 = tpu.matmul %104, %106, %cst_79 {dimension_numbers = #tpu.dot_dimension_numbers<[1], [0], [0], [1], [0, 0, 1, 1], [], []>} : vector<256x4xbf16>, vector<4x8xbf16>, vector<256x8xf32> -> vector<256x8xf32>
    %108 = arith.addf %99, %107 : vector<256x8xf32>
    %c0_80 = arith.constant 0 : index
    %c0_81 = arith.constant 0 : index
    %109 = vector.load %arg4[%c0_80, %c0_81] : memref<256x8xf32, #tpu.memory_space<vmem>>, vector<256x8xf32>
    tpu.vector_store %arg4[%c0_80, %c0_81], %108 {strides = array<i32>} : memref<256x8xf32, #tpu.memory_space<vmem>>, vector<256x8xf32>,
    return
  }
  func.func @transform_0(%arg0: i32) -> (i32, i32) {
    %c0_i32 = arith.constant 0 : i32
    %c0_i32_0 = arith.constant 0 : i32
    return %arg0, %c0_i32 : i32, i32
  }
  func.func @transform_1(%arg0: i32) -> (i32, i32, i32, i32) {
    %c0_i32 = arith.constant 0 : i32
    %c0_i32_0 = arith.constant 0 : i32
    %c0_i32_1 = arith.constant 0 : i32
    %c0_i32_2 = arith.constant 0 : i32
    %c0_i32_3 = arith.constant 0 : i32
    return %c0_i32, %c0_i32_0, %c0_i32_1, %c0_i32_2 : i32, i32, i32, i32
  }
  func.func @transform_2(%arg0: i32) -> (i32, i32) {
    %c0_i32 = arith.constant 0 : i32
    %c0_i32_0 = arith.constant 0 : i32
    %c0_i32_1 = arith.constant 0 : i32
    return %c0_i32, %c0_i32_0 : i32, i32
  }
  func.func @transform_3(%arg0: i32) -> (i32, i32) {
    %c0_i32 = arith.constant 0 : i32
    %c0_i32_0 = arith.constant 0 : i32
    return %arg0, %c0_i32 : i32, i32
  }
}

</mosaic_0001>

<llo_original>
// kernel: tpu_custom_call.1
$region0: #{tpu_custom_call.1}
  #allocation0 [shape = 'u32[]', space=smem, size = 0x4, offset = 0x4, fixed_abs, tag = 'smem constant byte address 0x4 - core index']
  #allocation1 [shape = 'u32[144,128]{1,0:T(1,128)}', space=vmem, size = 0x12000, scoped, tag = 'internal scratch']
  #allocation2 [shape = 'f32[304,4]{1,0:T(8,128)}', space=vmem, size = 0x26000, scoped, tag = 'scratch operand']
  %s0 = inlined_call_operand.vmem [shape: f32[512,4], index: 0, kind: input, shape index: {}]
  %s1 = inlined_call_operand.vmem [shape: bf16[3,3,4,8], index: 1, kind: input, shape index: {}]
  %s2 = inlined_call_operand.vmem [shape: f32[256,4], index: 2, kind: input, shape index: {}]
  %s3 = inlined_call_operand.vmem [shape: f32[512,8], index: 3, kind: output, shape index: {}]
  %s4 = sld [smem:[#allocation0]]
  $region45: #{tpu_custom_call.1} parent=0
    _
  %s6 = ssub.s32 1, %s4
  %s7 = scalar_select 0, %s6, %s4
  loop: start=0, step=1, limit=4
  $region2: #{tpu_custom_call.1} parent=0 // loop_pre_header
    _
  $region3: #{tpu_custom_call.1} parent=0 // loop_header
    %s9 = sphi 0, %s13
    %p10 = scmp.ge.s32.totalorder %s9, 4
    %s19 = sphi 0, %s21
    %s22 = sphi 0, %s19
    %s23 = sphi 0, %s22
    %s39 = sphi 0, %s23
    %s43 = sphi 0, %s43
    %s45 = sphi 0, %s43
    %s46 = sphi 0, %s45
    %s60 = sphi 0, %s46
    %s64 = sphi 0, %s64
    %s66 = sphi 0, %s64
    %s67 = sphi 0, %s66
    %s81 = sphi 0, %s67
    %s87 = sphi 0, %s89
    %s90 = sphi 0, %s87
    %s91 = sphi 0, %s90
    %s107 = sphi 0, %s91
  $region4: #{tpu_custom_call.1} parent=0 // loop_header_branch
    %12 = sbr.rel (%p10) target = $region8
  $region5: #{tpu_custom_call.1} parent=0 // loop_body
    %s14 = ssub.s32 %s9, 1
    %s15 = ssub.s32 %s9, 2
    %s16 = sadd.s32 %s9, 1
    %s17 = ssub.s32 %s9, %s16
    %p18 = scmp.eq.s32.totalorder %s17, 0
    %s20 = sadd.s32 %s19, 1
    %s21 = scalar_select %p18, %s19, %s20
    %p24 = pneg %p18
    %p25 = scmp.eq.s32.totalorder %s9, 1
    %p26 = por %p24, %p25
    %p27 = scmp.ne.s32.totalorder %s19, %s22
    %p28 = scmp.eq.s32.totalorder %s9, 0
    %p29 = por %p27, %p28
    %p30 = scmp.ne.s32.totalorder %s19, %s22
    %p31 = scmp.eq.s32.totalorder %s14, 1
    %p32 = por %p30, %p31
    %p33 = scmp.ne.s32.totalorder %s22, %s23
    %p34 = scmp.eq.s32.totalorder %s14, 0
    %p35 = por %p33, %p34
    %p36 = scmp.ne.s32.totalorder %s22, %s23
    %p37 = scmp.eq.s32.totalorder %s15, 1
    %p38 = por %p36, %p37
    %p40 = scmp.ne.s32.totalorder %s23, %s39
    %p41 = scmp.eq.s32.totalorder %s15, 0
    %p42 = por %p40, %p41
    %s44 = sadd.s32 %s43, 1
    %p47 = scmp.eq.s32.totalorder %s9, 1
    %p48 = scmp.ne.s32.totalorder %s43, %s45
    %p49 = scmp.eq.s32.totalorder %s9, 0
    %p50 = por %p48, %p49
    %p51 = scmp.ne.s32.totalorder %s43, %s45
    %p52 = scmp.eq.s32.totalorder %s14, 1
    %p53 = por %p51, %p52
    %p54 = scmp.ne.s32.totalorder %s45, %s46
    %p55 = scmp.eq.s32.totalorder %s14, 0
    %p56 = por %p54, %p55
    %p57 = scmp.ne.s32.totalorder %s45, %s46
    %p58 = scmp.eq.s32.totalorder %s15, 1
    %p59 = por %p57, %p58
    %p61 = scmp.ne.s32.totalorder %s46, %s60
    %p62 = scmp.eq.s32.totalorder %s15, 0
    %p63 = por %p61, %p62
    %s65 = sadd.s32 %s64, 1
    %p68 = scmp.eq.s32.totalorder %s9, 1
    %p69 = scmp.ne.s32.totalorder %s64, %s66
    %p70 = scmp.eq.s32.totalorder %s9, 0
    %p71 = por %p69, %p70
    %p72 = scmp.ne.s32.totalorder %s64, %s66
    %p73 = scmp.eq.s32.totalorder %s14, 1
    %p74 = por %p72, %p73
    %p75 = scmp.ne.s32.totalorder %s66, %s67
    %p76 = scmp.eq.s32.totalorder %s14, 0
    %p77 = por %p75, %p76
    %p78 = scmp.ne.s32.totalorder %s66, %s67
    %p79 = scmp.eq.s32.totalorder %s15, 1
    %p80 = por %p78, %p79
    %p82 = scmp.ne.s32.totalorder %s67, %s81
    %p83 = scmp.eq.s32.totalorder %s15, 0
    %p84 = por %p82, %p83
    %s85 = ssub.s32 %s9, %s16
    %p86 = scmp.eq.s32.totalorder %s85, 0
    %s88 = sadd.s32 %s87, 1
    %s89 = scalar_select %p86, %s87, %s88
    %p92 = pneg %p86
    %p93 = scmp.eq.s32.totalorder %s9, 1
    %p94 = por %p92, %p93
    %p95 = scmp.ne.s32.totalorder %s87, %s90
    %p96 = scmp.eq.s32.totalorder %s9, 0
    %p97 = por %p95, %p96
    %p98 = scmp.ne.s32.totalorder %s87, %s90
    %p99 = scmp.eq.s32.totalorder %s14, 1
    %p100 = por %p98, %p99
    %p101 = scmp.ne.s32.totalorder %s90, %s91
    %p102 = scmp.eq.s32.totalorder %s14, 0
    %p103 = por %p101, %p102
    %p104 = scmp.ne.s32.totalorder %s90, %s91
    %p105 = scmp.eq.s32.totalorder %s15, 1
    %p106 = por %p104, %p105
    %p108 = scmp.ne.s32.totalorder %s91, %s107
    %p109 = scmp.eq.s32.totalorder %s15, 0
    %p110 = por %p108, %p109
    %p111 = scmp.le.s32.totalorder 1, %s9
    %p112 = scmp.lt.s32.totalorder %s9, 3
    %p113 = pnand %p111, %p112
    %p114 = pneg %p113
    // Predicated region
    $region9: #{tpu_custom_call.1} parent=5 // pred_check
      _
    $region10: #{tpu_custom_call.1} parent=5 // pred_check_branch
      %116 = sbr.rel (%p113) target = $region12
    $region11: #{tpu_custom_call.1} parent=5 // pred_region
      %s117 = ssub.s32 %s9, 1
      // Predicated region
      $region13: #{tpu_custom_call.1} parent=11 // pred_check
        %p118 = pneg %p56
      $region14: #{tpu_custom_call.1} parent=11 // pred_check_branch
        %120 = sbr.rel (%p118) target = $region16
      $region15: #{tpu_custom_call.1} parent=11 // pred_region
        _
      $region16: #{tpu_custom_call.1} parent=11 // pred_fallthru
        _
      // Predicated region
      $region17: #{tpu_custom_call.1} parent=11 // pred_check
        %p121 = pneg %p77
      $region18: #{tpu_custom_call.1} parent=11 // pred_check_branch
        %123 = sbr.rel (%p121) target = $region20
      $region19: #{tpu_custom_call.1} parent=11 // pred_region
        _
      $region20: #{tpu_custom_call.1} parent=11 // pred_fallthru
        _
    $region12: #{tpu_custom_call.1} parent=5 // pred_fallthru
      _
    %p124 = scmp.lt.s32.totalorder %s9, 2
    // Predicated region
    $region21: #{tpu_custom_call.1} parent=5 // pred_check
      %p125 = pneg %p124
    $region22: #{tpu_custom_call.1} parent=5 // pred_check_branch
      %127 = sbr.rel (%p125) target = $region24
    $region23: #{tpu_custom_call.1} parent=5 // pred_region
      // Predicated region
      $region25: #{tpu_custom_call.1} parent=23 // pred_check
        %p128 = pneg %p29
      $region26: #{tpu_custom_call.1} parent=23 // pred_check_branch
        %130 = sbr.rel (%p128) target = $region28
      $region27: #{tpu_custom_call.1} parent=23 // pred_region
        %s131 = smul.u32 32, %s9
        %p132 = scmp.lt.s32.totalorder %s131, 63
        %s133 = scalar_select %p132, %s131, 63
        %s134 = smul.addr %s133, 8
        %s135 = scalar_lea.vmem %s0, %s134
        %s136 = smul.u32 32, %s9
      $region28: #{tpu_custom_call.1} parent=23 // pred_fallthru
        _
    $region24: #{tpu_custom_call.1} parent=5 // pred_fallthru
      _
    %p137 = scmp.le.s32.totalorder 1, %s9
    %p138 = scmp.lt.s32.totalorder %s9, 3
    %p139 = pnand %p137, %p138
    %p140 = pneg %p139
    // Predicated region
    $region29: #{tpu_custom_call.1} parent=5 // pred_check
      _
    $region30: #{tpu_custom_call.1} parent=5 // pred_check_branch
      %142 = sbr.rel (%p139) target = $region32
    $region31: #{tpu_custom_call.1} parent=5 // pred_region
      %s143 = ssub.s32 %s9, 1
      %s144 = smul.u32 32, %s14
      %p145 = scmp.lt.s32.totalorder %s144, 63
      %s146 = scalar_select %p145, %s144, 63
      %s147 = smul.addr %s146, 8
      %s148 = scalar_lea.vmem %s0, %s147
      %p149 = pneg %p35
      %p150 = pneg %p32
      %p151 = pneg %p56
      %p152 = pneg %p53
      %p153 = pneg %p77
      %p154 = pneg %p74
      %p155 = pneg %p103
      %p156 = pneg %p100
      %s157 = smul.u32 32, %s14
      %p158 = scmp.lt.s32.totalorder %s157, 63
      %s159 = scalar_select %p158, %s157, 63
      %s160 = smul.addr %s159, 8
      %s161 = scalar_lea.vmem %s3, %s160
      %s162 = smul.u32 32, %s14
      %p163 = scmp.lt.s32.totalorder %s162, 63
      %s164 = scalar_select %p163, %s162, 63
      %s165 = smul.addr %s164, 8
      %s166 = scalar_lea.vmem %s0, %s165
      %s167 = smul.u32 32, %s14
      %s168 = smul.u32 32, %s14
      %p169 = scmp.lt.s32.totalorder %s168, 63
      %s170 = scalar_select %p169, %s168, 63
      %s171 = smul.addr %s170, 8
      %s172 = scalar_lea.vmem %s3, %s171
      %s173 = smul.u32 32, %s14
      %vm175 = vcmask 31744
      %176 = vst.msk [vmem:[#allocation2] sm:$0xff] %vm175, 0.0
      %177 = vst.msk [vmem:[#allocation2 + $0x8] sm:$0xff] %vm175, 0.0
      %178 = vst.msk [vmem:[#allocation2 + $0x10] sm:$0xff] %vm175, 0.0
      %179 = vst.msk [vmem:[#allocation2 + $0x118] sm:$0xff] %vm175, 0.0
      %180 = vst.msk [vmem:[#allocation2 + $0x120] sm:$0xff] %vm175, 0.0
      %181 = vst.msk [vmem:[#allocation2 + $0x128] sm:$0xff] %vm175, 0.0
      %v182 = vld [vmem:[%s2] sm:$0xff]
      %v183 = vld [vmem:[%s2 + $0x8] sm:$0xff]
      %v184 = vld [vmem:[%s2 + $0x10] sm:$0xff]
      %v185 = vld [vmem:[%s2 + $0x18] sm:$0xff]
      %v186 = vld [vmem:[%s2 + $0x20] sm:$0xff]
      %v187 = vld [vmem:[%s2 + $0x28] sm:$0xff]
      %v188 = vld [vmem:[%s2 + $0x30] sm:$0xff]
      %v189 = vld [vmem:[%s2 + $0x38] sm:$0xff]
      %v190 = vld [vmem:[%s2 + $0x40] sm:$0xff]
      %v191 = vld [vmem:[%s2 + $0x48] sm:$0xff]
      %v192 = vld [vmem:[%s2 + $0x50] sm:$0xff]
      %v193 = vld [vmem:[%s2 + $0x58] sm:$0xff]
      %v194 = vld [vmem:[%s2 + $0x60] sm:$0xff]
      %v195 = vld [vmem:[%s2 + $0x68] sm:$0xff]
      %v196 = vld [vmem:[%s2 + $0x70] sm:$0xff]
      %v197 = vld [vmem:[%s2 + $0x78] sm:$0xff]
      %v198 = vld [vmem:[%s2 + $0x80] sm:$0xff]
      %v199 = vld [vmem:[%s2 + $0x88] sm:$0xff]
      %v200 = vld [vmem:[%s2 + $0x90] sm:$0xff]
      %v201 = vld [vmem:[%s2 + $0x98] sm:$0xff]
      %v202 = vld [vmem:[%s2 + $0xa0] sm:$0xff]
      %v203 = vld [vmem:[%s2 + $0xa8] sm:$0xff]
      %v204 = vld [vmem:[%s2 + $0xb0] sm:$0xff]
      %v205 = vld [vmem:[%s2 + $0xb8] sm:$0xff]
      %v206 = vld [vmem:[%s2 + $0xc0] sm:$0xff]
      %v207 = vld [vmem:[%s2 + $0xc8] sm:$0xff]
      %v208 = vld [vmem:[%s2 + $0xd0] sm:$0xff]
      %v209 = vld [vmem:[%s2 + $0xd8] sm:$0xff]
      %v210 = vld [vmem:[%s2 + $0xe0] sm:$0xff]
      %v211 = vld [vmem:[%s2 + $0xe8] sm:$0xff]
      %v212 = vld [vmem:[%s2 + $0xf0] sm:$0xff]
      %v213 = vld [vmem:[%s2 + $0xf8] sm:$0xff]
      %v214 = vld [vmem:[%s166] sm:$0xff]
      %v215 = vld [vmem:[%s166 + $0x8] sm:$0xff]
      %v216 = vld [vmem:[%s166 + $0x10] sm:$0xff]
      %v217 = vld [vmem:[%s166 + $0x18] sm:$0xff]
      %v218 = vld [vmem:[%s166 + $0x20] sm:$0xff]
      %v219 = vld [vmem:[%s166 + $0x28] sm:$0xff]
      %v220 = vld [vmem:[%s166 + $0x30] sm:$0xff]
      %v221 = vld [vmem:[%s166 + $0x38] sm:$0xff]
      %v222 = vld [vmem:[%s166 + $0x40] sm:$0xff]
      %v223 = vld [vmem:[%s166 + $0x48] sm:$0xff]
      %v224 = vld [vmem:[%s166 + $0x50] sm:$0xff]
      %v225 = vld [vmem:[%s166 + $0x58] sm:$0xff]
      %v226 = vld [vmem:[%s166 + $0x60] sm:$0xff]
      %v227 = vld [vmem:[%s166 + $0x68] sm:$0xff]
      %v228 = vld [vmem:[%s166 + $0x70] sm:$0xff]
      %v229 = vld [vmem:[%s166 + $0x78] sm:$0xff]
      %v230 = vld [vmem:[%s166 + $0x80] sm:$0xff]
      %v231 = vld [vmem:[%s166 + $0x88] sm:$0xff]
      %v232 = vld [vmem:[%s166 + $0x90] sm:$0xff]
      %v233 = vld [vmem:[%s166 + $0x98] sm:$0xff]
      %v234 = vld [vmem:[%s166 + $0xa0] sm:$0xff]
      %v235 = vld [vmem:[%s166 + $0xa8] sm:$0xff]
      %v236 = vld [vmem:[%s166 + $0xb0] sm:$0xff]
      %v237 = vld [vmem:[%s166 + $0xb8] sm:$0xff]
      %v238 = vld [vmem:[%s166 + $0xc0] sm:$0xff]
      %v239 = vld [vmem:[%s166 + $0xc8] sm:$0xff]
      %v240 = vld [vmem:[%s166 + $0xd0] sm:$0xff]
      %v241 = vld [vmem:[%s166 + $0xd8] sm:$0xff]
      %v242 = vld [vmem:[%s166 + $0xe0] sm:$0xff]
      %v243 = vld [vmem:[%s166 + $0xe8] sm:$0xff]
      %v244 = vld [vmem:[%s166 + $0xf0] sm:$0xff]
      %v245 = vld [vmem:[%s166 + $0xf8] sm:$0xff]
      %246 = vst.msk [vmem:[#allocation2 + $0x18] sm:$0xff] %vm175, %v214
      %247 = vst.msk [vmem:[#allocation2 + $0x20] sm:$0xff] %vm175, %v215
      %248 = vst.msk [vmem:[#allocation2 + $0x28] sm:$0xff] %vm175, %v216
      %249 = vst.msk [vmem:[#allocation2 + $0x30] sm:$0xff] %vm175, %v217
      %250 = vst.msk [vmem:[#allocation2 + $0x38] sm:$0xff] %vm175, %v218
      %251 = vst.msk [vmem:[#allocation2 + $0x40] sm:$0xff] %vm175, %v219
      %252 = vst.msk [vmem:[#allocation2 + $0x48] sm:$0xff] %vm175, %v220
      %253 = vst.msk [vmem:[#allocation2 + $0x50] sm:$0xff] %vm175, %v221
      %254 = vst.msk [vmem:[#allocation2 + $0x58] sm:$0xff] %vm175, %v222
      %255 = vst.msk [vmem:[#allocation2 + $0x60] sm:$0xff] %vm175, %v223
      %256 = vst.msk [vmem:[#allocation2 + $0x68] sm:$0xff] %vm175, %v224
      %257 = vst.msk [vmem:[#allocation2 + $0x70] sm:$0xff] %vm175, %v225
      %258 = vst.msk [vmem:[#allocation2 + $0x78] sm:$0xff] %vm175, %v226
      %259 = vst.msk [vmem:[#allocation2 + $0x80] sm:$0xff] %vm175, %v227
      %260 = vst.msk [vmem:[#allocation2 + $0x88] sm:$0xff] %vm175, %v228
      %261 = vst.msk [vmem:[#allocation2 + $0x90] sm:$0xff] %vm175, %v229
      %262 = vst.msk [vmem:[#allocation2 + $0x98] sm:$0xff] %vm175, %v230
      %263 = vst.msk [vmem:[#allocation2 + $0xa0] sm:$0xff] %vm175, %v231
      %264 = vst.msk [vmem:[#allocation2 + $0xa8] sm:$0xff] %vm175, %v232
      %265 = vst.msk [vmem:[#allocation2 + $0xb0] sm:$0xff] %vm175, %v233
      %266 = vst.msk [vmem:[#allocation2 + $0xb8] sm:$0xff] %vm175, %v234
      %267 = vst.msk [vmem:[#allocation2 + $0xc0] sm:$0xff] %vm175, %v235
      %268 = vst.msk [vmem:[#allocation2 + $0xc8] sm:$0xff] %vm175, %v236
      %269 = vst.msk [vmem:[#allocation2 + $0xd0] sm:$0xff] %vm175, %v237
      %270 = vst.msk [vmem:[#allocation2 + $0xd8] sm:$0xff] %vm175, %v238
      %271 = vst.msk [vmem:[#allocation2 + $0xe0] sm:$0xff] %vm175, %v239
      %272 = vst.msk [vmem:[#allocation2 + $0xe8] sm:$0xff] %vm175, %v240
      %273 = vst.msk [vmem:[#allocation2 + $0xf0] sm:$0xff] %vm175, %v241
      %274 = vst.msk [vmem:[#allocation2 + $0xf8] sm:$0xff] %vm175, %v242
      %275 = vst.msk [vmem:[#allocation2 + $0x100] sm:$0xff] %vm175, %v243
      %276 = vst.msk [vmem:[#allocation2 + $0x108] sm:$0xff] %vm175, %v244
      %277 = vst.msk [vmem:[#allocation2 + $0x110] sm:$0xff] %vm175, %v245
      %v278 = vmul.f32 %v214, 0.5
      %v279 = vmul.f32 %v215, 0.5
      %v280 = vmul.f32 %v216, 0.5
      %v281 = vmul.f32 %v217, 0.5
      %v282 = vmul.f32 %v218, 0.5
      %v283 = vmul.f32 %v219, 0.5
      %v284 = vmul.f32 %v220, 0.5
      %v285 = vmul.f32 %v221, 0.5
      %v286 = vmul.f32 %v222, 0.5
      %v287 = vmul.f32 %v223, 0.5
      %v288 = vmul.f32 %v224, 0.5
      %v289 = vmul.f32 %v225, 0.5
      %v290 = vmul.f32 %v226, 0.5
      %v291 = vmul.f32 %v227, 0.5
      %v292 = vmul.f32 %v228, 0.5
      %v293 = vmul.f32 %v229, 0.5
      %v294 = vmul.f32 %v230, 0.5
      %v295 = vmul.f32 %v231, 0.5
      %v296 = vmul.f32 %v232, 0.5
      %v297 = vmul.f32 %v233, 0.5
      %v298 = vmul.f32 %v234, 0.5
      %v299 = vmul.f32 %v235, 0.5
      %v300 = vmul.f32 %v236, 0.5
      %v301 = vmul.f32 %v237, 0.5
      %v302 = vmul.f32 %v238, 0.5
      %v303 = vmul.f32 %v239, 0.5
      %v304 = vmul.f32 %v240, 0.5
      %v305 = vmul.f32 %v241, 0.5
      %v306 = vmul.f32 %v242, 0.5
      %v307 = vmul.f32 %v243, 0.5
      %v308 = vmul.f32 %v244, 0.5
      %v309 = vmul.f32 %v245, 0.5
      %v310 = vld [vmem:[#allocation2 + $0x17] sm:$0xff]
      %v311 = vld [vmem:[#allocation2 + $0x1f] sm:$0xff]
      %v312 = vld [vmem:[#allocation2 + $0x27] sm:$0xff]
      %v313 = vld [vmem:[#allocation2 + $0x2f] sm:$0xff]
      %v314 = vld [vmem:[#allocation2 + $0x37] sm:$0xff]
      %v315 = vld [vmem:[#allocation2 + $0x3f] sm:$0xff]
      %v316 = vld [vmem:[#allocation2 + $0x47] sm:$0xff]
      %v317 = vld [vmem:[#allocation2 + $0x4f] sm:$0xff]
      %v318 = vld [vmem:[#allocation2 + $0x57] sm:$0xff]
      %v319 = vld [vmem:[#allocation2 + $0x5f] sm:$0xff]
      %v320 = vld [vmem:[#allocation2 + $0x67] sm:$0xff]
      %v321 = vld [vmem:[#allocation2 + $0x6f] sm:$0xff]
      %v322 = vld [vmem:[#allocation2 + $0x77] sm:$0xff]
      %v323 = vld [vmem:[#allocation2 + $0x7f] sm:$0xff]
      %v324 = vld [vmem:[#allocation2 + $0x87] sm:$0xff]
      %v325 = vld [vmem:[#allocation2 + $0x8f] sm:$0xff]
      %v326 = vld [vmem:[#allocation2 + $0x97] sm:$0xff]
      %v327 = vld [vmem:[#allocation2 + $0x9f] sm:$0xff]
      %v328 = vld [vmem:[#allocation2 + $0xa7] sm:$0xff]
      %v329 = vld [vmem:[#allocation2 + $0xaf] sm:$0xff]
      %v330 = vld [vmem:[#allocation2 + $0xb7] sm:$0xff]
      %v331 = vld [vmem:[#allocation2 + $0xbf] sm:$0xff]
      %v332 = vld [vmem:[#allocation2 + $0xc7] sm:$0xff]
      %v333 = vld [vmem:[#allocation2 + $0xcf] sm:$0xff]
      %v334 = vld [vmem:[#allocation2 + $0xd7] sm:$0xff]
      %v335 = vld [vmem:[#allocation2 + $0xdf] sm:$0xff]
      %v336 = vld [vmem:[#allocation2 + $0xe7] sm:$0xff]
      %v337 = vld [vmem:[#allocation2 + $0xef] sm:$0xff]
      %v338 = vld [vmem:[#allocation2 + $0xf7] sm:$0xff]
      %v339 = vld [vmem:[#allocation2 + $0xff] sm:$0xff]
      %v340 = vld [vmem:[#allocation2 + $0x107] sm:$0xff]
      %v341 = vld [vmem:[#allocation2 + $0x10f] sm:$0xff]
      %343 = vset.pattern.permute.xlu0 0
      %344 = vperm.xlu0 %343, %v182
      %v345 = vpop.permute.xlu0 %344
      %348 = vset.pattern.permute.xlu0 0
      %349 = vperm.xlu0 %348, %v183
      %v350 = vpop.permute.xlu0 %349
      %353 = vset.pattern.permute.xlu0 0
      %354 = vperm.xlu0 %353, %v184
      %v355 = vpop.permute.xlu0 %354
      %358 = vset.pattern.permute.xlu0 0
      %359 = vperm.xlu0 %358, %v185
      %v360 = vpop.permute.xlu0 %359
      %363 = vset.pattern.permute.xlu0 0
      %364 = vperm.xlu0 %363, %v186
      %v365 = vpop.permute.xlu0 %364
      %368 = vset.pattern.permute.xlu0 0
      %369 = vperm.xlu0 %368, %v187
      %v370 = vpop.permute.xlu0 %369
      %373 = vset.pattern.permute.xlu0 0
      %374 = vperm.xlu0 %373, %v188
      %v375 = vpop.permute.xlu0 %374
      %378 = vset.pattern.permute.xlu0 0
      %379 = vperm.xlu0 %378, %v189
      %v380 = vpop.permute.xlu0 %379
      %383 = vset.pattern.permute.xlu0 0
      %384 = vperm.xlu0 %383, %v190
      %v385 = vpop.permute.xlu0 %384
      %388 = vset.pattern.permute.xlu0 0
      %389 = vperm.xlu0 %388, %v191
      %v390 = vpop.permute.xlu0 %389
      %393 = vset.pattern.permute.xlu0 0
      %394 = vperm.xlu0 %393, %v192
      %v395 = vpop.permute.xlu0 %394
      %398 = vset.pattern.permute.xlu0 0
      %399 = vperm.xlu0 %398, %v193
      %v400 = vpop.permute.xlu0 %399
      %403 = vset.pattern.permute.xlu0 0
      %404 = vperm.xlu0 %403, %v194
      %v405 = vpop.permute.xlu0 %404
      %408 = vset.pattern.permute.xlu0 0
      %409 = vperm.xlu0 %408, %v195
      %v410 = vpop.permute.xlu0 %409
      %413 = vset.pattern.permute.xlu0 0
      %414 = vperm.xlu0 %413, %v196
      %v415 = vpop.permute.xlu0 %414
      %418 = vset.pattern.permute.xlu0 0
      %419 = vperm.xlu0 %418, %v197
      %v420 = vpop.permute.xlu0 %419
      %423 = vset.pattern.permute.xlu0 0
      %424 = vperm.xlu0 %423, %v198
      %v425 = vpop.permute.xlu0 %424
      %428 = vset.pattern.permute.xlu0 0
      %429 = vperm.xlu0 %428, %v199
      %v430 = vpop.permute.xlu0 %429
      %433 = vset.pattern.permute.xlu0 0
      %434 = vperm.xlu0 %433, %v200
      %v435 = vpop.permute.xlu0 %434
      %438 = vset.pattern.permute.xlu0 0
      %439 = vperm.xlu0 %438, %v201
      %v440 = vpop.permute.xlu0 %439
      %443 = vset.pattern.permute.xlu0 0
      %444 = vperm.xlu0 %443, %v202
      %v445 = vpop.permute.xlu0 %444
      %448 = vset.pattern.permute.xlu0 0
      %449 = vperm.xlu0 %448, %v203
      %v450 = vpop.permute.xlu0 %449
      %453 = vset.pattern.permute.xlu0 0
      %454 = vperm.xlu0 %453, %v204
      %v455 = vpop.permute.xlu0 %454
      %458 = vset.pattern.permute.xlu0 0
      %459 = vperm.xlu0 %458, %v205
      %v460 = vpop.permute.xlu0 %459
      %463 = vset.pattern.permute.xlu0 0
      %464 = vperm.xlu0 %463, %v206
      %v465 = vpop.permute.xlu0 %464
      %468 = vset.pattern.permute.xlu0 0
      %469 = vperm.xlu0 %468, %v207
      %v470 = vpop.permute.xlu0 %469
      %473 = vset.pattern.permute.xlu0 0
      %474 = vperm.xlu0 %473, %v208
      %v475 = vpop.permute.xlu0 %474
      %478 = vset.pattern.permute.xlu0 0
      %479 = vperm.xlu0 %478, %v209
      %v480 = vpop.permute.xlu0 %479
      %483 = vset.pattern.permute.xlu0 0
      %484 = vperm.xlu0 %483, %v210
      %v485 = vpop.permute.xlu0 %484
      %488 = vset.pattern.permute.xlu0 0
      %489 = vperm.xlu0 %488, %v211
      %v490 = vpop.permute.xlu0 %489
      %493 = vset.pattern.permute.xlu0 0
      %494 = vperm.xlu0 %493, %v212
      %v495 = vpop.permute.xlu0 %494
      %498 = vset.pattern.permute.xlu0 0
      %499 = vperm.xlu0 %498, %v213
      %v500 = vpop.permute.xlu0 %499
      %v502 = vmul.f32 %v345, %v310
      %v503 = vmul.f32 %v350, %v311
      %v504 = vmul.f32 %v355, %v312
      %v505 = vmul.f32 %v360, %v313
      %v506 = vmul.f32 %v365, %v314
      %v507 = vmul.f32 %v370, %v315
      %v508 = vmul.f32 %v375, %v316
      %v509 = vmul.f32 %v380, %v317
      %v510 = vmul.f32 %v385, %v318
      %v511 = vmul.f32 %v390, %v319
      %v512 = vmul.f32 %v395, %v320
      %v513 = vmul.f32 %v400, %v321
      %v514 = vmul.f32 %v405, %v322
      %v515 = vmul.f32 %v410, %v323
      %v516 = vmul.f32 %v415, %v324
      %v517 = vmul.f32 %v420, %v325
      %v518 = vmul.f32 %v425, %v326
      %v519 = vmul.f32 %v430, %v327
      %v520 = vmul.f32 %v435, %v328
      %v521 = vmul.f32 %v440, %v329
      %v522 = vmul.f32 %v445, %v330
      %v523 = vmul.f32 %v450, %v331
      %v524 = vmul.f32 %v455, %v332
      %v525 = vmul.f32 %v460, %v333
      %v526 = vmul.f32 %v465, %v334
      %v527 = vmul.f32 %v470, %v335
      %v528 = vmul.f32 %v475, %v336
      %v529 = vmul.f32 %v480, %v337
      %v530 = vmul.f32 %v485, %v338
      %v531 = vmul.f32 %v490, %v339
      %v532 = vmul.f32 %v495, %v340
      %v533 = vmul.f32 %v500, %v341
      %v534 = vld [vmem:[#allocation2 + $0x19] sm:$0xff]
      %v535 = vld [vmem:[#allocation2 + $0x21] sm:$0xff]
      %v536 = vld [vmem:[#allocation2 + $0x29] sm:$0xff]
      %v537 = vld [vmem:[#allocation2 + $0x31] sm:$0xff]
      %v538 = vld [vmem:[#allocation2 + $0x39] sm:$0xff]
      %v539 = vld [vmem:[#allocation2 + $0x41] sm:$0xff]
      %v540 = vld [vmem:[#allocation2 + $0x49] sm:$0xff]
      %v541 = vld [vmem:[#allocation2 + $0x51] sm:$0xff]
      %v542 = vld [vmem:[#allocation2 + $0x59] sm:$0xff]
      %v543 = vld [vmem:[#allocation2 + $0x61] sm:$0xff]
      %v544 = vld [vmem:[#allocation2 + $0x69] sm:$0xff]
      %v545 = vld [vmem:[#allocation2 + $0x71] sm:$0xff]
      %v546 = vld [vmem:[#allocation2 + $0x79] sm:$0xff]
      %v547 = vld [vmem:[#allocation2 + $0x81] sm:$0xff]
      %v548 = vld [vmem:[#allocation2 + $0x89] sm:$0xff]
      %v549 = vld [vmem:[#allocation2 + $0x91] sm:$0xff]
      %v550 = vld [vmem:[#allocation2 + $0x99] sm:$0xff]
      %v551 = vld [vmem:[#allocation2 + $0xa1] sm:$0xff]
      %v552 = vld [vmem:[#allocation2 + $0xa9] sm:$0xff]
      %v553 = vld [vmem:[#allocation2 + $0xb1] sm:$0xff]
      %v554 = vld [vmem:[#allocation2 + $0xb9] sm:$0xff]
      %v555 = vld [vmem:[#allocation2 + $0xc1] sm:$0xff]
      %v556 = vld [vmem:[#allocation2 + $0xc9] sm:$0xff]
      %v557 = vld [vmem:[#allocation2 + $0xd1] sm:$0xff]
      %v558 = vld [vmem:[#allocation2 + $0xd9] sm:$0xff]
      %v559 = vld [vmem:[#allocation2 + $0xe1] sm:$0xff]
      %v560 = vld [vmem:[#allocation2 + $0xe9] sm:$0xff]
      %v561 = vld [vmem:[#allocation2 + $0xf1] sm:$0xff]
      %v562 = vld [vmem:[#allocation2 + $0xf9] sm:$0xff]
      %v563 = vld [vmem:[#allocation2 + $0x101] sm:$0xff]
      %v564 = vld [vmem:[#allocation2 + $0x109] sm:$0xff]
      %v565 = vld [vmem:[#allocation2 + $0x111] sm:$0xff]
      %566 = vset.pattern.permute.xlu0 1
      %567 = vperm.xlu0 %566, %v182
      %v568 = vpop.permute.xlu0 %567
      %570 = vset.pattern.permute.xlu0 1
      %571 = vperm.xlu0 %570, %v183
      %v572 = vpop.permute.xlu0 %571
      %574 = vset.pattern.permute.xlu0 1
      %575 = vperm.xlu0 %574, %v184
      %v576 = vpop.permute.xlu0 %575
      %578 = vset.pattern.permute.xlu0 1
      %579 = vperm.xlu0 %578, %v185
      %v580 = vpop.permute.xlu0 %579
      %582 = vset.pattern.permute.xlu0 1
      %583 = vperm.xlu0 %582, %v186
      %v584 = vpop.permute.xlu0 %583
      %586 = vset.pattern.permute.xlu0 1
      %587 = vperm.xlu0 %586, %v187
      %v588 = vpop.permute.xlu0 %587
      %590 = vset.pattern.permute.xlu0 1
      %591 = vperm.xlu0 %590, %v188
      %v592 = vpop.permute.xlu0 %591
      %594 = vset.pattern.permute.xlu0 1
      %595 = vperm.xlu0 %594, %v189
      %v596 = vpop.permute.xlu0 %595
      %598 = vset.pattern.permute.xlu0 1
      %599 = vperm.xlu0 %598, %v190
      %v600 = vpop.permute.xlu0 %599
      %602 = vset.pattern.permute.xlu0 1
      %603 = vperm.xlu0 %602, %v191
      %v604 = vpop.permute.xlu0 %603
      %606 = vset.pattern.permute.xlu0 1
      %607 = vperm.xlu0 %606, %v192
      %v608 = vpop.permute.xlu0 %607
      %610 = vset.pattern.permute.xlu0 1
      %611 = vperm.xlu0 %610, %v193
      %v612 = vpop.permute.xlu0 %611
      %614 = vset.pattern.permute.xlu0 1
      %615 = vperm.xlu0 %614, %v194
      %v616 = vpop.permute.xlu0 %615
      %618 = vset.pattern.permute.xlu0 1
      %619 = vperm.xlu0 %618, %v195
      %v620 = vpop.permute.xlu0 %619
      %622 = vset.pattern.permute.xlu0 1
      %623 = vperm.xlu0 %622, %v196
      %v624 = vpop.permute.xlu0 %623
      %626 = vset.pattern.permute.xlu0 1
      %627 = vperm.xlu0 %626, %v197
      %v628 = vpop.permute.xlu0 %627
      %630 = vset.pattern.permute.xlu0 1
      %631 = vperm.xlu0 %630, %v198
      %v632 = vpop.permute.xlu0 %631
      %634 = vset.pattern.permute.xlu0 1
      %635 = vperm.xlu0 %634, %v199
      %v636 = vpop.permute.xlu0 %635
      %638 = vset.pattern.permute.xlu0 1
      %639 = vperm.xlu0 %638, %v200
      %v640 = vpop.permute.xlu0 %639
      %642 = vset.pattern.permute.xlu0 1
      %643 = vperm.xlu0 %642, %v201
      %v644 = vpop.permute.xlu0 %643
      %646 = vset.pattern.permute.xlu0 1
      %647 = vperm.xlu0 %646, %v202
      %v648 = vpop.permute.xlu0 %647
      %650 = vset.pattern.permute.xlu0 1
      %651 = vperm.xlu0 %650, %v203
      %v652 = vpop.permute.xlu0 %651
      %654 = vset.pattern.permute.xlu0 1
      %655 = vperm.xlu0 %654, %v204
      %v656 = vpop.permute.xlu0 %655
      %658 = vset.pattern.permute.xlu0 1
      %659 = vperm.xlu0 %658, %v205
      %v660 = vpop.permute.xlu0 %659
      %662 = vset.pattern.permute.xlu0 1
      %663 = vperm.xlu0 %662, %v206
      %v664 = vpop.permute.xlu0 %663
      %666 = vset.pattern.permute.xlu0 1
      %667 = vperm.xlu0 %666, %v207
      %v668 = vpop.permute.xlu0 %667
      %670 = vset.pattern.permute.xlu0 1
      %671 = vperm.xlu0 %670, %v208
      %v672 = vpop.permute.xlu0 %671
      %674 = vset.pattern.permute.xlu0 1
      %675 = vperm.xlu0 %674, %v209
      %v676 = vpop.permute.xlu0 %675
      %678 = vset.pattern.permute.xlu0 1
      %679 = vperm.xlu0 %678, %v210
      %v680 = vpop.permute.xlu0 %679
      %682 = vset.pattern.permute.xlu0 1
      %683 = vperm.xlu0 %682, %v211
      %v684 = vpop.permute.xlu0 %683
      %686 = vset.pattern.permute.xlu0 1
      %687 = vperm.xlu0 %686, %v212
      %v688 = vpop.permute.xlu0 %687
      %690 = vset.pattern.permute.xlu0 1
      %691 = vperm.xlu0 %690, %v213
      %v692 = vpop.permute.xlu0 %691
      %v694 = vmul.f32 %v568, %v534
      %v695 = vmul.f32 %v572, %v535
      %v696 = vmul.f32 %v576, %v536
      %v697 = vmul.f32 %v580, %v537
      %v698 = vmul.f32 %v584, %v538
      %v699 = vmul.f32 %v588, %v539
      %v700 = vmul.f32 %v592, %v540
      %v701 = vmul.f32 %v596, %v541
      %v702 = vmul.f32 %v600, %v542
      %v703 = vmul.f32 %v604, %v543
      %v704 = vmul.f32 %v608, %v544
      %v705 = vmul.f32 %v612, %v545
      %v706 = vmul.f32 %v616, %v546
      %v707 = vmul.f32 %v620, %v547
      %v708 = vmul.f32 %v624, %v548
      %v709 = vmul.f32 %v628, %v549
      %v710 = vmul.f32 %v632, %v550
      %v711 = vmul.f32 %v636, %v551
      %v712 = vmul.f32 %v640, %v552
      %v713 = vmul.f32 %v644, %v553
      %v714 = vmul.f32 %v648, %v554
      %v715 = vmul.f32 %v652, %v555
      %v716 = vmul.f32 %v656, %v556
      %v717 = vmul.f32 %v660, %v557
      %v718 = vmul.f32 %v664, %v558
      %v719 = vmul.f32 %v668, %v559
      %v720 = vmul.f32 %v672, %v560
      %v721 = vmul.f32 %v676, %v561
      %v722 = vmul.f32 %v680, %v562
      %v723 = vmul.f32 %v684, %v563
      %v724 = vmul.f32 %v688, %v564
      %v725 = vmul.f32 %v692, %v565
      %v726 = vadd.f32 %v502, %v694
      %v727 = vadd.f32 %v503, %v695
      %v728 = vadd.f32 %v504, %v696
      %v729 = vadd.f32 %v505, %v697
      %v730 = vadd.f32 %v506, %v698
      %v731 = vadd.f32 %v507, %v699
      %v732 = vadd.f32 %v508, %v700
      %v733 = vadd.f32 %v509, %v701
      %v734 = vadd.f32 %v510, %v702
      %v735 = vadd.f32 %v511, %v703
      %v736 = vadd.f32 %v512, %v704
      %v737 = vadd.f32 %v513, %v705
      %v738 = vadd.f32 %v514, %v706
      %v739 = vadd.f32 %v515, %v707
      %v740 = vadd.f32 %v516, %v708
      %v741 = vadd.f32 %v517, %v709
      %v742 = vadd.f32 %v518, %v710
      %v743 = vadd.f32 %v519, %v711
      %v744 = vadd.f32 %v520, %v712
      %v745 = vadd.f32 %v521, %v713
      %v746 = vadd.f32 %v522, %v714
      %v747 = vadd.f32 %v523, %v715
      %v748 = vadd.f32 %v524, %v716
      %v749 = vadd.f32 %v525, %v717
      %v750 = vadd.f32 %v526, %v718
      %v751 = vadd.f32 %v527, %v719
      %v752 = vadd.f32 %v528, %v720
      %v753 = vadd.f32 %v529, %v721
      %v754 = vadd.f32 %v530, %v722
      %v755 = vadd.f32 %v531, %v723
      %v756 = vadd.f32 %v532, %v724
      %v757 = vadd.f32 %v533, %v725
      %v758 = vmul.f32 %v726, 0.25
      %v759 = vmul.f32 %v727, 0.25
      %v760 = vmul.f32 %v728, 0.25
      %v761 = vmul.f32 %v729, 0.25
      %v762 = vmul.f32 %v730, 0.25
      %v763 = vmul.f32 %v731, 0.25
      %v764 = vmul.f32 %v732, 0.25
      %v765 = vmul.f32 %v733, 0.25
      %v766 = vmul.f32 %v734, 0.25
      %v767 = vmul.f32 %v735, 0.25
      %v768 = vmul.f32 %v736, 0.25
      %v769 = vmul.f32 %v737, 0.25
      %v770 = vmul.f32 %v738, 0.25
      %v771 = vmul.f32 %v739, 0.25
      %v772 = vmul.f32 %v740, 0.25
      %v773 = vmul.f32 %v741, 0.25
      %v774 = vmul.f32 %v742, 0.25
      %v775 = vmul.f32 %v743, 0.25
      %v776 = vmul.f32 %v744, 0.25
      %v777 = vmul.f32 %v745, 0.25
      %v778 = vmul.f32 %v746, 0.25
      %v779 = vmul.f32 %v747, 0.25
      %v780 = vmul.f32 %v748, 0.25
      %v781 = vmul.f32 %v749, 0.25
      %v782 = vmul.f32 %v750, 0.25
      %v783 = vmul.f32 %v751, 0.25
      %v784 = vmul.f32 %v752, 0.25
      %v785 = vmul.f32 %v753, 0.25
      %v786 = vmul.f32 %v754, 0.25
      %v787 = vmul.f32 %v755, 0.25
      %v788 = vmul.f32 %v756, 0.25
      %v789 = vmul.f32 %v757, 0.25
      %v790 = vadd.f32 %v278, %v758
      %v791 = vadd.f32 %v279, %v759
      %v792 = vadd.f32 %v280, %v760
      %v793 = vadd.f32 %v281, %v761
      %v794 = vadd.f32 %v282, %v762
      %v795 = vadd.f32 %v283, %v763
      %v796 = vadd.f32 %v284, %v764
      %v797 = vadd.f32 %v285, %v765
      %v798 = vadd.f32 %v286, %v766
      %v799 = vadd.f32 %v287, %v767
      %v800 = vadd.f32 %v288, %v768
      %v801 = vadd.f32 %v289, %v769
      %v802 = vadd.f32 %v290, %v770
      %v803 = vadd.f32 %v291, %v771
      %v804 = vadd.f32 %v292, %v772
      %v805 = vadd.f32 %v293, %v773
      %v806 = vadd.f32 %v294, %v774
      %v807 = vadd.f32 %v295, %v775
      %v808 = vadd.f32 %v296, %v776
      %v809 = vadd.f32 %v297, %v777
      %v810 = vadd.f32 %v298, %v778
      %v811 = vadd.f32 %v299, %v779
      %v812 = vadd.f32 %v300, %v780
      %v813 = vadd.f32 %v301, %v781
      %v814 = vadd.f32 %v302, %v782
      %v815 = vadd.f32 %v303, %v783
      %v816 = vadd.f32 %v304, %v784
      %v817 = vadd.f32 %v305, %v785
      %v818 = vadd.f32 %v306, %v786
      %v819 = vadd.f32 %v307, %v787
      %v820 = vadd.f32 %v308, %v788
      %v821 = vadd.f32 %v309, %v789
      %822 = vst.msk [vmem:[#allocation2 + $0x18] sm:$0xff] %vm175, %v790
      %823 = vst.msk [vmem:[#allocation2 + $0x20] sm:$0xff] %vm175, %v791
      %824 = vst.msk [vmem:[#allocation2 + $0x28] sm:$0xff] %vm175, %v792
      %825 = vst.msk [vmem:[#allocation2 + $0x30] sm:$0xff] %vm175, %v793
      %826 = vst.msk [vmem:[#allocation2 + $0x38] sm:$0xff] %vm175, %v794
      %827 = vst.msk [vmem:[#allocation2 + $0x40] sm:$0xff] %vm175, %v795
      %828 = vst.msk [vmem:[#allocation2 + $0x48] sm:$0xff] %vm175, %v796
      %829 = vst.msk [vmem:[#allocation2 + $0x50] sm:$0xff] %vm175, %v797
      %830 = vst.msk [vmem:[#allocation2 + $0x58] sm:$0xff] %vm175, %v798
      %831 = vst.msk [vmem:[#allocation2 + $0x60] sm:$0xff] %vm175, %v799
      %832 = vst.msk [vmem:[#allocation2 + $0x68] sm:$0xff] %vm175, %v800
      %833 = vst.msk [vmem:[#allocation2 + $0x70] sm:$0xff] %vm175, %v801
      %834 = vst.msk [vmem:[#allocation2 + $0x78] sm:$0xff] %vm175, %v802
      %835 = vst.msk [vmem:[#allocation2 + $0x80] sm:$0xff] %vm175, %v803
      %836 = vst.msk [vmem:[#allocation2 + $0x88] sm:$0xff] %vm175, %v804
      %837 = vst.msk [vmem:[#allocation2 + $0x90] sm:$0xff] %vm175, %v805
      %838 = vst.msk [vmem:[#allocation2 + $0x98] sm:$0xff] %vm175, %v806
      %839 = vst.msk [vmem:[#allocation2 + $0xa0] sm:$0xff] %vm175, %v807
      %840 = vst.msk [vmem:[#allocation2 + $0xa8] sm:$0xff] %vm175, %v808
      %841 = vst.msk [vmem:[#allocation2 + $0xb0] sm:$0xff] %vm175, %v809
      %842 = vst.msk [vmem:[#allocation2 + $0xb8] sm:$0xff] %vm175, %v810
      %843 = vst.msk [vmem:[#allocation2 + $0xc0] sm:$0xff] %vm175, %v811
      %844 = vst.msk [vmem:[#allocation2 + $0xc8] sm:$0xff] %vm175, %v812
      %845 = vst.msk [vmem:[#allocation2 + $0xd0] sm:$0xff] %vm175, %v813
      %846 = vst.msk [vmem:[#allocation2 + $0xd8] sm:$0xff] %vm175, %v814
      %847 = vst.msk [vmem:[#allocation2 + $0xe0] sm:$0xff] %vm175, %v815
      %848 = vst.msk [vmem:[#allocation2 + $0xe8] sm:$0xff] %vm175, %v816
      %849 = vst.msk [vmem:[#allocation2 + $0xf0] sm:$0xff] %vm175, %v817
      %850 = vst.msk [vmem:[#allocation2 + $0xf8] sm:$0xff] %vm175, %v818
      %851 = vst.msk [vmem:[#allocation2 + $0x100] sm:$0xff] %vm175, %v819
      %852 = vst.msk [vmem:[#allocation2 + $0x108] sm:$0xff] %vm175, %v820
      %853 = vst.msk [vmem:[#allocation2 + $0x110] sm:$0xff] %vm175, %v821
      %v854 = vmul.f32 %v790, 0.5
      %v855 = vmul.f32 %v791, 0.5
      %v856 = vmul.f32 %v792, 0.5
      %v857 = vmul.f32 %v793, 0.5
      %v858 = vmul.f32 %v794, 0.5
      %v859 = vmul.f32 %v795, 0.5
      %v860 = vmul.f32 %v796, 0.5
      %v861 = vmul.f32 %v797, 0.5
      %v862 = vmul.f32 %v798, 0.5
      %v863 = vmul.f32 %v799, 0.5
      %v864 = vmul.f32 %v800, 0.5
      %v865 = vmul.f32 %v801, 0.5
      %v866 = vmul.f32 %v802, 0.5
      %v867 = vmul.f32 %v803, 0.5
      %v868 = vmul.f32 %v804, 0.5
      %v869 = vmul.f32 %v805, 0.5
      %v870 = vmul.f32 %v806, 0.5
      %v871 = vmul.f32 %v807, 0.5
      %v872 = vmul.f32 %v808, 0.5
      %v873 = vmul.f32 %v809, 0.5
      %v874 = vmul.f32 %v810, 0.5
      %v875 = vmul.f32 %v811, 0.5
      %v876 = vmul.f32 %v812, 0.5
      %v877 = vmul.f32 %v813, 0.5
      %v878 = vmul.f32 %v814, 0.5
      %v879 = vmul.f32 %v815, 0.5
      %v880 = vmul.f32 %v816, 0.5
      %v881 = vmul.f32 %v817, 0.5
      %v882 = vmul.f32 %v818, 0.5
      %v883 = vmul.f32 %v819, 0.5
      %v884 = vmul.f32 %v820, 0.5
      %v885 = vmul.f32 %v821, 0.5
      %v886 = vld [vmem:[#allocation2 + $0x8] sm:$0xff]
      %v887 = vld [vmem:[#allocation2 + $0x10] sm:$0xff]
      %v888 = vld [vmem:[#allocation2 + $0x18] sm:$0xff]
      %v889 = vld [vmem:[#allocation2 + $0x20] sm:$0xff]
      %v890 = vld [vmem:[#allocation2 + $0x28] sm:$0xff]
      %v891 = vld [vmem:[#allocation2 + $0x30] sm:$0xff]
      %v892 = vld [vmem:[#allocation2 + $0x38] sm:$0xff]
      %v893 = vld [vmem:[#allocation2 + $0x40] sm:$0xff]
      %v894 = vld [vmem:[#allocation2 + $0x48] sm:$0xff]
      %v895 = vld [vmem:[#allocation2 + $0x50] sm:$0xff]
      %v896 = vld [vmem:[#allocation2 + $0x58] sm:$0xff]
      %v897 = vld [vmem:[#allocation2 + $0x60] sm:$0xff]
      %v898 = vld [vmem:[#allocation2 + $0x68] sm:$0xff]
      %v899 = vld [vmem:[#allocation2 + $0x70] sm:$0xff]
      %v900 = vld [vmem:[#allocation2 + $0x78] sm:$0xff]
      %v901 = vld [vmem:[#allocation2 + $0x80] sm:$0xff]
      %v902 = vld [vmem:[#allocation2 + $0x88] sm:$0xff]
      %v903 = vld [vmem:[#allocation2 + $0x90] sm:$0xff]
      %v904 = vld [vmem:[#allocation2 + $0x98] sm:$0xff]
      %v905 = vld [vmem:[#allocation2 + $0xa0] sm:$0xff]
      %v906 = vld [vmem:[#allocation2 + $0xa8] sm:$0xff]
      %v907 = vld [vmem:[#allocation2 + $0xb0] sm:$0xff]
      %v908 = vld [vmem:[#allocation2 + $0xb8] sm:$0xff]
      %v909 = vld [vmem:[#allocation2 + $0xc0] sm:$0xff]
      %v910 = vld [vmem:[#allocation2 + $0xc8] sm:$0xff]
      %v911 = vld [vmem:[#allocation2 + $0xd0] sm:$0xff]
      %v912 = vld [vmem:[#allocation2 + $0xd8] sm:$0xff]
      %v913 = vld [vmem:[#allocation2 + $0xe0] sm:$0xff]
      %v914 = vld [vmem:[#allocation2 + $0xe8] sm:$0xff]
      %v915 = vld [vmem:[#allocation2 + $0xf0] sm:$0xff]
      %v916 = vld [vmem:[#allocation2 + $0xf8] sm:$0xff]
      %v917 = vld [vmem:[#allocation2 + $0x100] sm:$0xff]
      %918 = vset.pattern.permute.xlu0 2
      %919 = vperm.xlu0 %918, %v182
      %v920 = vpop.permute.xlu0 %919
      %922 = vset.pattern.permute.xlu0 2
      %923 = vperm.xlu0 %922, %v183
      %v924 = vpop.permute.xlu0 %923
      %926 = vset.pattern.permute.xlu0 2
      %927 = vperm.xlu0 %926, %v184
      %v928 = vpop.permute.xlu0 %927
      %930 = vset.pattern.permute.xlu0 2
      %931 = vperm.xlu0 %930, %v185
      %v932 = vpop.permute.xlu0 %931
      %934 = vset.pattern.permute.xlu0 2
      %935 = vperm.xlu0 %934, %v186
      %v936 = vpop.permute.xlu0 %935
      %938 = vset.pattern.permute.xlu0 2
      %939 = vperm.xlu0 %938, %v187
      %v940 = vpop.permute.xlu0 %939
      %942 = vset.pattern.permute.xlu0 2
      %943 = vperm.xlu0 %942, %v188
      %v944 = vpop.permute.xlu0 %943
      %946 = vset.pattern.permute.xlu0 2
      %947 = vperm.xlu0 %946, %v189
      %v948 = vpop.permute.xlu0 %947
      %950 = vset.pattern.permute.xlu0 2
      %951 = vperm.xlu0 %950, %v190
      %v952 = vpop.permute.xlu0 %951
      %954 = vset.pattern.permute.xlu0 2
      %955 = vperm.xlu0 %954, %v191
      %v956 = vpop.permute.xlu0 %955
      %958 = vset.pattern.permute.xlu0 2
      %959 = vperm.xlu0 %958, %v192
      %v960 = vpop.permute.xlu0 %959
      %962 = vset.pattern.permute.xlu0 2
      %963 = vperm.xlu0 %962, %v193
      %v964 = vpop.permute.xlu0 %963
      %966 = vset.pattern.permute.xlu0 2
      %967 = vperm.xlu0 %966, %v194
      %v968 = vpop.permute.xlu0 %967
      %970 = vset.pattern.permute.xlu0 2
      %971 = vperm.xlu0 %970, %v195
      %v972 = vpop.permute.xlu0 %971
      %974 = vset.pattern.permute.xlu0 2
      %975 = vperm.xlu0 %974, %v196
      %v976 = vpop.permute.xlu0 %975
      %978 = vset.pattern.permute.xlu0 2
      %979 = vperm.xlu0 %978, %v197
      %v980 = vpop.permute.xlu0 %979
      %982 = vset.pattern.permute.xlu0 2
      %983 = vperm.xlu0 %982, %v198
      %v984 = vpop.permute.xlu0 %983
      %986 = vset.pattern.permute.xlu0 2
      %987 = vperm.xlu0 %986, %v199
      %v988 = vpop.permute.xlu0 %987
      %990 = vset.pattern.permute.xlu0 2
      %991 = vperm.xlu0 %990, %v200
      %v992 = vpop.permute.xlu0 %991
      %994 = vset.pattern.permute.xlu0 2
      %995 = vperm.xlu0 %994, %v201
      %v996 = vpop.permute.xlu0 %995
      %998 = vset.pattern.permute.xlu0 2
      %999 = vperm.xlu0 %998, %v202
      %v1000 = vpop.permute.xlu0 %999
      %1002 = vset.pattern.permute.xlu0 2
      %1003 = vperm.xlu0 %1002, %v203
      %v1004 = vpop.permute.xlu0 %1003
      %1006 = vset.pattern.permute.xlu0 2
      %1007 = vperm.xlu0 %1006, %v204
      %v1008 = vpop.permute.xlu0 %1007
      %1010 = vset.pattern.permute.xlu0 2
      %1011 = vperm.xlu0 %1010, %v205
      %v1012 = vpop.permute.xlu0 %1011
      %1014 = vset.pattern.permute.xlu0 2
      %1015 = vperm.xlu0 %1014, %v206
      %v1016 = vpop.permute.xlu0 %1015
      %1018 = vset.pattern.permute.xlu0 2
      %1019 = vperm.xlu0 %1018, %v207
      %v1020 = vpop.permute.xlu0 %1019
      %1022 = vset.pattern.permute.xlu0 2
      %1023 = vperm.xlu0 %1022, %v208
      %v1024 = vpop.permute.xlu0 %1023
      %1026 = vset.pattern.permute.xlu0 2
      %1027 = vperm.xlu0 %1026, %v209
      %v1028 = vpop.permute.xlu0 %1027
      %1030 = vset.pattern.permute.xlu0 2
      %1031 = vperm.xlu0 %1030, %v210
      %v1032 = vpop.permute.xlu0 %1031
      %1034 = vset.pattern.permute.xlu0 2
      %1035 = vperm.xlu0 %1034, %v211
      %v1036 = vpop.permute.xlu0 %1035
      %1038 = vset.pattern.permute.xlu0 2
      %1039 = vperm.xlu0 %1038, %v212
      %v1040 = vpop.permute.xlu0 %1039
      %1042 = vset.pattern.permute.xlu0 2
      %1043 = vperm.xlu0 %1042, %v213
      %v1044 = vpop.permute.xlu0 %1043
      %v1046 = vmul.f32 %v920, %v886
      %v1047 = vmul.f32 %v924, %v887
      %v1048 = vmul.f32 %v928, %v888
      %v1049 = vmul.f32 %v932, %v889
      %v1050 = vmul.f32 %v936, %v890
      %v1051 = vmul.f32 %v940, %v891
      %v1052 = vmul.f32 %v944, %v892
      %v1053 = vmul.f32 %v948, %v893
      %v1054 = vmul.f32 %v952, %v894
      %v1055 = vmul.f32 %v956, %v895
      %v1056 = vmul.f32 %v960, %v896
      %v1057 = vmul.f32 %v964, %v897
      %v1058 = vmul.f32 %v968, %v898
      %v1059 = vmul.f32 %v972, %v899
      %v1060 = vmul.f32 %v976, %v900
      %v1061 = vmul.f32 %v980, %v901
      %v1062 = vmul.f32 %v984, %v902
      %v1063 = vmul.f32 %v988, %v903
      %v1064 = vmul.f32 %v992, %v904
      %v1065 = vmul.f32 %v996, %v905
      %v1066 = vmul.f32 %v1000, %v906
      %v1067 = vmul.f32 %v1004, %v907
      %v1068 = vmul.f32 %v1008, %v908
      %v1069 = vmul.f32 %v1012, %v909
      %v1070 = vmul.f32 %v1016, %v910
      %v1071 = vmul.f32 %v1020, %v911
      %v1072 = vmul.f32 %v1024, %v912
      %v1073 = vmul.f32 %v1028, %v913
      %v1074 = vmul.f32 %v1032, %v914
      %v1075 = vmul.f32 %v1036, %v915
      %v1076 = vmul.f32 %v1040, %v916
      %v1077 = vmul.f32 %v1044, %v917
      %v1078 = vld [vmem:[#allocation2 + $0x28] sm:$0xff]
      %v1079 = vld [vmem:[#allocation2 + $0x30] sm:$0xff]
      %v1080 = vld [vmem:[#allocation2 + $0x38] sm:$0xff]
      %v1081 = vld [vmem:[#allocation2 + $0x40] sm:$0xff]
      %v1082 = vld [vmem:[#allocation2 + $0x48] sm:$0xff]
      %v1083 = vld [vmem:[#allocation2 + $0x50] sm:$0xff]
      %v1084 = vld [vmem:[#allocation2 + $0x58] sm:$0xff]
      %v1085 = vld [vmem:[#allocation2 + $0x60] sm:$0xff]
      %v1086 = vld [vmem:[#allocation2 + $0x68] sm:$0xff]
      %v1087 = vld [vmem:[#allocation2 + $0x70] sm:$0xff]
      %v1088 = vld [vmem:[#allocation2 + $0x78] sm:$0xff]
      %v1089 = vld [vmem:[#allocation2 + $0x80] sm:$0xff]
      %v1090 = vld [vmem:[#allocation2 + $0x88] sm:$0xff]
      %v1091 = vld [vmem:[#allocation2 + $0x90] sm:$0xff]
      %v1092 = vld [vmem:[#allocation2 + $0x98] sm:$0xff]
      %v1093 = vld [vmem:[#allocation2 + $0xa0] sm:$0xff]
      %v1094 = vld [vmem:[#allocation2 + $0xa8] sm:$0xff]
      %v1095 = vld [vmem:[#allocation2 + $0xb0] sm:$0xff]
      %v1096 = vld [vmem:[#allocation2 + $0xb8] sm:$0xff]
      %v1097 = vld [vmem:[#allocation2 + $0xc0] sm:$0xff]
      %v1098 = vld [vmem:[#allocation2 + $0xc8] sm:$0xff]
      %v1099 = vld [vmem:[#allocation2 + $0xd0] sm:$0xff]
      %v1100 = vld [vmem:[#allocation2 + $0xd8] sm:$0xff]
      %v1101 = vld [vmem:[#allocation2 + $0xe0] sm:$0xff]
      %v1102 = vld [vmem:[#allocation2 + $0xe8] sm:$0xff]
      %v1103 = vld [vmem:[#allocation2 + $0xf0] sm:$0xff]
      %v1104 = vld [vmem:[#allocation2 + $0xf8] sm:$0xff]
      %v1105 = vld [vmem:[#allocation2 + $0x100] sm:$0xff]
      %v1106 = vld [vmem:[#allocation2 + $0x108] sm:$0xff]
      %v1107 = vld [vmem:[#allocation2 + $0x110] sm:$0xff]
      %v1108 = vld [vmem:[#allocation2 + $0x118] sm:$0xff]
      %v1109 = vld [vmem:[#allocation2 + $0x120] sm:$0xff]
      %1110 = vset.pattern.permute.xlu0 3
      %1111 = vperm.xlu0 %1110, %v182
      %v1112 = vpop.permute.xlu0 %1111
      %1114 = vset.pattern.permute.xlu0 3
      %1115 = vperm.xlu0 %1114, %v183
      %v1116 = vpop.permute.xlu0 %1115
      %1118 = vset.pattern.permute.xlu0 3
      %1119 = vperm.xlu0 %1118, %v184
      %v1120 = vpop.permute.xlu0 %1119
      %1122 = vset.pattern.permute.xlu0 3
      %1123 = vperm.xlu0 %1122, %v185
      %v1124 = vpop.permute.xlu0 %1123
      %1126 = vset.pattern.permute.xlu0 3
      %1127 = vperm.xlu0 %1126, %v186
      %v1128 = vpop.permute.xlu0 %1127
      %1130 = vset.pattern.permute.xlu0 3
      %1131 = vperm.xlu0 %1130, %v187
      %v1132 = vpop.permute.xlu0 %1131
      %1134 = vset.pattern.permute.xlu0 3
      %1135 = vperm.xlu0 %1134, %v188
      %v1136 = vpop.permute.xlu0 %1135
      %1138 = vset.pattern.permute.xlu0 3
      %1139 = vperm.xlu0 %1138, %v189
      %v1140 = vpop.permute.xlu0 %1139
      %1142 = vset.pattern.permute.xlu0 3
      %1143 = vperm.xlu0 %1142, %v190
      %v1144 = vpop.permute.xlu0 %1143
      %1146 = vset.pattern.permute.xlu0 3
      %1147 = vperm.xlu0 %1146, %v191
      %v1148 = vpop.permute.xlu0 %1147
      %1150 = vset.pattern.permute.xlu0 3
      %1151 = vperm.xlu0 %1150, %v192
      %v1152 = vpop.permute.xlu0 %1151
      %1154 = vset.pattern.permute.xlu0 3
      %1155 = vperm.xlu0 %1154, %v193
      %v1156 = vpop.permute.xlu0 %1155
      %1158 = vset.pattern.permute.xlu0 3
      %1159 = vperm.xlu0 %1158, %v194
      %v1160 = vpop.permute.xlu0 %1159
      %1162 = vset.pattern.permute.xlu0 3
      %1163 = vperm.xlu0 %1162, %v195
      %v1164 = vpop.permute.xlu0 %1163
      %1166 = vset.pattern.permute.xlu0 3
      %1167 = vperm.xlu0 %1166, %v196
      %v1168 = vpop.permute.xlu0 %1167
      %1170 = vset.pattern.permute.xlu0 3
      %1171 = vperm.xlu0 %1170, %v197
      %v1172 = vpop.permute.xlu0 %1171
      %1174 = vset.pattern.permute.xlu0 3
      %1175 = vperm.xlu0 %1174, %v198
      %v1176 = vpop.permute.xlu0 %1175
      %1178 = vset.pattern.permute.xlu0 3
      %1179 = vperm.xlu0 %1178, %v199
      %v1180 = vpop.permute.xlu0 %1179
      %1182 = vset.pattern.permute.xlu0 3
      %1183 = vperm.xlu0 %1182, %v200
      %v1184 = vpop.permute.xlu0 %1183
      %1186 = vset.pattern.permute.xlu0 3
      %1187 = vperm.xlu0 %1186, %v201
      %v1188 = vpop.permute.xlu0 %1187
      %1190 = vset.pattern.permute.xlu0 3
      %1191 = vperm.xlu0 %1190, %v202
      %v1192 = vpop.permute.xlu0 %1191
      %1194 = vset.pattern.permute.xlu0 3
      %1195 = vperm.xlu0 %1194, %v203
      %v1196 = vpop.permute.xlu0 %1195
      %1198 = vset.pattern.permute.xlu0 3
      %1199 = vperm.xlu0 %1198, %v204
      %v1200 = vpop.permute.xlu0 %1199
      %1202 = vset.pattern.permute.xlu0 3
      %1203 = vperm.xlu0 %1202, %v205
      %v1204 = vpop.permute.xlu0 %1203
      %1206 = vset.pattern.permute.xlu0 3
      %1207 = vperm.xlu0 %1206, %v206
      %v1208 = vpop.permute.xlu0 %1207
      %1210 = vset.pattern.permute.xlu0 3
      %1211 = vperm.xlu0 %1210, %v207
      %v1212 = vpop.permute.xlu0 %1211
      %1214 = vset.pattern.permute.xlu0 3
      %1215 = vperm.xlu0 %1214, %v208
      %v1216 = vpop.permute.xlu0 %1215
      %1218 = vset.pattern.permute.xlu0 3
      %1219 = vperm.xlu0 %1218, %v209
      %v1220 = vpop.permute.xlu0 %1219
      %1222 = vset.pattern.permute.xlu0 3
      %1223 = vperm.xlu0 %1222, %v210
      %v1224 = vpop.permute.xlu0 %1223
      %1226 = vset.pattern.permute.xlu0 3
      %1227 = vperm.xlu0 %1226, %v211
      %v1228 = vpop.permute.xlu0 %1227
      %1230 = vset.pattern.permute.xlu0 3
      %1231 = vperm.xlu0 %1230, %v212
      %v1232 = vpop.permute.xlu0 %1231
      %1234 = vset.pattern.permute.xlu0 3
      %1235 = vperm.xlu0 %1234, %v213
      %v1236 = vpop.permute.xlu0 %1235
      %v1238 = vmul.f32 %v1112, %v1078
      %v1239 = vmul.f32 %v1116, %v1079
      %v1240 = vmul.f32 %v1120, %v1080
      %v1241 = vmul.f32 %v1124, %v1081
      %v1242 = vmul.f32 %v1128, %v1082
      %v1243 = vmul.f32 %v1132, %v1083
      %v1244 = vmul.f32 %v1136, %v1084
      %v1245 = vmul.f32 %v1140, %v1085
      %v1246 = vmul.f32 %v1144, %v1086
      %v1247 = vmul.f32 %v1148, %v1087
      %v1248 = vmul.f32 %v1152, %v1088
      %v1249 = vmul.f32 %v1156, %v1089
      %v1250 = vmul.f32 %v1160, %v1090
      %v1251 = vmul.f32 %v1164, %v1091
      %v1252 = vmul.f32 %v1168, %v1092
      %v1253 = vmul.f32 %v1172, %v1093
      %v1254 = vmul.f32 %v1176, %v1094
      %v1255 = vmul.f32 %v1180, %v1095
      %v1256 = vmul.f32 %v1184, %v1096
      %v1257 = vmul.f32 %v1188, %v1097
      %v1258 = vmul.f32 %v1192, %v1098
      %v1259 = vmul.f32 %v1196, %v1099
      %v1260 = vmul.f32 %v1200, %v1100
      %v1261 = vmul.f32 %v1204, %v1101
      %v1262 = vmul.f32 %v1208, %v1102
      %v1263 = vmul.f32 %v1212, %v1103
      %v1264 = vmul.f32 %v1216, %v1104
      %v1265 = vmul.f32 %v1220, %v1105
      %v1266 = vmul.f32 %v1224, %v1106
      %v1267 = vmul.f32 %v1228, %v1107
      %v1268 = vmul.f32 %v1232, %v1108
      %v1269 = vmul.f32 %v1236, %v1109
      %v1270 = vadd.f32 %v1046, %v1238
      %v1271 = vadd.f32 %v1047, %v1239
      %v1272 = vadd.f32 %v1048, %v1240
      %v1273 = vadd.f32 %v1049, %v1241
      %v1274 = vadd.f32 %v1050, %v1242
      %v1275 = vadd.f32 %v1051, %v1243
      %v1276 = vadd.f32 %v1052, %v1244
      %v1277 = vadd.f32 %v1053, %v1245
      %v1278 = vadd.f32 %v1054, %v1246
      %v1279 = vadd.f32 %v1055, %v1247
      %v1280 = vadd.f32 %v1056, %v1248
      %v1281 = vadd.f32 %v1057, %v1249
      %v1282 = vadd.f32 %v1058, %v1250
      %v1283 = vadd.f32 %v1059, %v1251
      %v1284 = vadd.f32 %v1060, %v1252
      %v1285 = vadd.f32 %v1061, %v1253
      %v1286 = vadd.f32 %v1062, %v1254
      %v1287 = vadd.f32 %v1063, %v1255
      %v1288 = vadd.f32 %v1064, %v1256
      %v1289 = vadd.f32 %v1065, %v1257
      %v1290 = vadd.f32 %v1066, %v1258
      %v1291 = vadd.f32 %v1067, %v1259
      %v1292 = vadd.f32 %v1068, %v1260
      %v1293 = vadd.f32 %v1069, %v1261
      %v1294 = vadd.f32 %v1070, %v1262
      %v1295 = vadd.f32 %v1071, %v1263
      %v1296 = vadd.f32 %v1072, %v1264
      %v1297 = vadd.f32 %v1073, %v1265
      %v1298 = vadd.f32 %v1074, %v1266
      %v1299 = vadd.f32 %v1075, %v1267
      %v1300 = vadd.f32 %v1076, %v1268
      %v1301 = vadd.f32 %v1077, %v1269
      %v1302 = vmul.f32 %v1270, 0.25
      %v1303 = vmul.f32 %v1271, 0.25
      %v1304 = vmul.f32 %v1272, 0.25
      %v1305 = vmul.f32 %v1273, 0.25
      %v1306 = vmul.f32 %v1274, 0.25
      %v1307 = vmul.f32 %v1275, 0.25
      %v1308 = vmul.f32 %v1276, 0.25
      %v1309 = vmul.f32 %v1277, 0.25
      %v1310 = vmul.f32 %v1278, 0.25
      %v1311 = vmul.f32 %v1279, 0.25
      %v1312 = vmul.f32 %v1280, 0.25
      %v1313 = vmul.f32 %v1281, 0.25
      %v1314 = vmul.f32 %v1282, 0.25
      %v1315 = vmul.f32 %v1283, 0.25
      %v1316 = vmul.f32 %v1284, 0.25
      %v1317 = vmul.f32 %v1285, 0.25
      %v1318 = vmul.f32 %v1286, 0.25
      %v1319 = vmul.f32 %v1287, 0.25
      %v1320 = vmul.f32 %v1288, 0.25
      %v1321 = vmul.f32 %v1289, 0.25
      %v1322 = vmul.f32 %v1290, 0.25
      %v1323 = vmul.f32 %v1291, 0.25
      %v1324 = vmul.f32 %v1292, 0.25
      %v1325 = vmul.f32 %v1293, 0.25
      %v1326 = vmul.f32 %v1294, 0.25
      %v1327 = vmul.f32 %v1295, 0.25
      %v1328 = vmul.f32 %v1296, 0.25
      %v1329 = vmul.f32 %v1297, 0.25
      %v1330 = vmul.f32 %v1298, 0.25
      %v1331 = vmul.f32 %v1299, 0.25
      %v1332 = vmul.f32 %v1300, 0.25
      %v1333 = vmul.f32 %v1301, 0.25
      %v1334 = vadd.f32 %v854, %v1302
      %v1335 = vadd.f32 %v855, %v1303
      %v1336 = vadd.f32 %v856, %v1304
      %v1337 = vadd.f32 %v857, %v1305
      %v1338 = vadd.f32 %v858, %v1306
      %v1339 = vadd.f32 %v859, %v1307
      %v1340 = vadd.f32 %v860, %v1308
      %v1341 = vadd.f32 %v861, %v1309
      %v1342 = vadd.f32 %v862, %v1310
      %v1343 = vadd.f32 %v863, %v1311
      %v1344 = vadd.f32 %v864, %v1312
      %v1345 = vadd.f32 %v865, %v1313
      %v1346 = vadd.f32 %v866, %v1314
      %v1347 = vadd.f32 %v867, %v1315
      %v1348 = vadd.f32 %v868, %v1316
      %v1349 = vadd.f32 %v869, %v1317
      %v1350 = vadd.f32 %v870, %v1318
      %v1351 = vadd.f32 %v871, %v1319
      %v1352 = vadd.f32 %v872, %v1320
      %v1353 = vadd.f32 %v873, %v1321
      %v1354 = vadd.f32 %v874, %v1322
      %v1355 = vadd.f32 %v875, %v1323
      %v1356 = vadd.f32 %v876, %v1324
      %v1357 = vadd.f32 %v877, %v1325
      %v1358 = vadd.f32 %v878, %v1326
      %v1359 = vadd.f32 %v879, %v1327
      %v1360 = vadd.f32 %v880, %v1328
      %v1361 = vadd.f32 %v881, %v1329
      %v1362 = vadd.f32 %v882, %v1330
      %v1363 = vadd.f32 %v883, %v1331
      %v1364 = vadd.f32 %v884, %v1332
      %v1365 = vadd.f32 %v885, %v1333
      %1366 = vst.msk [vmem:[#allocation2 + $0x18] sm:$0xff] %vm175, %v1334
      %1367 = vst.msk [vmem:[#allocation2 + $0x20] sm:$0xff] %vm175, %v1335
      %1368 = vst.msk [vmem:[#allocation2 + $0x28] sm:$0xff] %vm175, %v1336
      %1369 = vst.msk [vmem:[#allocation2 + $0x30] sm:$0xff] %vm175, %v1337
      %1370 = vst.msk [vmem:[#allocation2 + $0x38] sm:$0xff] %vm175, %v1338
      %1371 = vst.msk [vmem:[#allocation2 + $0x40] sm:$0xff] %vm175, %v1339
      %1372 = vst.msk [vmem:[#allocation2 + $0x48] sm:$0xff] %vm175, %v1340
      %1373 = vst.msk [vmem:[#allocation2 + $0x50] sm:$0xff] %vm175, %v1341
      %1374 = vst.msk [vmem:[#allocation2 + $0x58] sm:$0xff] %vm175, %v1342
      %1375 = vst.msk [vmem:[#allocation2 + $0x60] sm:$0xff] %vm175, %v1343
      %1376 = vst.msk [vmem:[#allocation2 + $0x68] sm:$0xff] %vm175, %v1344
      %1377 = vst.msk [vmem:[#allocation2 + $0x70] sm:$0xff] %vm175, %v1345
      %1378 = vst.msk [vmem:[#allocation2 + $0x78] sm:$0xff] %vm175, %v1346
      %1379 = vst.msk [vmem:[#allocation2 + $0x80] sm:$0xff] %vm175, %v1347
      %1380 = vst.msk [vmem:[#allocation2 + $0x88] sm:$0xff] %vm175, %v1348
      %1381 = vst.msk [vmem:[#allocation2 + $0x90] sm:$0xff] %vm175, %v1349
      %1382 = vst.msk [vmem:[#allocation2 + $0x98] sm:$0xff] %vm175, %v1350
      %1383 = vst.msk [vmem:[#allocation2 + $0xa0] sm:$0xff] %vm175, %v1351
      %1384 = vst.msk [vmem:[#allocation2 + $0xa8] sm:$0xff] %vm175, %v1352
      %1385 = vst.msk [vmem:[#allocation2 + $0xb0] sm:$0xff] %vm175, %v1353
      %1386 = vst.msk [vmem:[#allocation2 + $0xb8] sm:$0xff] %vm175, %v1354
      %1387 = vst.msk [vmem:[#allocation2 + $0xc0] sm:$0xff] %vm175, %v1355
      %1388 = vst.msk [vmem:[#allocation2 + $0xc8] sm:$0xff] %vm175, %v1356
      %1389 = vst.msk [vmem:[#allocation2 + $0xd0] sm:$0xff] %vm175, %v1357
      %1390 = vst.msk [vmem:[#allocation2 + $0xd8] sm:$0xff] %vm175, %v1358
      %1391 = vst.msk [vmem:[#allocation2 + $0xe0] sm:$0xff] %vm175, %v1359
      %1392 = vst.msk [vmem:[#allocation2 + $0xe8] sm:$0xff] %vm175, %v1360
      %1393 = vst.msk [vmem:[#allocation2 + $0xf0] sm:$0xff] %vm175, %v1361
      %1394 = vst.msk [vmem:[#allocation2 + $0xf8] sm:$0xff] %vm175, %v1362
      %1395 = vst.msk [vmem:[#allocation2 + $0x100] sm:$0xff] %vm175, %v1363
      %1396 = vst.msk [vmem:[#allocation2 + $0x108] sm:$0xff] %vm175, %v1364
      %1397 = vst.msk [vmem:[#allocation2 + $0x110] sm:$0xff] %vm175, %v1365
      %1398 = vrot.lane.b32.xlu0 %v182, 2
      %v1399 = vpop.permute.xlu0 %1398
      %1400 = vrot.lane.b32.xlu0 %v183, 2
      %v1401 = vpop.permute.xlu0 %1400
      %1402 = vrot.lane.b32.xlu0 %v184, 2
      %v1403 = vpop.permute.xlu0 %1402
      %1404 = vrot.lane.b32.xlu0 %v185, 2
      %v1405 = vpop.permute.xlu0 %1404
      %1406 = vrot.lane.b32.xlu0 %v186, 2
      %v1407 = vpop.permute.xlu0 %1406
      %1408 = vrot.lane.b32.xlu0 %v187, 2
      %v1409 = vpop.permute.xlu0 %1408
      %1410 = vrot.lane.b32.xlu0 %v188, 2
      %v1411 = vpop.permute.xlu0 %1410
      %1412 = vrot.lane.b32.xlu0 %v189, 2
      %v1413 = vpop.permute.xlu0 %1412
      %1414 = vrot.lane.b32.xlu0 %v190, 2
      %v1415 = vpop.permute.xlu0 %1414
      %1416 = vrot.lane.b32.xlu0 %v191, 2
      %v1417 = vpop.permute.xlu0 %1416
      %1418 = vrot.lane.b32.xlu0 %v192, 2
      %v1419 = vpop.permute.xlu0 %1418
      %1420 = vrot.lane.b32.xlu0 %v193, 2
      %v1421 = vpop.permute.xlu0 %1420
      %1422 = vrot.lane.b32.xlu0 %v194, 2
      %v1423 = vpop.permute.xlu0 %1422
      %1424 = vrot.lane.b32.xlu0 %v195, 2
      %v1425 = vpop.permute.xlu0 %1424
      %1426 = vrot.lane.b32.xlu0 %v196, 2
      %v1427 = vpop.permute.xlu0 %1426
      %1428 = vrot.lane.b32.xlu0 %v197, 2
      %v1429 = vpop.permute.xlu0 %1428
      %1430 = vrot.lane.b32.xlu0 %v198, 2
      %v1431 = vpop.permute.xlu0 %1430
      %1432 = vrot.lane.b32.xlu0 %v199, 2
      %v1433 = vpop.permute.xlu0 %1432
      %1434 = vrot.lane.b32.xlu0 %v200, 2
      %v1435 = vpop.permute.xlu0 %1434
      %1436 = vrot.lane.b32.xlu0 %v201, 2
      %v1437 = vpop.permute.xlu0 %1436
      %1438 = vrot.lane.b32.xlu0 %v202, 2
      %v1439 = vpop.permute.xlu0 %1438
      %1440 = vrot.lane.b32.xlu0 %v203, 2
      %v1441 = vpop.permute.xlu0 %1440
      %1442 = vrot.lane.b32.xlu0 %v204, 2
      %v1443 = vpop.permute.xlu0 %1442
      %1444 = vrot.lane.b32.xlu0 %v205, 2
      %v1445 = vpop.permute.xlu0 %1444
      %1446 = vrot.lane.b32.xlu0 %v206, 2
      %v1447 = vpop.permute.xlu0 %1446
      %1448 = vrot.lane.b32.xlu0 %v207, 2
      %v1449 = vpop.permute.xlu0 %1448
      %1450 = vrot.lane.b32.xlu0 %v208, 2
      %v1451 = vpop.permute.xlu0 %1450
      %1452 = vrot.lane.b32.xlu0 %v209, 2
      %v1453 = vpop.permute.xlu0 %1452
      %1454 = vrot.lane.b32.xlu0 %v210, 2
      %v1455 = vpop.permute.xlu0 %1454
      %1456 = vrot.lane.b32.xlu0 %v211, 2
      %v1457 = vpop.permute.xlu0 %1456
      %1458 = vrot.lane.b32.xlu0 %v212, 2
      %v1459 = vpop.permute.xlu0 %1458
      %1460 = vrot.lane.b32.xlu0 %v213, 2
      %v1461 = vpop.permute.xlu0 %1460
      %v1494 = vmul.f32 %v182, %v1399
      %v1495 = vmul.f32 %v183, %v1401
      %v1496 = vmul.f32 %v184, %v1403
      %v1497 = vmul.f32 %v185, %v1405
      %v1498 = vmul.f32 %v186, %v1407
      %v1499 = vmul.f32 %v187, %v1409
      %v1500 = vmul.f32 %v188, %v1411
      %v1501 = vmul.f32 %v189, %v1413
      %v1502 = vmul.f32 %v190, %v1415
      %v1503 = vmul.f32 %v191, %v1417
      %v1504 = vmul.f32 %v192, %v1419
      %v1505 = vmul.f32 %v193, %v1421
      %v1506 = vmul.f32 %v194, %v1423
      %v1507 = vmul.f32 %v195, %v1425
      %v1508 = vmul.f32 %v196, %v1427
      %v1509 = vmul.f32 %v197, %v1429
      %v1510 = vmul.f32 %v198, %v1431
      %v1511 = vmul.f32 %v199, %v1433
      %v1512 = vmul.f32 %v200, %v1435
      %v1513 = vmul.f32 %v201, %v1437
      %v1514 = vmul.f32 %v202, %v1439
      %v1515 = vmul.f32 %v203, %v1441
      %v1516 = vmul.f32 %v204, %v1443
      %v1517 = vmul.f32 %v205, %v1445
      %v1518 = vmul.f32 %v206, %v1447
      %v1519 = vmul.f32 %v207, %v1449
      %v1520 = vmul.f32 %v208, %v1451
      %v1521 = vmul.f32 %v209, %v1453
      %v1522 = vmul.f32 %v210, %v1455
      %v1523 = vmul.f32 %v211, %v1457
      %v1524 = vmul.f32 %v212, %v1459
      %v1525 = vmul.f32 %v213, %v1461
      %v1526 = vld [vmem:[#allocation2 + $0x7] sm:$0xff]
      %v1527 = vld [vmem:[#allocation2 + $0xf] sm:$0xff]
      %v1528 = vld [vmem:[#allocation2 + $0x17] sm:$0xff]
      %v1529 = vld [vmem:[#allocation2 + $0x1f] sm:$0xff]
      %v1530 = vld [vmem:[#allocation2 + $0x27] sm:$0xff]
      %v1531 = vld [vmem:[#allocation2 + $0x2f] sm:$0xff]
      %v1532 = vld [vmem:[#allocation2 + $0x37] sm:$0xff]
      %v1533 = vld [vmem:[#allocation2 + $0x3f] sm:$0xff]
      %v1534 = vld [vmem:[#allocation2 + $0x47] sm:$0xff]
      %v1535 = vld [vmem:[#allocation2 + $0x4f] sm:$0xff]
      %v1536 = vld [vmem:[#allocation2 + $0x57] sm:$0xff]
      %v1537 = vld [vmem:[#allocation2 + $0x5f] sm:$0xff]
      %v1538 = vld [vmem:[#allocation2 + $0x67] sm:$0xff]
      %v1539 = vld [vmem:[#allocation2 + $0x6f] sm:$0xff]
      %v1540 = vld [vmem:[#allocation2 + $0x77] sm:$0xff]
      %v1541 = vld [vmem:[#allocation2 + $0x7f] sm:$0xff]
      %v1542 = vld [vmem:[#allocation2 + $0x87] sm:$0xff]
      %v1543 = vld [vmem:[#allocation2 + $0x8f] sm:$0xff]
      %v1544 = vld [vmem:[#allocation2 + $0x97] sm:$0xff]
      %v1545 = vld [vmem:[#allocation2 + $0x9f] sm:$0xff]
      %v1546 = vld [vmem:[#allocation2 + $0xa7] sm:$0xff]
      %v1547 = vld [vmem:[#allocation2 + $0xaf] sm:$0xff]
      %v1548 = vld [vmem:[#allocation2 + $0xb7] sm:$0xff]
      %v1549 = vld [vmem:[#allocation2 + $0xbf] sm:$0xff]
      %v1550 = vld [vmem:[#allocation2 + $0xc7] sm:$0xff]
      %v1551 = vld [vmem:[#allocation2 + $0xcf] sm:$0xff]
      %v1552 = vld [vmem:[#allocation2 + $0xd7] sm:$0xff]
      %v1553 = vld [vmem:[#allocation2 + $0xdf] sm:$0xff]
      %v1554 = vld [vmem:[#allocation2 + $0xe7] sm:$0xff]
      %v1555 = vld [vmem:[#allocation2 + $0xef] sm:$0xff]
      %v1556 = vld [vmem:[#allocation2 + $0xf7] sm:$0xff]
      %v1557 = vld [vmem:[#allocation2 + $0xff] sm:$0xff]
      %1559 = vset.pattern.permute.xlu0 2
      %1560 = vperm.xlu0 %1559, %v1494
      %v1561 = vpop.permute.xlu0 %1560
      %1564 = vset.pattern.permute.xlu0 2
      %1565 = vperm.xlu0 %1564, %v1495
      %v1566 = vpop.permute.xlu0 %1565
      %1569 = vset.pattern.permute.xlu0 2
      %1570 = vperm.xlu0 %1569, %v1496
      %v1571 = vpop.permute.xlu0 %1570
      %1574 = vset.pattern.permute.xlu0 2
      %1575 = vperm.xlu0 %1574, %v1497
      %v1576 = vpop.permute.xlu0 %1575
      %1579 = vset.pattern.permute.xlu0 2
      %1580 = vperm.xlu0 %1579, %v1498
      %v1581 = vpop.permute.xlu0 %1580
      %1584 = vset.pattern.permute.xlu0 2
      %1585 = vperm.xlu0 %1584, %v1499
      %v1586 = vpop.permute.xlu0 %1585
      %1589 = vset.pattern.permute.xlu0 2
      %1590 = vperm.xlu0 %1589, %v1500
      %v1591 = vpop.permute.xlu0 %1590
      %1594 = vset.pattern.permute.xlu0 2
      %1595 = vperm.xlu0 %1594, %v1501
      %v1596 = vpop.permute.xlu0 %1595
      %1599 = vset.pattern.permute.xlu0 2
      %1600 = vperm.xlu0 %1599, %v1502
      %v1601 = vpop.permute.xlu0 %1600
      %1604 = vset.pattern.permute.xlu0 2
      %1605 = vperm.xlu0 %1604, %v1503
      %v1606 = vpop.permute.xlu0 %1605
      %1609 = vset.pattern.permute.xlu0 2
      %1610 = vperm.xlu0 %1609, %v1504
      %v1611 = vpop.permute.xlu0 %1610
      %1614 = vset.pattern.permute.xlu0 2
      %1615 = vperm.xlu0 %1614, %v1505
      %v1616 = vpop.permute.xlu0 %1615
      %1619 = vset.pattern.permute.xlu0 2
      %1620 = vperm.xlu0 %1619, %v1506
      %v1621 = vpop.permute.xlu0 %1620
      %1624 = vset.pattern.permute.xlu0 2
      %1625 = vperm.xlu0 %1624, %v1507
      %v1626 = vpop.permute.xlu0 %1625
      %1629 = vset.pattern.permute.xlu0 2
      %1630 = vperm.xlu0 %1629, %v1508
      %v1631 = vpop.permute.xlu0 %1630
      %1634 = vset.pattern.permute.xlu0 2
      %1635 = vperm.xlu0 %1634, %v1509
      %v1636 = vpop.permute.xlu0 %1635
      %1639 = vset.pattern.permute.xlu0 2
      %1640 = vperm.xlu0 %1639, %v1510
      %v1641 = vpop.permute.xlu0 %1640
      %1644 = vset.pattern.permute.xlu0 2
      %1645 = vperm.xlu0 %1644, %v1511
      %v1646 = vpop.permute.xlu0 %1645
      %1649 = vset.pattern.permute.xlu0 2
      %1650 = vperm.xlu0 %1649, %v1512
      %v1651 = vpop.permute.xlu0 %1650
      %1654 = vset.pattern.permute.xlu0 2
      %1655 = vperm.xlu0 %1654, %v1513
      %v1656 = vpop.permute.xlu0 %1655
      %1659 = vset.pattern.permute.xlu0 2
      %1660 = vperm.xlu0 %1659, %v1514
      %v1661 = vpop.permute.xlu0 %1660
      %1664 = vset.pattern.permute.xlu0 2
      %1665 = vperm.xlu0 %1664, %v1515
      %v1666 = vpop.permute.xlu0 %1665
      %1669 = vset.pattern.permute.xlu0 2
      %1670 = vperm.xlu0 %1669, %v1516
      %v1671 = vpop.permute.xlu0 %1670
      %1674 = vset.pattern.permute.xlu0 2
      %1675 = vperm.xlu0 %1674, %v1517
      %v1676 = vpop.permute.xlu0 %1675
      %1679 = vset.pattern.permute.xlu0 2
      %1680 = vperm.xlu0 %1679, %v1518
      %v1681 = vpop.permute.xlu0 %1680
      %1684 = vset.pattern.permute.xlu0 2
      %1685 = vperm.xlu0 %1684, %v1519
      %v1686 = vpop.permute.xlu0 %1685
      %1689 = vset.pattern.permute.xlu0 2
      %1690 = vperm.xlu0 %1689, %v1520
      %v1691 = vpop.permute.xlu0 %1690
      %1694 = vset.pattern.permute.xlu0 2
      %1695 = vperm.xlu0 %1694, %v1521
      %v1696 = vpop.permute.xlu0 %1695
      %1699 = vset.pattern.permute.xlu0 2
      %1700 = vperm.xlu0 %1699, %v1522
      %v1701 = vpop.permute.xlu0 %1700
      %1704 = vset.pattern.permute.xlu0 2
      %1705 = vperm.xlu0 %1704, %v1523
      %v1706 = vpop.permute.xlu0 %1705
      %1709 = vset.pattern.permute.xlu0 2
      %1710 = vperm.xlu0 %1709, %v1524
      %v1711 = vpop.permute.xlu0 %1710
      %1714 = vset.pattern.permute.xlu0 2
      %1715 = vperm.xlu0 %1714, %v1525
      %v1716 = vpop.permute.xlu0 %1715
      %v1718 = vmul.f32 %v1526, %v1561
      %v1719 = vmul.f32 %v1527, %v1566
      %v1720 = vmul.f32 %v1528, %v1571
      %v1721 = vmul.f32 %v1529, %v1576
      %v1722 = vmul.f32 %v1530, %v1581
      %v1723 = vmul.f32 %v1531, %v1586
      %v1724 = vmul.f32 %v1532, %v1591
      %v1725 = vmul.f32 %v1533, %v1596
      %v1726 = vmul.f32 %v1534, %v1601
      %v1727 = vmul.f32 %v1535, %v1606
      %v1728 = vmul.f32 %v1536, %v1611
      %v1729 = vmul.f32 %v1537, %v1616
      %v1730 = vmul.f32 %v1538, %v1621
      %v1731 = vmul.f32 %v1539, %v1626
      %v1732 = vmul.f32 %v1540, %v1631
      %v1733 = vmul.f32 %v1541, %v1636
      %v1734 = vmul.f32 %v1542, %v1641
      %v1735 = vmul.f32 %v1543, %v1646
      %v1736 = vmul.f32 %v1544, %v1651
      %v1737 = vmul.f32 %v1545, %v1656
      %v1738 = vmul.f32 %v1546, %v1661
      %v1739 = vmul.f32 %v1547, %v1666
      %v1740 = vmul.f32 %v1548, %v1671
      %v1741 = vmul.f32 %v1549, %v1676
      %v1742 = vmul.f32 %v1550, %v1681
      %v1743 = vmul.f32 %v1551, %v1686
      %v1744 = vmul.f32 %v1552, %v1691
      %v1745 = vmul.f32 %v1553, %v1696
      %v1746 = vmul.f32 %v1554, %v1701
      %v1747 = vmul.f32 %v1555, %v1706
      %v1748 = vmul.f32 %v1556, %v1711
      %v1749 = vmul.f32 %v1557, %v1716
      %v1750 = vpack.c.bf16 %v1719, %v1718
      %v1751 = vpack.c.bf16 %v1721, %v1720
      %v1752 = vpack.c.bf16 %v1723, %v1722
      %v1753 = vpack.c.bf16 %v1725, %v1724
      %v1754 = vpack.c.bf16 %v1727, %v1726
      %v1755 = vpack.c.bf16 %v1729, %v1728
      %v1756 = vpack.c.bf16 %v1731, %v1730
      %v1757 = vpack.c.bf16 %v1733, %v1732
      %v1758 = vpack.c.bf16 %v1735, %v1734
      %v1759 = vpack.c.bf16 %v1737, %v1736
      %v1760 = vpack.c.bf16 %v1739, %v1738
      %v1761 = vpack.c.bf16 %v1741, %v1740
      %v1762 = vpack.c.bf16 %v1743, %v1742
      %v1763 = vpack.c.bf16 %v1745, %v1744
      %v1764 = vpack.c.bf16 %v1747, %v1746
      %v1765 = vpack.c.bf16 %v1749, %v1748
      %v1766 = vld [vmem:[%s1] sm:$0x3]
      %v1767 = vld [vmem:[#allocation2 + $0x8] sm:$0xff]
      %v1768 = vld [vmem:[#allocation2 + $0x10] sm:$0xff]
      %v1769 = vld [vmem:[#allocation2 + $0x18] sm:$0xff]
      %v1770 = vld [vmem:[#allocation2 + $0x20] sm:$0xff]
      %v1771 = vld [vmem:[#allocation2 + $0x28] sm:$0xff]
      %v1772 = vld [vmem:[#allocation2 + $0x30] sm:$0xff]
      %v1773 = vld [vmem:[#allocation2 + $0x38] sm:$0xff]
      %v1774 = vld [vmem:[#allocation2 + $0x40] sm:$0xff]
      %v1775 = vld [vmem:[#allocation2 + $0x48] sm:$0xff]
      %v1776 = vld [vmem:[#allocation2 + $0x50] sm:$0xff]
      %v1777 = vld [vmem:[#allocation2 + $0x58] sm:$0xff]
      %v1778 = vld [vmem:[#allocation2 + $0x60] sm:$0xff]
      %v1779 = vld [vmem:[#allocation2 + $0x68] sm:$0xff]
      %v1780 = vld [vmem:[#allocation2 + $0x70] sm:$0xff]
      %v1781 = vld [vmem:[#allocation2 + $0x78] sm:$0xff]
      %v1782 = vld [vmem:[#allocation2 + $0x80] sm:$0xff]
      %v1783 = vld [vmem:[#allocation2 + $0x88] sm:$0xff]
      %v1784 = vld [vmem:[#allocation2 + $0x90] sm:$0xff]
      %v1785 = vld [vmem:[#allocation2 + $0x98] sm:$0xff]
      %v1786 = vld [vmem:[#allocation2 + $0xa0] sm:$0xff]
      %v1787 = vld [vmem:[#allocation2 + $0xa8] sm:$0xff]
      %v1788 = vld [vmem:[#allocation2 + $0xb0] sm:$0xff]
      %v1789 = vld [vmem:[#allocation2 + $0xb8] sm:$0xff]
      %v1790 = vld [vmem:[#allocation2 + $0xc0] sm:$0xff]
      %v1791 = vld [vmem:[#allocation2 + $0xc8] sm:$0xff]
      %v1792 = vld [vmem:[#allocation2 + $0xd0] sm:$0xff]
      %v1793 = vld [vmem:[#allocation2 + $0xd8] sm:$0xff]
      %v1794 = vld [vmem:[#allocation2 + $0xe0] sm:$0xff]
      %v1795 = vld [vmem:[#allocation2 + $0xe8] sm:$0xff]
      %v1796 = vld [vmem:[#allocation2 + $0xf0] sm:$0xff]
      %v1797 = vld [vmem:[#allocation2 + $0xf8] sm:$0xff]
      %v1798 = vld [vmem:[#allocation2 + $0x100] sm:$0xff]
      %v1799 = vmul.f32 %v1767, %v920
      %v1800 = vmul.f32 %v1768, %v924
      %v1801 = vmul.f32 %v1769, %v928
      %v1802 = vmul.f32 %v1770, %v932
      %v1803 = vmul.f32 %v1771, %v936
      %v1804 = vmul.f32 %v1772, %v940
      %v1805 = vmul.f32 %v1773, %v944
      %v1806 = vmul.f32 %v1774, %v948
      %v1807 = vmul.f32 %v1775, %v952
      %v1808 = vmul.f32 %v1776, %v956
      %v1809 = vmul.f32 %v1777, %v960
      %v1810 = vmul.f32 %v1778, %v964
      %v1811 = vmul.f32 %v1779, %v968
      %v1812 = vmul.f32 %v1780, %v972
      %v1813 = vmul.f32 %v1781, %v976
      %v1814 = vmul.f32 %v1782, %v980
      %v1815 = vmul.f32 %v1783, %v984
      %v1816 = vmul.f32 %v1784, %v988
      %v1817 = vmul.f32 %v1785, %v992
      %v1818 = vmul.f32 %v1786, %v996
      %v1819 = vmul.f32 %v1787, %v1000
      %v1820 = vmul.f32 %v1788, %v1004
      %v1821 = vmul.f32 %v1789, %v1008
      %v1822 = vmul.f32 %v1790, %v1012
      %v1823 = vmul.f32 %v1791, %v1016
      %v1824 = vmul.f32 %v1792, %v1020
      %v1825 = vmul.f32 %v1793, %v1024
      %v1826 = vmul.f32 %v1794, %v1028
      %v1827 = vmul.f32 %v1795, %v1032
      %v1828 = vmul.f32 %v1796, %v1036
      %v1829 = vmul.f32 %v1797, %v1040
      %v1830 = vmul.f32 %v1798, %v1044
      %v1831 = vpack.c.bf16 %v1800, %v1799
      %v1832 = vpack.c.bf16 %v1802, %v1801
      %v1833 = vpack.c.bf16 %v1804, %v1803
      %v1834 = vpack.c.bf16 %v1806, %v1805
      %v1835 = vpack.c.bf16 %v1808, %v1807
      %v1836 = vpack.c.bf16 %v1810, %v1809
      %v1837 = vpack.c.bf16 %v1812, %v1811
      %v1838 = vpack.c.bf16 %v1814, %v1813
      %v1839 = vpack.c.bf16 %v1816, %v1815
      %v1840 = vpack.c.bf16 %v1818, %v1817
      %v1841 = vpack.c.bf16 %v1820, %v1819
      %v1842 = vpack.c.bf16 %v1822, %v1821
      %v1843 = vpack.c.bf16 %v1824, %v1823
      %v1844 = vpack.c.bf16 %v1826, %v1825
      %v1845 = vpack.c.bf16 %v1828, %v1827
      %v1846 = vpack.c.bf16 %v1830, %v1829
      %s1847 = scalar_lea.vmem %s1, 2
      %v1848 = vld [vmem:[%s1847] sm:$0x3]
      %v1850 = vsel %vm175, %v1831, 0
      %v1853 = vsel %vm175, %v1832, 0
      %v1856 = vsel %vm175, %v1833, 0
      %v1859 = vsel %vm175, %v1834, 0
      %v1862 = vsel %vm175, %v1835, 0
      %v1865 = vsel %vm175, %v1836, 0
      %v1868 = vsel %vm175, %v1837, 0
      %v1871 = vsel %vm175, %v1838, 0
      %v1874 = vsel %vm175, %v1839, 0
      %v1877 = vsel %vm175, %v1840, 0
      %v1880 = vsel %vm175, %v1841, 0
      %v1883 = vsel %vm175, %v1842, 0
      %v1886 = vsel %vm175, %v1843, 0
      %v1889 = vsel %vm175, %v1844, 0
      %v1892 = vsel %vm175, %v1845, 0
      %v1895 = vsel %vm175, %v1846, 0
      %vm1897 = vcmask 1041408
      %v1899 = vsel %vm1897, %v1848, 0
      %1901 = vmatprep.subr.bf16.mxu0 0
      %1902 = vmatpush1.bf16.msra.mxu0 0
      %1903 = vmatprep.subr.bf16.mxu0 0
      %1904 = vmatpush1.bf16.msra.mxu0 0
      %1905 = vmatprep.subr.bf16.mxu0 0
      %1906 = vmatpush1.bf16.msra.mxu0 0
      %1907 = vmatprep.subr.bf16.mxu0 0
      %1908 = vmatpush1.bf16.msra.mxu0 0
      %1909 = vmatprep.subr.bf16.mxu0 0
      %1910 = vmatpush1.bf16.msra.mxu0 0
      %1911 = vmatprep.subr.bf16.mxu0 0
      %1912 = vmatpush1.bf16.msra.mxu0 0
      %1913 = vmatprep.subr.bf16.mxu0 0
      %1914 = vmatpush1.bf16.msra.mxu0 0
      %1915 = vmatprep.subr.bf16.mxu0 0
      %1916 = vmatpush1.bf16.msra.mxu0 %v1899
      %1917 = vmatprep.subr.bf16.mxu0 0
      %1918 = vmatpush2.bf16.msra.mxu0 0
      %1919 = vmatprep.subr.bf16.mxu0 0
      %1920 = vmatpush2.bf16.msra.mxu0 0
      %1921 = vmatprep.subr.bf16.mxu0 0
      %1922 = vmatpush2.bf16.msra.mxu0 0
      %1923 = vmatprep.subr.bf16.mxu0 0
      %1924 = vmatpush2.bf16.msra.mxu0 0
      %1925 = vmatprep.subr.bf16.mxu0 0
      %1926 = vmatpush2.bf16.msra.mxu0 0
      %1927 = vmatprep.subr.bf16.mxu0 0
      %1928 = vmatpush2.bf16.msra.mxu0 0
      %1929 = vmatprep.subr.bf16.mxu0 0
      %1930 = vmatpush2.bf16.msra.mxu0 0
      %1931 = vmatprep.subr.bf16.mxu0 0
      %1932 = vmatpush2.bf16.msra.mxu0 0
      %1933 = vmatprep.mubr.bf16.mxu0 0
      %1934 = vmatmul.mubr.bf16.gmra.mxu0 %v1850
      %v1935 = vpop.f32.mrf.mxu0
      %v1936 = vadd.f32 0.0, %v1935
      %v1937 = vpop.f32.mrf.mxu0
      %v1938 = vpop.f32.mrf.mxu0
      %v1939 = vadd.f32 0.0, %v1938
      %v1940 = vpop.f32.mrf.mxu0
      %1941 = vmatprep.mubr.bf16.mxu0 0
      %1942 = vmatmul.mubr.bf16.gmra.mxu0 %v1853
      %v1943 = vpop.f32.mrf.mxu0
      %v1944 = vadd.f32 0.0, %v1943
      %v1945 = vpop.f32.mrf.mxu0
      %v1946 = vpop.f32.mrf.mxu0
      %v1947 = vadd.f32 0.0, %v1946
      %v1948 = vpop.f32.mrf.mxu0
      %1949 = vmatprep.mubr.bf16.mxu0 0
      %1950 = vmatmul.mubr.bf16.gmra.mxu0 %v1856
      %v1951 = vpop.f32.mrf.mxu0
      %v1952 = vadd.f32 0.0, %v1951
      %v1953 = vpop.f32.mrf.mxu0
      %v1954 = vpop.f32.mrf.mxu0
      %v1955 = vadd.f32 0.0, %v1954
      %v1956 = vpop.f32.mrf.mxu0
      %1957 = vmatprep.mubr.bf16.mxu0 0
      %1958 = vmatmul.mubr.bf16.gmra.mxu0 %v1859
      %v1959 = vpop.f32.mrf.mxu0
      %v1960 = vadd.f32 0.0, %v1959
      %v1961 = vpop.f32.mrf.mxu0
      %v1962 = vpop.f32.mrf.mxu0
      %v1963 = vadd.f32 0.0, %v1962
      %v1964 = vpop.f32.mrf.mxu0
      %1965 = vmatprep.mubr.bf16.mxu0 0
      %1966 = vmatmul.mubr.bf16.gmra.mxu0 %v1862
      %v1967 = vpop.f32.mrf.mxu0
      %v1968 = vadd.f32 0.0, %v1967
      %v1969 = vpop.f32.mrf.mxu0
      %v1970 = vpop.f32.mrf.mxu0
      %v1971 = vadd.f32 0.0, %v1970
      %v1972 = vpop.f32.mrf.mxu0
      %1973 = vmatprep.mubr.bf16.mxu0 0
      %1974 = vmatmul.mubr.bf16.gmra.mxu0 %v1865
      %v1975 = vpop.f32.mrf.mxu0
      %v1976 = vadd.f32 0.0, %v1975
      %v1977 = vpop.f32.mrf.mxu0
      %v1978 = vpop.f32.mrf.mxu0
      %v1979 = vadd.f32 0.0, %v1978
      %v1980 = vpop.f32.mrf.mxu0
      %1981 = vmatprep.mubr.bf16.mxu0 0
      %1982 = vmatmul.mubr.bf16.gmra.mxu0 %v1868
      %v1983 = vpop.f32.mrf.mxu0
      %v1984 = vadd.f32 0.0, %v1983
      %v1985 = vpop.f32.mrf.mxu0
      %v1986 = vpop.f32.mrf.mxu0
      %v1987 = vadd.f32 0.0, %v1986
      %v1988 = vpop.f32.mrf.mxu0
      %1989 = vmatprep.mubr.bf16.mxu0 0
      %1990 = vmatmul.mubr.bf16.gmra.mxu0 %v1871
      %v1991 = vpop.f32.mrf.mxu0
      %v1992 = vadd.f32 0.0, %v1991
      %v1993 = vpop.f32.mrf.mxu0
      %v1994 = vpop.f32.mrf.mxu0
      %v1995 = vadd.f32 0.0, %v1994
      %v1996 = vpop.f32.mrf.mxu0
      %1997 = vmatprep.mubr.bf16.mxu0 0
      %1998 = vmatmul.mubr.bf16.gmra.mxu0 %v1874
      %v1999 = vpop.f32.mrf.mxu0
      %v2000 = vadd.f32 0.0, %v1999
      %v2001 = vpop.f32.mrf.mxu0
      %v2002 = vpop.f32.mrf.mxu0
      %v2003 = vadd.f32 0.0, %v2002
      %v2004 = vpop.f32.mrf.mxu0
      %2005 = vmatprep.mubr.bf16.mxu0 0
      %2006 = vmatmul.mubr.bf16.gmra.mxu0 %v1877
      %v2007 = vpop.f32.mrf.mxu0
      %v2008 = vadd.f32 0.0, %v2007
      %v2009 = vpop.f32.mrf.mxu0
      %v2010 = vpop.f32.mrf.mxu0
      %v2011 = vadd.f32 0.0, %v2010
      %v2012 = vpop.f32.mrf.mxu0
      %2013 = vmatprep.mubr.bf16.mxu0 0
      %2014 = vmatmul.mubr.bf16.gmra.mxu0 %v1880
      %v2015 = vpop.f32.mrf.mxu0
      %v2016 = vadd.f32 0.0, %v2015
      %v2017 = vpop.f32.mrf.mxu0
      %v2018 = vpop.f32.mrf.mxu0
      %v2019 = vadd.f32 0.0, %v2018
      %v2020 = vpop.f32.mrf.mxu0
      %2021 = vmatprep.mubr.bf16.mxu0 0
      %2022 = vmatmul.mubr.bf16.gmra.mxu0 %v1883
      %v2023 = vpop.f32.mrf.mxu0
      %v2024 = vadd.f32 0.0, %v2023
      %v2025 = vpop.f32.mrf.mxu0
      %v2026 = vpop.f32.mrf.mxu0
      %v2027 = vadd.f32 0.0, %v2026
      %v2028 = vpop.f32.mrf.mxu0
      %2029 = vmatprep.mubr.bf16.mxu0 0
      %2030 = vmatmul.mubr.bf16.gmra.mxu0 %v1886
      %v2031 = vpop.f32.mrf.mxu0
      %v2032 = vadd.f32 0.0, %v2031
      %v2033 = vpop.f32.mrf.mxu0
      %v2034 = vpop.f32.mrf.mxu0
      %v2035 = vadd.f32 0.0, %v2034
      %v2036 = vpop.f32.mrf.mxu0
      %2037 = vmatprep.mubr.bf16.mxu0 0
      %2038 = vmatmul.mubr.bf16.gmra.mxu0 %v1889
      %v2039 = vpop.f32.mrf.mxu0
      %v2040 = vadd.f32 0.0, %v2039
      %v2041 = vpop.f32.mrf.mxu0
      %v2042 = vpop.f32.mrf.mxu0
      %v2043 = vadd.f32 0.0, %v2042
      %v2044 = vpop.f32.mrf.mxu0
      %2045 = vmatprep.mubr.bf16.mxu0 0
      %2046 = vmatmul.mubr.bf16.gmra.mxu0 %v1892
      %v2047 = vpop.f32.mrf.mxu0
      %v2048 = vadd.f32 0.0, %v2047
      %v2049 = vpop.f32.mrf.mxu0
      %v2050 = vpop.f32.mrf.mxu0
      %v2051 = vadd.f32 0.0, %v2050
      %v2052 = vpop.f32.mrf.mxu0
      %2053 = vmatprep.mubr.bf16.mxu0 0
      %2054 = vmatmul.mubr.bf16.gmra.mxu0 %v1895
      %v2055 = vpop.f32.mrf.mxu0
      %v2056 = vadd.f32 0.0, %v2055
      %v2057 = vpop.f32.mrf.mxu0
      %v2058 = vpop.f32.mrf.mxu0
      %v2059 = vadd.f32 0.0, %v2058
      %v2060 = vpop.f32.mrf.mxu0
      %2061 = vdwg.mxu0
      %v2063 = vsel %vm175, %v1750, 0
      %v2066 = vsel %vm175, %v1751, 0
      %v2069 = vsel %vm175, %v1752, 0
      %v2072 = vsel %vm175, %v1753, 0
      %v2075 = vsel %vm175, %v1754, 0
      %v2078 = vsel %vm175, %v1755, 0
      %v2081 = vsel %vm175, %v1756, 0
      %v2084 = vsel %vm175, %v1757, 0
      %v2087 = vsel %vm175, %v1758, 0
      %v2090 = vsel %vm175, %v1759, 0
      %v2093 = vsel %vm175, %v1760, 0
      %v2096 = vsel %vm175, %v1761, 0
      %v2099 = vsel %vm175, %v1762, 0
      %v2102 = vsel %vm175, %v1763, 0
      %v2105 = vsel %vm175, %v1764, 0
      %v2108 = vsel %vm175, %v1765, 0
      %v2111 = vsel %vm1897, %v1766, 0
      %2113 = vmatprep.subr.bf16.mxu0 0
      %2114 = vmatpush1.bf16.msra.mxu0 0
      %2115 = vmatprep.subr.bf16.mxu0 0
      %2116 = vmatpush1.bf16.msra.mxu0 0
      %2117 = vmatprep.subr.bf16.mxu0 0
      %2118 = vmatpush1.bf16.msra.mxu0 0
      %2119 = vmatprep.subr.bf16.mxu0 0
      %2120 = vmatpush1.bf16.msra.mxu0 0
      %2121 = vmatprep.subr.bf16.mxu0 0
      %2122 = vmatpush1.bf16.msra.mxu0 0
      %2123 = vmatprep.subr.bf16.mxu0 0
      %2124 = vmatpush1.bf16.msra.mxu0 0
      %2125 = vmatprep.subr.bf16.mxu0 0
      %2126 = vmatpush1.bf16.msra.mxu0 0
      %2127 = vmatprep.subr.bf16.mxu0 0
      %2128 = vmatpush1.bf16.msra.mxu0 %v2111
      %2129 = vmatprep.subr.bf16.mxu0 0
      %2130 = vmatpush2.bf16.msra.mxu0 0
      %2131 = vmatprep.subr.bf16.mxu0 0
      %2132 = vmatpush2.bf16.msra.mxu0 0
      %2133 = vmatprep.subr.bf16.mxu0 0
      %2134 = vmatpush2.bf16.msra.mxu0 0
      %2135 = vmatprep.subr.bf16.mxu0 0
      %2136 = vmatpush2.bf16.msra.mxu0 0
      %2137 = vmatprep.subr.bf16.mxu0 0
      %2138 = vmatpush2.bf16.msra.mxu0 0
      %2139 = vmatprep.subr.bf16.mxu0 0
      %2140 = vmatpush2.bf16.msra.mxu0 0
      %2141 = vmatprep.subr.bf16.mxu0 0
      %2142 = vmatpush2.bf16.msra.mxu0 0
      %2143 = vmatprep.subr.bf16.mxu0 0
      %2144 = vmatpush2.bf16.msra.mxu0 0
      %2145 = vmatprep.mubr.bf16.mxu0 0
      %2146 = vmatmul.mubr.bf16.gmra.mxu0 %v2063
      %v2147 = vpop.f32.mrf.mxu0
      %v2148 = vadd.f32 %v1936, %v2147
      %v2149 = vpop.f32.mrf.mxu0
      %v2150 = vpop.f32.mrf.mxu0
      %v2151 = vadd.f32 %v1939, %v2150
      %v2152 = vpop.f32.mrf.mxu0
      %2153 = vmatprep.mubr.bf16.mxu0 0
      %2154 = vmatmul.mubr.bf16.gmra.mxu0 %v2066
      %v2155 = vpop.f32.mrf.mxu0
      %v2156 = vadd.f32 %v1944, %v2155
      %v2157 = vpop.f32.mrf.mxu0
      %v2158 = vpop.f32.mrf.mxu0
      %v2159 = vadd.f32 %v1947, %v2158
      %v2160 = vpop.f32.mrf.mxu0
      %2161 = vmatprep.mubr.bf16.mxu0 0
      %2162 = vmatmul.mubr.bf16.gmra.mxu0 %v2069
      %v2163 = vpop.f32.mrf.mxu0
      %v2164 = vadd.f32 %v1952, %v2163
      %v2165 = vpop.f32.mrf.mxu0
      %v2166 = vpop.f32.mrf.mxu0
      %v2167 = vadd.f32 %v1955, %v2166
      %v2168 = vpop.f32.mrf.mxu0
      %2169 = vmatprep.mubr.bf16.mxu0 0
      %2170 = vmatmul.mubr.bf16.gmra.mxu0 %v2072
      %v2171 = vpop.f32.mrf.mxu0
      %v2172 = vadd.f32 %v1960, %v2171
      %v2173 = vpop.f32.mrf.mxu0
      %v2174 = vpop.f32.mrf.mxu0
      %v2175 = vadd.f32 %v1963, %v2174
      %v2176 = vpop.f32.mrf.mxu0
      %2177 = vmatprep.mubr.bf16.mxu0 0
      %2178 = vmatmul.mubr.bf16.gmra.mxu0 %v2075
      %v2179 = vpop.f32.mrf.mxu0
      %v2180 = vadd.f32 %v1968, %v2179
      %v2181 = vpop.f32.mrf.mxu0
      %v2182 = vpop.f32.mrf.mxu0
      %v2183 = vadd.f32 %v1971, %v2182
      %v2184 = vpop.f32.mrf.mxu0
      %2185 = vmatprep.mubr.bf16.mxu0 0
      %2186 = vmatmul.mubr.bf16.gmra.mxu0 %v2078
      %v2187 = vpop.f32.mrf.mxu0
      %v2188 = vadd.f32 %v1976, %v2187
      %v2189 = vpop.f32.mrf.mxu0
      %v2190 = vpop.f32.mrf.mxu0
      %v2191 = vadd.f32 %v1979, %v2190
      %v2192 = vpop.f32.mrf.mxu0
      %2193 = vmatprep.mubr.bf16.mxu0 0
      %2194 = vmatmul.mubr.bf16.gmra.mxu0 %v2081
      %v2195 = vpop.f32.mrf.mxu0
      %v2196 = vadd.f32 %v1984, %v2195
      %v2197 = vpop.f32.mrf.mxu0
      %v2198 = vpop.f32.mrf.mxu0
      %v2199 = vadd.f32 %v1987, %v2198
      %v2200 = vpop.f32.mrf.mxu0
      %2201 = vmatprep.mubr.bf16.mxu0 0
      %2202 = vmatmul.mubr.bf16.gmra.mxu0 %v2084
      %v2203 = vpop.f32.mrf.mxu0
      %v2204 = vadd.f32 %v1992, %v2203
      %v2205 = vpop.f32.mrf.mxu0
      %v2206 = vpop.f32.mrf.mxu0
      %v2207 = vadd.f32 %v1995, %v2206
      %v2208 = vpop.f32.mrf.mxu0
      %2209 = vmatprep.mubr.bf16.mxu0 0
      %2210 = vmatmul.mubr.bf16.gmra.mxu0 %v2087
      %v2211 = vpop.f32.mrf.mxu0
      %v2212 = vadd.f32 %v2000, %v2211
      %v2213 = vpop.f32.mrf.mxu0
      %v2214 = vpop.f32.mrf.mxu0
      %v2215 = vadd.f32 %v2003, %v2214
      %v2216 = vpop.f32.mrf.mxu0
      %2217 = vmatprep.mubr.bf16.mxu0 0
      %2218 = vmatmul.mubr.bf16.gmra.mxu0 %v2090
      %v2219 = vpop.f32.mrf.mxu0
      %v2220 = vadd.f32 %v2008, %v2219
      %v2221 = vpop.f32.mrf.mxu0
      %v2222 = vpop.f32.mrf.mxu0
      %v2223 = vadd.f32 %v2011, %v2222
      %v2224 = vpop.f32.mrf.mxu0
      %2225 = vmatprep.mubr.bf16.mxu0 0
      %2226 = vmatmul.mubr.bf16.gmra.mxu0 %v2093
      %v2227 = vpop.f32.mrf.mxu0
      %v2228 = vadd.f32 %v2016, %v2227
      %v2229 = vpop.f32.mrf.mxu0
      %v2230 = vpop.f32.mrf.mxu0
      %v2231 = vadd.f32 %v2019, %v2230
      %v2232 = vpop.f32.mrf.mxu0
      %2233 = vmatprep.mubr.bf16.mxu0 0
      %2234 = vmatmul.mubr.bf16.gmra.mxu0 %v2096
      %v2235 = vpop.f32.mrf.mxu0
      %v2236 = vadd.f32 %v2024, %v2235
      %v2237 = vpop.f32.mrf.mxu0
      %v2238 = vpop.f32.mrf.mxu0
      %v2239 = vadd.f32 %v2027, %v2238
      %v2240 = vpop.f32.mrf.mxu0
      %2241 = vmatprep.mubr.bf16.mxu0 0
      %2242 = vmatmul.mubr.bf16.gmra.mxu0 %v2099
      %v2243 = vpop.f32.mrf.mxu0
      %v2244 = vadd.f32 %v2032, %v2243
      %v2245 = vpop.f32.mrf.mxu0
      %v2246 = vpop.f32.mrf.mxu0
      %v2247 = vadd.f32 %v2035, %v2246
      %v2248 = vpop.f32.mrf.mxu0
      %2249 = vmatprep.mubr.bf16.mxu0 0
      %2250 = vmatmul.mubr.bf16.gmra.mxu0 %v2102
      %v2251 = vpop.f32.mrf.mxu0
      %v2252 = vadd.f32 %v2040, %v2251
      %v2253 = vpop.f32.mrf.mxu0
      %v2254 = vpop.f32.mrf.mxu0
      %v2255 = vadd.f32 %v2043, %v2254
      %v2256 = vpop.f32.mrf.mxu0
      %2257 = vmatprep.mubr.bf16.mxu0 0
      %2258 = vmatmul.mubr.bf16.gmra.mxu0 %v2105
      %v2259 = vpop.f32.mrf.mxu0
      %v2260 = vadd.f32 %v2048, %v2259
      %v2261 = vpop.f32.mrf.mxu0
      %v2262 = vpop.f32.mrf.mxu0
      %v2263 = vadd.f32 %v2051, %v2262
      %v2264 = vpop.f32.mrf.mxu0
      %2265 = vmatprep.mubr.bf16.mxu0 0
      %2266 = vmatmul.mubr.bf16.gmra.mxu0 %v2108
      %v2267 = vpop.f32.mrf.mxu0
      %v2268 = vadd.f32 %v2056, %v2267
      %v2269 = vpop.f32.mrf.mxu0
      %v2270 = vpop.f32.mrf.mxu0
      %v2271 = vadd.f32 %v2059, %v2270
      %v2272 = vpop.f32.mrf.mxu0
      %2273 = vdwg.mxu0
      %2274 = vrot.lane.b32.xlu0 %v182, 1
      %v2275 = vpop.permute.xlu0 %2274
      %2276 = vrot.lane.b32.xlu0 %v183, 1
      %v2277 = vpop.permute.xlu0 %2276
      %2278 = vrot.lane.b32.xlu0 %v184, 1
      %v2279 = vpop.permute.xlu0 %2278
      %2280 = vrot.lane.b32.xlu0 %v185, 1
      %v2281 = vpop.permute.xlu0 %2280
      %2282 = vrot.lane.b32.xlu0 %v186, 1
      %v2283 = vpop.permute.xlu0 %2282
      %2284 = vrot.lane.b32.xlu0 %v187, 1
      %v2285 = vpop.permute.xlu0 %2284
      %2286 = vrot.lane.b32.xlu0 %v188, 1
      %v2287 = vpop.permute.xlu0 %2286
      %2288 = vrot.lane.b32.xlu0 %v189, 1
      %v2289 = vpop.permute.xlu0 %2288
      %2290 = vrot.lane.b32.xlu0 %v190, 1
      %v2291 = vpop.permute.xlu0 %2290
      %2292 = vrot.lane.b32.xlu0 %v191, 1
      %v2293 = vpop.permute.xlu0 %2292
      %2294 = vrot.lane.b32.xlu0 %v192, 1
      %v2295 = vpop.permute.xlu0 %2294
      %2296 = vrot.lane.b32.xlu0 %v193, 1
      %v2297 = vpop.permute.xlu0 %2296
      %2298 = vrot.lane.b32.xlu0 %v194, 1
      %v2299 = vpop.permute.xlu0 %2298
      %2300 = vrot.lane.b32.xlu0 %v195, 1
      %v2301 = vpop.permute.xlu0 %2300
      %2302 = vrot.lane.b32.xlu0 %v196, 1
      %v2303 = vpop.permute.xlu0 %2302
      %2304 = vrot.lane.b32.xlu0 %v197, 1
      %v2305 = vpop.permute.xlu0 %2304
      %2306 = vrot.lane.b32.xlu0 %v198, 1
      %v2307 = vpop.permute.xlu0 %2306
      %2308 = vrot.lane.b32.xlu0 %v199, 1
      %v2309 = vpop.permute.xlu0 %2308
      %2310 = vrot.lane.b32.xlu0 %v200, 1
      %v2311 = vpop.permute.xlu0 %2310
      %2312 = vrot.lane.b32.xlu0 %v201, 1
      %v2313 = vpop.permute.xlu0 %2312
      %2314 = vrot.lane.b32.xlu0 %v202, 1
      %v2315 = vpop.permute.xlu0 %2314
      %2316 = vrot.lane.b32.xlu0 %v203, 1
      %v2317 = vpop.permute.xlu0 %2316
      %2318 = vrot.lane.b32.xlu0 %v204, 1
      %v2319 = vpop.permute.xlu0 %2318
      %2320 = vrot.lane.b32.xlu0 %v205, 1
      %v2321 = vpop.permute.xlu0 %2320
      %2322 = vrot.lane.b32.xlu0 %v206, 1
      %v2323 = vpop.permute.xlu0 %2322
      %2324 = vrot.lane.b32.xlu0 %v207, 1
      %v2325 = vpop.permute.xlu0 %2324
      %2326 = vrot.lane.b32.xlu0 %v208, 1
      %v2327 = vpop.permute.xlu0 %2326
      %2328 = vrot.lane.b32.xlu0 %v209, 1
      %v2329 = vpop.permute.xlu0 %2328
      %2330 = vrot.lane.b32.xlu0 %v210, 1
      %v2331 = vpop.permute.xlu0 %2330
      %2332 = vrot.lane.b32.xlu0 %v211, 1
      %v2333 = vpop.permute.xlu0 %2332
      %2334 = vrot.lane.b32.xlu0 %v212, 1
      %v2335 = vpop.permute.xlu0 %2334
      %2336 = vrot.lane.b32.xlu0 %v213, 1
      %v2337 = vpop.permute.xlu0 %2336
      %v2370 = vmul.f32 %v182, %v2275
      %v2371 = vmul.f32 %v183, %v2277
      %v2372 = vmul.f32 %v184, %v2279
      %v2373 = vmul.f32 %v185, %v2281
      %v2374 = vmul.f32 %v186, %v2283
      %v2375 = vmul.f32 %v187, %v2285
      %v2376 = vmul.f32 %v188, %v2287
      %v2377 = vmul.f32 %v189, %v2289
      %v2378 = vmul.f32 %v190, %v2291
      %v2379 = vmul.f32 %v191, %v2293
      %v2380 = vmul.f32 %v192, %v2295
      %v2381 = vmul.f32 %v193, %v2297
      %v2382 = vmul.f32 %v194, %v2299
      %v2383 = vmul.f32 %v195, %v2301
      %v2384 = vmul.f32 %v196, %v2303
      %v2385 = vmul.f32 %v197, %v2305
      %v2386 = vmul.f32 %v198, %v2307
      %v2387 = vmul.f32 %v199, %v2309
      %v2388 = vmul.f32 %v200, %v2311
      %v2389 = vmul.f32 %v201, %v2313
      %v2390 = vmul.f32 %v202, %v2315
      %v2391 = vmul.f32 %v203, %v2317
      %v2392 = vmul.f32 %v204, %v2319
      %v2393 = vmul.f32 %v205, %v2321
      %v2394 = vmul.f32 %v206, %v2323
      %v2395 = vmul.f32 %v207, %v2325
      %v2396 = vmul.f32 %v208, %v2327
      %v2397 = vmul.f32 %v209, %v2329
      %v2398 = vmul.f32 %v210, %v2331
      %v2399 = vmul.f32 %v211, %v2333
      %v2400 = vmul.f32 %v212, %v2335
      %v2401 = vmul.f32 %v213, %v2337
      %v2402 = vld [vmem:[#allocation2 + $0x9] sm:$0xff]
      %v2403 = vld [vmem:[#allocation2 + $0x11] sm:$0xff]
      %v2404 = vld [vmem:[#allocation2 + $0x19] sm:$0xff]
      %v2405 = vld [vmem:[#allocation2 + $0x21] sm:$0xff]
      %v2406 = vld [vmem:[#allocation2 + $0x29] sm:$0xff]
      %v2407 = vld [vmem:[#allocation2 + $0x31] sm:$0xff]
      %v2408 = vld [vmem:[#allocation2 + $0x39] sm:$0xff]
      %v2409 = vld [vmem:[#allocation2 + $0x41] sm:$0xff]
      %v2410 = vld [vmem:[#allocation2 + $0x49] sm:$0xff]
      %v2411 = vld [vmem:[#allocation2 + $0x51] sm:$0xff]
      %v2412 = vld [vmem:[#allocation2 + $0x59] sm:$0xff]
      %v2413 = vld [vmem:[#allocation2 + $0x61] sm:$0xff]
      %v2414 = vld [vmem:[#allocation2 + $0x69] sm:$0xff]
      %v2415 = vld [vmem:[#allocation2 + $0x71] sm:$0xff]
      %v2416 = vld [vmem:[#allocation2 + $0x79] sm:$0xff]
      %v2417 = vld [vmem:[#allocation2 + $0x81] sm:$0xff]
      %v2418 = vld [vmem:[#allocation2 + $0x89] sm:$0xff]
      %v2419 = vld [vmem:[#allocation2 + $0x91] sm:$0xff]
      %v2420 = vld [vmem:[#allocation2 + $0x99] sm:$0xff]
      %v2421 = vld [vmem:[#allocation2 + $0xa1] sm:$0xff]
      %v2422 = vld [vmem:[#allocation2 + $0xa9] sm:$0xff]
      %v2423 = vld [vmem:[#allocation2 + $0xb1] sm:$0xff]
      %v2424 = vld [vmem:[#allocation2 + $0xb9] sm:$0xff]
      %v2425 = vld [vmem:[#allocation2 + $0xc1] sm:$0xff]
      %v2426 = vld [vmem:[#allocation2 + $0xc9] sm:$0xff]
      %v2427 = vld [vmem:[#allocation2 + $0xd1] sm:$0xff]
      %v2428 = vld [vmem:[#allocation2 + $0xd9] sm:$0xff]
      %v2429 = vld [vmem:[#allocation2 + $0xe1] sm:$0xff]
      %v2430 = vld [vmem:[#allocation2 + $0xe9] sm:$0xff]
      %v2431 = vld [vmem:[#allocation2 + $0xf1] sm:$0xff]
      %v2432 = vld [vmem:[#allocation2 + $0xf9] sm:$0xff]
      %v2433 = vld [vmem:[#allocation2 + $0x101] sm:$0xff]
      %2435 = vset.pattern.permute.xlu0 2
      %2436 = vperm.xlu0 %2435, %v2370
      %v2437 = vpop.permute.xlu0 %2436
      %2440 = vset.pattern.permute.xlu0 2
      %2441 = vperm.xlu0 %2440, %v2371
      %v2442 = vpop.permute.xlu0 %2441
      %2445 = vset.pattern.permute.xlu0 2
      %2446 = vperm.xlu0 %2445, %v2372
      %v2447 = vpop.permute.xlu0 %2446
      %2450 = vset.pattern.permute.xlu0 2
      %2451 = vperm.xlu0 %2450, %v2373
      %v2452 = vpop.permute.xlu0 %2451
      %2455 = vset.pattern.permute.xlu0 2
      %2456 = vperm.xlu0 %2455, %v2374
      %v2457 = vpop.permute.xlu0 %2456
      %2460 = vset.pattern.permute.xlu0 2
      %2461 = vperm.xlu0 %2460, %v2375
      %v2462 = vpop.permute.xlu0 %2461
      %2465 = vset.pattern.permute.xlu0 2
      %2466 = vperm.xlu0 %2465, %v2376
      %v2467 = vpop.permute.xlu0 %2466
      %2470 = vset.pattern.permute.xlu0 2
      %2471 = vperm.xlu0 %2470, %v2377
      %v2472 = vpop.permute.xlu0 %2471
      %2475 = vset.pattern.permute.xlu0 2
      %2476 = vperm.xlu0 %2475, %v2378
      %v2477 = vpop.permute.xlu0 %2476
      %2480 = vset.pattern.permute.xlu0 2
      %2481 = vperm.xlu0 %2480, %v2379
      %v2482 = vpop.permute.xlu0 %2481
      %2485 = vset.pattern.permute.xlu0 2
      %2486 = vperm.xlu0 %2485, %v2380
      %v2487 = vpop.permute.xlu0 %2486
      %2490 = vset.pattern.permute.xlu0 2
      %2491 = vperm.xlu0 %2490, %v2381
      %v2492 = vpop.permute.xlu0 %2491
      %2495 = vset.pattern.permute.xlu0 2
      %2496 = vperm.xlu0 %2495, %v2382
      %v2497 = vpop.permute.xlu0 %2496
      %2500 = vset.pattern.permute.xlu0 2
      %2501 = vperm.xlu0 %2500, %v2383
      %v2502 = vpop.permute.xlu0 %2501
      %2505 = vset.pattern.permute.xlu0 2
      %2506 = vperm.xlu0 %2505, %v2384
      %v2507 = vpop.permute.xlu0 %2506
      %2510 = vset.pattern.permute.xlu0 2
      %2511 = vperm.xlu0 %2510, %v2385
      %v2512 = vpop.permute.xlu0 %2511
      %2515 = vset.pattern.permute.xlu0 2
      %2516 = vperm.xlu0 %2515, %v2386
      %v2517 = vpop.permute.xlu0 %2516
      %2520 = vset.pattern.permute.xlu0 2
      %2521 = vperm.xlu0 %2520, %v2387
      %v2522 = vpop.permute.xlu0 %2521
      %2525 = vset.pattern.permute.xlu0 2
      %2526 = vperm.xlu0 %2525, %v2388
      %v2527 = vpop.permute.xlu0 %2526
      %2530 = vset.pattern.permute.xlu0 2
      %2531 = vperm.xlu0 %2530, %v2389
      %v2532 = vpop.permute.xlu0 %2531
      %2535 = vset.pattern.permute.xlu0 2
      %2536 = vperm.xlu0 %2535, %v2390
      %v2537 = vpop.permute.xlu0 %2536
      %2540 = vset.pattern.permute.xlu0 2
      %2541 = vperm.xlu0 %2540, %v2391
      %v2542 = vpop.permute.xlu0 %2541
      %2545 = vset.pattern.permute.xlu0 2
      %2546 = vperm.xlu0 %2545, %v2392
      %v2547 = vpop.permute.xlu0 %2546
      %2550 = vset.pattern.permute.xlu0 2
      %2551 = vperm.xlu0 %2550, %v2393
      %v2552 = vpop.permute.xlu0 %2551
      %2555 = vset.pattern.permute.xlu0 2
      %2556 = vperm.xlu0 %2555, %v2394
      %v2557 = vpop.permute.xlu0 %2556
      %2560 = vset.pattern.permute.xlu0 2
      %2561 = vperm.xlu0 %2560, %v2395
      %v2562 = vpop.permute.xlu0 %2561
      %2565 = vset.pattern.permute.xlu0 2
      %2566 = vperm.xlu0 %2565, %v2396
      %v2567 = vpop.permute.xlu0 %2566
      %2570 = vset.pattern.permute.xlu0 2
      %2571 = vperm.xlu0 %2570, %v2397
      %v2572 = vpop.permute.xlu0 %2571
      %2575 = vset.pattern.permute.xlu0 2
      %2576 = vperm.xlu0 %2575, %v2398
      %v2577 = vpop.permute.xlu0 %2576
      %2580 = vset.pattern.permute.xlu0 2
      %2581 = vperm.xlu0 %2580, %v2399
      %v2582 = vpop.permute.xlu0 %2581
      %2585 = vset.pattern.permute.xlu0 2
      %2586 = vperm.xlu0 %2585, %v2400
      %v2587 = vpop.permute.xlu0 %2586
      %2590 = vset.pattern.permute.xlu0 2
      %2591 = vperm.xlu0 %2590, %v2401
      %v2592 = vpop.permute.xlu0 %2591
      %v2594 = vmul.f32 %v2402, %v2437
      %v2595 = vmul.f32 %v2403, %v2442
      %v2596 = vmul.f32 %v2404, %v2447
      %v2597 = vmul.f32 %v2405, %v2452
      %v2598 = vmul.f32 %v2406, %v2457
      %v2599 = vmul.f32 %v2407, %v2462
      %v2600 = vmul.f32 %v2408, %v2467
      %v2601 = vmul.f32 %v2409, %v2472
      %v2602 = vmul.f32 %v2410, %v2477
      %v2603 = vmul.f32 %v2411, %v2482
      %v2604 = vmul.f32 %v2412, %v2487
      %v2605 = vmul.f32 %v2413, %v2492
      %v2606 = vmul.f32 %v2414, %v2497
      %v2607 = vmul.f32 %v2415, %v2502
      %v2608 = vmul.f32 %v2416, %v2507
      %v2609 = vmul.f32 %v2417, %v2512
      %v2610 = vmul.f32 %v2418, %v2517
      %v2611 = vmul.f32 %v2419, %v2522
      %v2612 = vmul.f32 %v2420, %v2527
      %v2613 = vmul.f32 %v2421, %v2532
      %v2614 = vmul.f32 %v2422, %v2537
      %v2615 = vmul.f32 %v2423, %v2542
      %v2616 = vmul.f32 %v2424, %v2547
      %v2617 = vmul.f32 %v2425, %v2552
      %v2618 = vmul.f32 %v2426, %v2557
      %v2619 = vmul.f32 %v2427, %v2562
      %v2620 = vmul.f32 %v2428, %v2567
      %v2621 = vmul.f32 %v2429, %v2572
      %v2622 = vmul.f32 %v2430, %v2577
      %v2623 = vmul.f32 %v2431, %v2582
      %v2624 = vmul.f32 %v2432, %v2587
      %v2625 = vmul.f32 %v2433, %v2592
      %v2626 = vpack.c.bf16 %v2595, %v2594
      %v2627 = vpack.c.bf16 %v2597, %v2596
      %v2628 = vpack.c.bf16 %v2599, %v2598
      %v2629 = vpack.c.bf16 %v2601, %v2600
      %v2630 = vpack.c.bf16 %v2603, %v2602
      %v2631 = vpack.c.bf16 %v2605, %v2604
      %v2632 = vpack.c.bf16 %v2607, %v2606
      %v2633 = vpack.c.bf16 %v2609, %v2608
      %v2634 = vpack.c.bf16 %v2611, %v2610
      %v2635 = vpack.c.bf16 %v2613, %v2612
      %v2636 = vpack.c.bf16 %v2615, %v2614
      %v2637 = vpack.c.bf16 %v2617, %v2616
      %v2638 = vpack.c.bf16 %v2619, %v2618
      %v2639 = vpack.c.bf16 %v2621, %v2620
      %v2640 = vpack.c.bf16 %v2623, %v2622
      %v2641 = vpack.c.bf16 %v2625, %v2624
      %s2642 = scalar_lea.vmem %s1, 4
      %v2643 = vld [vmem:[%s2642] sm:$0x3]
      %v2645 = vsel %vm175, %v2626, 0
      %v2648 = vsel %vm175, %v2627, 0
      %v2651 = vsel %vm175, %v2628, 0
      %v2654 = vsel %vm175, %v2629, 0
      %v2657 = vsel %vm175, %v2630, 0
      %v2660 = vsel %vm175, %v2631, 0
      %v2663 = vsel %vm175, %v2632, 0
      %v2666 = vsel %vm175, %v2633, 0
      %v2669 = vsel %vm175, %v2634, 0
      %v2672 = vsel %vm175, %v2635, 0
      %v2675 = vsel %vm175, %v2636, 0
      %v2678 = vsel %vm175, %v2637, 0
      %v2681 = vsel %vm175, %v2638, 0
      %v2684 = vsel %vm175, %v2639, 0
      %v2687 = vsel %vm175, %v2640, 0
      %v2690 = vsel %vm175, %v2641, 0
      %v2693 = vsel %vm1897, %v2643, 0
      %2695 = vmatprep.subr.bf16.mxu0 0
      %2696 = vmatpush1.bf16.msra.mxu0 0
      %2697 = vmatprep.subr.bf16.mxu0 0
      %2698 = vmatpush1.bf16.msra.mxu0 0
      %2699 = vmatprep.subr.bf16.mxu0 0
      %2700 = vmatpush1.bf16.msra.mxu0 0
      %2701 = vmatprep.subr.bf16.mxu0 0
      %2702 = vmatpush1.bf16.msra.mxu0 0
      %2703 = vmatprep.subr.bf16.mxu0 0
      %2704 = vmatpush1.bf16.msra.mxu0 0
      %2705 = vmatprep.subr.bf16.mxu0 0
      %2706 = vmatpush1.bf16.msra.mxu0 0
      %2707 = vmatprep.subr.bf16.mxu0 0
      %2708 = vmatpush1.bf16.msra.mxu0 0
      %2709 = vmatprep.subr.bf16.mxu0 0
      %2710 = vmatpush1.bf16.msra.mxu0 %v2693
      %2711 = vmatprep.subr.bf16.mxu0 0
      %2712 = vmatpush2.bf16.msra.mxu0 0
      %2713 = vmatprep.subr.bf16.mxu0 0
      %2714 = vmatpush2.bf16.msra.mxu0 0
      %2715 = vmatprep.subr.bf16.mxu0 0
      %2716 = vmatpush2.bf16.msra.mxu0 0
      %2717 = vmatprep.subr.bf16.mxu0 0
      %2718 = vmatpush2.bf16.msra.mxu0 0
      %2719 = vmatprep.subr.bf16.mxu0 0
      %2720 = vmatpush2.bf16.msra.mxu0 0
      %2721 = vmatprep.subr.bf16.mxu0 0
      %2722 = vmatpush2.bf16.msra.mxu0 0
      %2723 = vmatprep.subr.bf16.mxu0 0
      %2724 = vmatpush2.bf16.msra.mxu0 0
      %2725 = vmatprep.subr.bf16.mxu0 0
      %2726 = vmatpush2.bf16.msra.mxu0 0
      %2727 = vmatprep.mubr.bf16.mxu0 0
      %2728 = vmatmul.mubr.bf16.gmra.mxu0 %v2645
      %v2729 = vpop.f32.mrf.mxu0
      %v2730 = vadd.f32 0.0, %v2729
      %v2731 = vpop.f32.mrf.mxu0
      %v2732 = vpop.f32.mrf.mxu0
      %v2733 = vadd.f32 0.0, %v2732
      %v2734 = vpop.f32.mrf.mxu0
      %2735 = vmatprep.mubr.bf16.mxu0 0
      %2736 = vmatmul.mubr.bf16.gmra.mxu0 %v2648
      %v2737 = vpop.f32.mrf.mxu0
      %v2738 = vadd.f32 0.0, %v2737
      %v2739 = vpop.f32.mrf.mxu0
      %v2740 = vpop.f32.mrf.mxu0
      %v2741 = vadd.f32 0.0, %v2740
      %v2742 = vpop.f32.mrf.mxu0
      %2743 = vmatprep.mubr.bf16.mxu0 0
      %2744 = vmatmul.mubr.bf16.gmra.mxu0 %v2651
      %v2745 = vpop.f32.mrf.mxu0
      %v2746 = vadd.f32 0.0, %v2745
      %v2747 = vpop.f32.mrf.mxu0
      %v2748 = vpop.f32.mrf.mxu0
      %v2749 = vadd.f32 0.0, %v2748
      %v2750 = vpop.f32.mrf.mxu0
      %2751 = vmatprep.mubr.bf16.mxu0 0
      %2752 = vmatmul.mubr.bf16.gmra.mxu0 %v2654
      %v2753 = vpop.f32.mrf.mxu0
      %v2754 = vadd.f32 0.0, %v2753
      %v2755 = vpop.f32.mrf.mxu0
      %v2756 = vpop.f32.mrf.mxu0
      %v2757 = vadd.f32 0.0, %v2756
      %v2758 = vpop.f32.mrf.mxu0
      %2759 = vmatprep.mubr.bf16.mxu0 0
      %2760 = vmatmul.mubr.bf16.gmra.mxu0 %v2657
      %v2761 = vpop.f32.mrf.mxu0
      %v2762 = vadd.f32 0.0, %v2761
      %v2763 = vpop.f32.mrf.mxu0
      %v2764 = vpop.f32.mrf.mxu0
      %v2765 = vadd.f32 0.0, %v2764
      %v2766 = vpop.f32.mrf.mxu0
      %2767 = vmatprep.mubr.bf16.mxu0 0
      %2768 = vmatmul.mubr.bf16.gmra.mxu0 %v2660
      %v2769 = vpop.f32.mrf.mxu0
      %v2770 = vadd.f32 0.0, %v2769
      %v2771 = vpop.f32.mrf.mxu0
      %v2772 = vpop.f32.mrf.mxu0
      %v2773 = vadd.f32 0.0, %v2772
      %v2774 = vpop.f32.mrf.mxu0
      %2775 = vmatprep.mubr.bf16.mxu0 0
      %2776 = vmatmul.mubr.bf16.gmra.mxu0 %v2663
      %v2777 = vpop.f32.mrf.mxu0
      %v2778 = vadd.f32 0.0, %v2777
      %v2779 = vpop.f32.mrf.mxu0
      %v2780 = vpop.f32.mrf.mxu0
      %v2781 = vadd.f32 0.0, %v2780
      %v2782 = vpop.f32.mrf.mxu0
      %2783 = vmatprep.mubr.bf16.mxu0 0
      %2784 = vmatmul.mubr.bf16.gmra.mxu0 %v2666
      %v2785 = vpop.f32.mrf.mxu0
      %v2786 = vadd.f32 0.0, %v2785
      %v2787 = vpop.f32.mrf.mxu0
      %v2788 = vpop.f32.mrf.mxu0
      %v2789 = vadd.f32 0.0, %v2788
      %v2790 = vpop.f32.mrf.mxu0
      %2791 = vmatprep.mubr.bf16.mxu0 0
      %2792 = vmatmul.mubr.bf16.gmra.mxu0 %v2669
      %v2793 = vpop.f32.mrf.mxu0
      %v2794 = vadd.f32 0.0, %v2793
      %v2795 = vpop.f32.mrf.mxu0
      %v2796 = vpop.f32.mrf.mxu0
      %v2797 = vadd.f32 0.0, %v2796
      %v2798 = vpop.f32.mrf.mxu0
      %2799 = vmatprep.mubr.bf16.mxu0 0
      %2800 = vmatmul.mubr.bf16.gmra.mxu0 %v2672
      %v2801 = vpop.f32.mrf.mxu0
      %v2802 = vadd.f32 0.0, %v2801
      %v2803 = vpop.f32.mrf.mxu0
      %v2804 = vpop.f32.mrf.mxu0
      %v2805 = vadd.f32 0.0, %v2804
      %v2806 = vpop.f32.mrf.mxu0
      %2807 = vmatprep.mubr.bf16.mxu0 0
      %2808 = vmatmul.mubr.bf16.gmra.mxu0 %v2675
      %v2809 = vpop.f32.mrf.mxu0
      %v2810 = vadd.f32 0.0, %v2809
      %v2811 = vpop.f32.mrf.mxu0
      %v2812 = vpop.f32.mrf.mxu0
      %v2813 = vadd.f32 0.0, %v2812
      %v2814 = vpop.f32.mrf.mxu0
      %2815 = vmatprep.mubr.bf16.mxu0 0
      %2816 = vmatmul.mubr.bf16.gmra.mxu0 %v2678
      %v2817 = vpop.f32.mrf.mxu0
      %v2818 = vadd.f32 0.0, %v2817
      %v2819 = vpop.f32.mrf.mxu0
      %v2820 = vpop.f32.mrf.mxu0
      %v2821 = vadd.f32 0.0, %v2820
      %v2822 = vpop.f32.mrf.mxu0
      %2823 = vmatprep.mubr.bf16.mxu0 0
      %2824 = vmatmul.mubr.bf16.gmra.mxu0 %v2681
      %v2825 = vpop.f32.mrf.mxu0
      %v2826 = vadd.f32 0.0, %v2825
      %v2827 = vpop.f32.mrf.mxu0
      %v2828 = vpop.f32.mrf.mxu0
      %v2829 = vadd.f32 0.0, %v2828
      %v2830 = vpop.f32.mrf.mxu0
      %2831 = vmatprep.mubr.bf16.mxu0 0
      %2832 = vmatmul.mubr.bf16.gmra.mxu0 %v2684
      %v2833 = vpop.f32.mrf.mxu0
      %v2834 = vadd.f32 0.0, %v2833
      %v2835 = vpop.f32.mrf.mxu0
      %v2836 = vpop.f32.mrf.mxu0
      %v2837 = vadd.f32 0.0, %v2836
      %v2838 = vpop.f32.mrf.mxu0
      %2839 = vmatprep.mubr.bf16.mxu0 0
      %2840 = vmatmul.mubr.bf16.gmra.mxu0 %v2687
      %v2841 = vpop.f32.mrf.mxu0
      %v2842 = vadd.f32 0.0, %v2841
      %v2843 = vpop.f32.mrf.mxu0
      %v2844 = vpop.f32.mrf.mxu0
      %v2845 = vadd.f32 0.0, %v2844
      %v2846 = vpop.f32.mrf.mxu0
      %2847 = vmatprep.mubr.bf16.mxu0 0
      %2848 = vmatmul.mubr.bf16.gmra.mxu0 %v2690
      %v2849 = vpop.f32.mrf.mxu0
      %v2850 = vadd.f32 0.0, %v2849
      %v2851 = vpop.f32.mrf.mxu0
      %v2852 = vpop.f32.mrf.mxu0
      %v2853 = vadd.f32 0.0, %v2852
      %v2854 = vpop.f32.mrf.mxu0
      %2855 = vdwg.mxu0
      %v2856 = vadd.f32 %v2148, %v2730
      %v2857 = vadd.f32 %v2151, %v2733
      %v2858 = vadd.f32 %v2156, %v2738
      %v2859 = vadd.f32 %v2159, %v2741
      %v2860 = vadd.f32 %v2164, %v2746
      %v2861 = vadd.f32 %v2167, %v2749
      %v2862 = vadd.f32 %v2172, %v2754
      %v2863 = vadd.f32 %v2175, %v2757
      %v2864 = vadd.f32 %v2180, %v2762
      %v2865 = vadd.f32 %v2183, %v2765
      %v2866 = vadd.f32 %v2188, %v2770
      %v2867 = vadd.f32 %v2191, %v2773
      %v2868 = vadd.f32 %v2196, %v2778
      %v2869 = vadd.f32 %v2199, %v2781
      %v2870 = vadd.f32 %v2204, %v2786
      %v2871 = vadd.f32 %v2207, %v2789
      %v2872 = vadd.f32 %v2212, %v2794
      %v2873 = vadd.f32 %v2215, %v2797
      %v2874 = vadd.f32 %v2220, %v2802
      %v2875 = vadd.f32 %v2223, %v2805
      %v2876 = vadd.f32 %v2228, %v2810
      %v2877 = vadd.f32 %v2231, %v2813
      %v2878 = vadd.f32 %v2236, %v2818
      %v2879 = vadd.f32 %v2239, %v2821
      %v2880 = vadd.f32 %v2244, %v2826
      %v2881 = vadd.f32 %v2247, %v2829
      %v2882 = vadd.f32 %v2252, %v2834
      %v2883 = vadd.f32 %v2255, %v2837
      %v2884 = vadd.f32 %v2260, %v2842
      %v2885 = vadd.f32 %v2263, %v2845
      %v2886 = vadd.f32 %v2268, %v2850
      %v2887 = vadd.f32 %v2271, %v2853
      %v2888 = vld [vmem:[#allocation2 + $0x17] sm:$0xff]
      %v2889 = vld [vmem:[#allocation2 + $0x1f] sm:$0xff]
      %v2890 = vld [vmem:[#allocation2 + $0x27] sm:$0xff]
      %v2891 = vld [vmem:[#allocation2 + $0x2f] sm:$0xff]
      %v2892 = vld [vmem:[#allocation2 + $0x37] sm:$0xff]
      %v2893 = vld [vmem:[#allocation2 + $0x3f] sm:$0xff]
      %v2894 = vld [vmem:[#allocation2 + $0x47] sm:$0xff]
      %v2895 = vld [vmem:[#allocation2 + $0x4f] sm:$0xff]
      %v2896 = vld [vmem:[#allocation2 + $0x57] sm:$0xff]
      %v2897 = vld [vmem:[#allocation2 + $0x5f] sm:$0xff]
      %v2898 = vld [vmem:[#allocation2 + $0x67] sm:$0xff]
      %v2899 = vld [vmem:[#allocation2 + $0x6f] sm:$0xff]
      %v2900 = vld [vmem:[#allocation2 + $0x77] sm:$0xff]
      %v2901 = vld [vmem:[#allocation2 + $0x7f] sm:$0xff]
      %v2902 = vld [vmem:[#allocation2 + $0x87] sm:$0xff]
      %v2903 = vld [vmem:[#allocation2 + $0x8f] sm:$0xff]
      %v2904 = vld [vmem:[#allocation2 + $0x97] sm:$0xff]
      %v2905 = vld [vmem:[#allocation2 + $0x9f] sm:$0xff]
      %v2906 = vld [vmem:[#allocation2 + $0xa7] sm:$0xff]
      %v2907 = vld [vmem:[#allocation2 + $0xaf] sm:$0xff]
      %v2908 = vld [vmem:[#allocation2 + $0xb7] sm:$0xff]
      %v2909 = vld [vmem:[#allocation2 + $0xbf] sm:$0xff]
      %v2910 = vld [vmem:[#allocation2 + $0xc7] sm:$0xff]
      %v2911 = vld [vmem:[#allocation2 + $0xcf] sm:$0xff]
      %v2912 = vld [vmem:[#allocation2 + $0xd7] sm:$0xff]
      %v2913 = vld [vmem:[#allocation2 + $0xdf] sm:$0xff]
      %v2914 = vld [vmem:[#allocation2 + $0xe7] sm:$0xff]
      %v2915 = vld [vmem:[#allocation2 + $0xef] sm:$0xff]
      %v2916 = vld [vmem:[#allocation2 + $0xf7] sm:$0xff]
      %v2917 = vld [vmem:[#allocation2 + $0xff] sm:$0xff]
      %v2918 = vld [vmem:[#allocation2 + $0x107] sm:$0xff]
      %v2919 = vld [vmem:[#allocation2 + $0x10f] sm:$0xff]
      %v2920 = vmul.f32 %v2888, %v345
      %v2921 = vmul.f32 %v2889, %v350
      %v2922 = vmul.f32 %v2890, %v355
      %v2923 = vmul.f32 %v2891, %v360
      %v2924 = vmul.f32 %v2892, %v365
      %v2925 = vmul.f32 %v2893, %v370
      %v2926 = vmul.f32 %v2894, %v375
      %v2927 = vmul.f32 %v2895, %v380
      %v2928 = vmul.f32 %v2896, %v385
      %v2929 = vmul.f32 %v2897, %v390
      %v2930 = vmul.f32 %v2898, %v395
      %v2931 = vmul.f32 %v2899, %v400
      %v2932 = vmul.f32 %v2900, %v405
      %v2933 = vmul.f32 %v2901, %v410
      %v2934 = vmul.f32 %v2902, %v415
      %v2935 = vmul.f32 %v2903, %v420
      %v2936 = vmul.f32 %v2904, %v425
      %v2937 = vmul.f32 %v2905, %v430
      %v2938 = vmul.f32 %v2906, %v435
      %v2939 = vmul.f32 %v2907, %v440
      %v2940 = vmul.f32 %v2908, %v445
      %v2941 = vmul.f32 %v2909, %v450
      %v2942 = vmul.f32 %v2910, %v455
      %v2943 = vmul.f32 %v2911, %v460
      %v2944 = vmul.f32 %v2912, %v465
      %v2945 = vmul.f32 %v2913, %v470
      %v2946 = vmul.f32 %v2914, %v475
      %v2947 = vmul.f32 %v2915, %v480
      %v2948 = vmul.f32 %v2916, %v485
      %v2949 = vmul.f32 %v2917, %v490
      %v2950 = vmul.f32 %v2918, %v495
      %v2951 = vmul.f32 %v2919, %v500
      %v2952 = vpack.c.bf16 %v2921, %v2920
      %v2953 = vpack.c.bf16 %v2923, %v2922
      %v2954 = vpack.c.bf16 %v2925, %v2924
      %v2955 = vpack.c.bf16 %v2927, %v2926
      %v2956 = vpack.c.bf16 %v2929, %v2928
      %v2957 = vpack.c.bf16 %v2931, %v2930
      %v2958 = vpack.c.bf16 %v2933, %v2932
      %v2959 = vpack.c.bf16 %v2935, %v2934
      %v2960 = vpack.c.bf16 %v2937, %v2936
      %v2961 = vpack.c.bf16 %v2939, %v2938
      %v2962 = vpack.c.bf16 %v2941, %v2940
      %v2963 = vpack.c.bf16 %v2943, %v2942
      %v2964 = vpack.c.bf16 %v2945, %v2944
      %v2965 = vpack.c.bf16 %v2947, %v2946
      %v2966 = vpack.c.bf16 %v2949, %v2948
      %v2967 = vpack.c.bf16 %v2951, %v2950
      %s2968 = scalar_lea.vmem %s1, 6
      %v2969 = vld [vmem:[%s2968] sm:$0x3]
      %v2971 = vsel %vm175, %v2952, 0
      %v2974 = vsel %vm175, %v2953, 0
      %v2977 = vsel %vm175, %v2954, 0
      %v2980 = vsel %vm175, %v2955, 0
      %v2983 = vsel %vm175, %v2956, 0
      %v2986 = vsel %vm175, %v2957, 0
      %v2989 = vsel %vm175, %v2958, 0
      %v2992 = vsel %vm175, %v2959, 0
      %v2995 = vsel %vm175, %v2960, 0
      %v2998 = vsel %vm175, %v2961, 0
      %v3001 = vsel %vm175, %v2962, 0
      %v3004 = vsel %vm175, %v2963, 0
      %v3007 = vsel %vm175, %v2964, 0
      %v3010 = vsel %vm175, %v2965, 0
      %v3013 = vsel %vm175, %v2966, 0
      %v3016 = vsel %vm175, %v2967, 0
      %v3019 = vsel %vm1897, %v2969, 0
      %3021 = vmatprep.subr.bf16.mxu0 0
      %3022 = vmatpush1.bf16.msra.mxu0 0
      %3023 = vmatprep.subr.bf16.mxu0 0
      %3024 = vmatpush1.bf16.msra.mxu0 0
      %3025 = vmatprep.subr.bf16.mxu0 0
      %3026 = vmatpush1.bf16.msra.mxu0 0
      %3027 = vmatprep.subr.bf16.mxu0 0
      %3028 = vmatpush1.bf16.msra.mxu0 0
      %3029 = vmatprep.subr.bf16.mxu0 0
      %3030 = vmatpush1.bf16.msra.mxu0 0
      %3031 = vmatprep.subr.bf16.mxu0 0
      %3032 = vmatpush1.bf16.msra.mxu0 0
      %3033 = vmatprep.subr.bf16.mxu0 0
      %3034 = vmatpush1.bf16.msra.mxu0 0
      %3035 = vmatprep.subr.bf16.mxu0 0
      %3036 = vmatpush1.bf16.msra.mxu0 %v3019
      %3037 = vmatprep.subr.bf16.mxu0 0
      %3038 = vmatpush2.bf16.msra.mxu0 0
      %3039 = vmatprep.subr.bf16.mxu0 0
      %3040 = vmatpush2.bf16.msra.mxu0 0
      %3041 = vmatprep.subr.bf16.mxu0 0
      %3042 = vmatpush2.bf16.msra.mxu0 0
      %3043 = vmatprep.subr.bf16.mxu0 0
      %3044 = vmatpush2.bf16.msra.mxu0 0
      %3045 = vmatprep.subr.bf16.mxu0 0
      %3046 = vmatpush2.bf16.msra.mxu0 0
      %3047 = vmatprep.subr.bf16.mxu0 0
      %3048 = vmatpush2.bf16.msra.mxu0 0
      %3049 = vmatprep.subr.bf16.mxu0 0
      %3050 = vmatpush2.bf16.msra.mxu0 0
      %3051 = vmatprep.subr.bf16.mxu0 0
      %3052 = vmatpush2.bf16.msra.mxu0 0
      %3053 = vmatprep.mubr.bf16.mxu0 0
      %3054 = vmatmul.mubr.bf16.gmra.mxu0 %v2971
      %v3055 = vpop.f32.mrf.mxu0
      %v3056 = vadd.f32 0.0, %v3055
      %v3057 = vpop.f32.mrf.mxu0
      %v3058 = vpop.f32.mrf.mxu0
      %v3059 = vadd.f32 0.0, %v3058
      %v3060 = vpop.f32.mrf.mxu0
      %3061 = vmatprep.mubr.bf16.mxu0 0
      %3062 = vmatmul.mubr.bf16.gmra.mxu0 %v2974
      %v3063 = vpop.f32.mrf.mxu0
      %v3064 = vadd.f32 0.0, %v3063
      %v3065 = vpop.f32.mrf.mxu0
      %v3066 = vpop.f32.mrf.mxu0
      %v3067 = vadd.f32 0.0, %v3066
      %v3068 = vpop.f32.mrf.mxu0
      %3069 = vmatprep.mubr.bf16.mxu0 0
      %3070 = vmatmul.mubr.bf16.gmra.mxu0 %v2977
      %v3071 = vpop.f32.mrf.mxu0
      %v3072 = vadd.f32 0.0, %v3071
      %v3073 = vpop.f32.mrf.mxu0
      %v3074 = vpop.f32.mrf.mxu0
      %v3075 = vadd.f32 0.0, %v3074
      %v3076 = vpop.f32.mrf.mxu0
      %3077 = vmatprep.mubr.bf16.mxu0 0
      %3078 = vmatmul.mubr.bf16.gmra.mxu0 %v2980
      %v3079 = vpop.f32.mrf.mxu0
      %v3080 = vadd.f32 0.0, %v3079
      %v3081 = vpop.f32.mrf.mxu0
      %v3082 = vpop.f32.mrf.mxu0
      %v3083 = vadd.f32 0.0, %v3082
      %v3084 = vpop.f32.mrf.mxu0
      %3085 = vmatprep.mubr.bf16.mxu0 0
      %3086 = vmatmul.mubr.bf16.gmra.mxu0 %v2983
      %v3087 = vpop.f32.mrf.mxu0
      %v3088 = vadd.f32 0.0, %v3087
      %v3089 = vpop.f32.mrf.mxu0
      %v3090 = vpop.f32.mrf.mxu0
      %v3091 = vadd.f32 0.0, %v3090
      %v3092 = vpop.f32.mrf.mxu0
      %3093 = vmatprep.mubr.bf16.mxu0 0
      %3094 = vmatmul.mubr.bf16.gmra.mxu0 %v2986
      %v3095 = vpop.f32.mrf.mxu0
      %v3096 = vadd.f32 0.0, %v3095
      %v3097 = vpop.f32.mrf.mxu0
      %v3098 = vpop.f32.mrf.mxu0
      %v3099 = vadd.f32 0.0, %v3098
      %v3100 = vpop.f32.mrf.mxu0
      %3101 = vmatprep.mubr.bf16.mxu0 0
      %3102 = vmatmul.mubr.bf16.gmra.mxu0 %v2989
      %v3103 = vpop.f32.mrf.mxu0
      %v3104 = vadd.f32 0.0, %v3103
      %v3105 = vpop.f32.mrf.mxu0
      %v3106 = vpop.f32.mrf.mxu0
      %v3107 = vadd.f32 0.0, %v3106
      %v3108 = vpop.f32.mrf.mxu0
      %3109 = vmatprep.mubr.bf16.mxu0 0
      %3110 = vmatmul.mubr.bf16.gmra.mxu0 %v2992
      %v3111 = vpop.f32.mrf.mxu0
      %v3112 = vadd.f32 0.0, %v3111
      %v3113 = vpop.f32.mrf.mxu0
      %v3114 = vpop.f32.mrf.mxu0
      %v3115 = vadd.f32 0.0, %v3114
      %v3116 = vpop.f32.mrf.mxu0
      %3117 = vmatprep.mubr.bf16.mxu0 0
      %3118 = vmatmul.mubr.bf16.gmra.mxu0 %v2995
      %v3119 = vpop.f32.mrf.mxu0
      %v3120 = vadd.f32 0.0, %v3119
      %v3121 = vpop.f32.mrf.mxu0
      %v3122 = vpop.f32.mrf.mxu0
      %v3123 = vadd.f32 0.0, %v3122
      %v3124 = vpop.f32.mrf.mxu0
      %3125 = vmatprep.mubr.bf16.mxu0 0
      %3126 = vmatmul.mubr.bf16.gmra.mxu0 %v2998
      %v3127 = vpop.f32.mrf.mxu0
      %v3128 = vadd.f32 0.0, %v3127
      %v3129 = vpop.f32.mrf.mxu0
      %v3130 = vpop.f32.mrf.mxu0
      %v3131 = vadd.f32 0.0, %v3130
      %v3132 = vpop.f32.mrf.mxu0
      %3133 = vmatprep.mubr.bf16.mxu0 0
      %3134 = vmatmul.mubr.bf16.gmra.mxu0 %v3001
      %v3135 = vpop.f32.mrf.mxu0
      %v3136 = vadd.f32 0.0, %v3135
      %v3137 = vpop.f32.mrf.mxu0
      %v3138 = vpop.f32.mrf.mxu0
      %v3139 = vadd.f32 0.0, %v3138
      %v3140 = vpop.f32.mrf.mxu0
      %3141 = vmatprep.mubr.bf16.mxu0 0
      %3142 = vmatmul.mubr.bf16.gmra.mxu0 %v3004
      %v3143 = vpop.f32.mrf.mxu0
      %v3144 = vadd.f32 0.0, %v3143
      %v3145 = vpop.f32.mrf.mxu0
      %v3146 = vpop.f32.mrf.mxu0
      %v3147 = vadd.f32 0.0, %v3146
      %v3148 = vpop.f32.mrf.mxu0
      %3149 = vmatprep.mubr.bf16.mxu0 0
      %3150 = vmatmul.mubr.bf16.gmra.mxu0 %v3007
      %v3151 = vpop.f32.mrf.mxu0
      %v3152 = vadd.f32 0.0, %v3151
      %v3153 = vpop.f32.mrf.mxu0
      %v3154 = vpop.f32.mrf.mxu0
      %v3155 = vadd.f32 0.0, %v3154
      %v3156 = vpop.f32.mrf.mxu0
      %3157 = vmatprep.mubr.bf16.mxu0 0
      %3158 = vmatmul.mubr.bf16.gmra.mxu0 %v3010
      %v3159 = vpop.f32.mrf.mxu0
      %v3160 = vadd.f32 0.0, %v3159
      %v3161 = vpop.f32.mrf.mxu0
      %v3162 = vpop.f32.mrf.mxu0
      %v3163 = vadd.f32 0.0, %v3162
      %v3164 = vpop.f32.mrf.mxu0
      %3165 = vmatprep.mubr.bf16.mxu0 0
      %3166 = vmatmul.mubr.bf16.gmra.mxu0 %v3013
      %v3167 = vpop.f32.mrf.mxu0
      %v3168 = vadd.f32 0.0, %v3167
      %v3169 = vpop.f32.mrf.mxu0
      %v3170 = vpop.f32.mrf.mxu0
      %v3171 = vadd.f32 0.0, %v3170
      %v3172 = vpop.f32.mrf.mxu0
      %3173 = vmatprep.mubr.bf16.mxu0 0
      %3174 = vmatmul.mubr.bf16.gmra.mxu0 %v3016
      %v3175 = vpop.f32.mrf.mxu0
      %v3176 = vadd.f32 0.0, %v3175
      %v3177 = vpop.f32.mrf.mxu0
      %v3178 = vpop.f32.mrf.mxu0
      %v3179 = vadd.f32 0.0, %v3178
      %v3180 = vpop.f32.mrf.mxu0
      %3181 = vdwg.mxu0
      %v3182 = vadd.f32 %v2856, %v3056
      %v3183 = vadd.f32 %v2857, %v3059
      %v3184 = vadd.f32 %v2858, %v3064
      %v3185 = vadd.f32 %v2859, %v3067
      %v3186 = vadd.f32 %v2860, %v3072
      %v3187 = vadd.f32 %v2861, %v3075
      %v3188 = vadd.f32 %v2862, %v3080
      %v3189 = vadd.f32 %v2863, %v3083
      %v3190 = vadd.f32 %v2864, %v3088
      %v3191 = vadd.f32 %v2865, %v3091
      %v3192 = vadd.f32 %v2866, %v3096
      %v3193 = vadd.f32 %v2867, %v3099
      %v3194 = vadd.f32 %v2868, %v3104
      %v3195 = vadd.f32 %v2869, %v3107
      %v3196 = vadd.f32 %v2870, %v3112
      %v3197 = vadd.f32 %v2871, %v3115
      %v3198 = vadd.f32 %v2872, %v3120
      %v3199 = vadd.f32 %v2873, %v3123
      %v3200 = vadd.f32 %v2874, %v3128
      %v3201 = vadd.f32 %v2875, %v3131
      %v3202 = vadd.f32 %v2876, %v3136
      %v3203 = vadd.f32 %v2877, %v3139
      %v3204 = vadd.f32 %v2878, %v3144
      %v3205 = vadd.f32 %v2879, %v3147
      %v3206 = vadd.f32 %v2880, %v3152
      %v3207 = vadd.f32 %v2881, %v3155
      %v3208 = vadd.f32 %v2882, %v3160
      %v3209 = vadd.f32 %v2883, %v3163
      %v3210 = vadd.f32 %v2884, %v3168
      %v3211 = vadd.f32 %v2885, %v3171
      %v3212 = vadd.f32 %v2886, %v3176
      %v3213 = vadd.f32 %v2887, %v3179
      %v3214 = vpack.c.bf16 %v1335, %v1334
      %v3215 = vpack.c.bf16 %v1337, %v1336
      %v3216 = vpack.c.bf16 %v1339, %v1338
      %v3217 = vpack.c.bf16 %v1341, %v1340
      %v3218 = vpack.c.bf16 %v1343, %v1342
      %v3219 = vpack.c.bf16 %v1345, %v1344
      %v3220 = vpack.c.bf16 %v1347, %v1346
      %v3221 = vpack.c.bf16 %v1349, %v1348
      %v3222 = vpack.c.bf16 %v1351, %v1350
      %v3223 = vpack.c.bf16 %v1353, %v1352
      %v3224 = vpack.c.bf16 %v1355, %v1354
      %v3225 = vpack.c.bf16 %v1357, %v1356
      %v3226 = vpack.c.bf16 %v1359, %v1358
      %v3227 = vpack.c.bf16 %v1361, %v1360
      %v3228 = vpack.c.bf16 %v1363, %v1362
      %v3229 = vpack.c.bf16 %v1365, %v1364
      %s3230 = scalar_lea.vmem %s1, 8
      %v3231 = vld [vmem:[%s3230] sm:$0x3]
      %v3233 = vsel %vm175, %v3214, 0
      %v3236 = vsel %vm175, %v3215, 0
      %v3239 = vsel %vm175, %v3216, 0
      %v3242 = vsel %vm175, %v3217, 0
      %v3245 = vsel %vm175, %v3218, 0
      %v3248 = vsel %vm175, %v3219, 0
      %v3251 = vsel %vm175, %v3220, 0
      %v3254 = vsel %vm175, %v3221, 0
      %v3257 = vsel %vm175, %v3222, 0
      %v3260 = vsel %vm175, %v3223, 0
      %v3263 = vsel %vm175, %v3224, 0
      %v3266 = vsel %vm175, %v3225, 0
      %v3269 = vsel %vm175, %v3226, 0
      %v3272 = vsel %vm175, %v3227, 0
      %v3275 = vsel %vm175, %v3228, 0
      %v3278 = vsel %vm175, %v3229, 0
      %v3281 = vsel %vm1897, %v3231, 0
      %3283 = vmatprep.subr.bf16.mxu0 0
      %3284 = vmatpush1.bf16.msra.mxu0 0
      %3285 = vmatprep.subr.bf16.mxu0 0
      %3286 = vmatpush1.bf16.msra.mxu0 0
      %3287 = vmatprep.subr.bf16.mxu0 0
      %3288 = vmatpush1.bf16.msra.mxu0 0
      %3289 = vmatprep.subr.bf16.mxu0 0
      %3290 = vmatpush1.bf16.msra.mxu0 0
      %3291 = vmatprep.subr.bf16.mxu0 0
      %3292 = vmatpush1.bf16.msra.mxu0 0
      %3293 = vmatprep.subr.bf16.mxu0 0
      %3294 = vmatpush1.bf16.msra.mxu0 0
      %3295 = vmatprep.subr.bf16.mxu0 0
      %3296 = vmatpush1.bf16.msra.mxu0 0
      %3297 = vmatprep.subr.bf16.mxu0 0
      %3298 = vmatpush1.bf16.msra.mxu0 %v3281
      %3299 = vmatprep.subr.bf16.mxu0 0
      %3300 = vmatpush2.bf16.msra.mxu0 0
      %3301 = vmatprep.subr.bf16.mxu0 0
      %3302 = vmatpush2.bf16.msra.mxu0 0
      %3303 = vmatprep.subr.bf16.mxu0 0
      %3304 = vmatpush2.bf16.msra.mxu0 0
      %3305 = vmatprep.subr.bf16.mxu0 0
      %3306 = vmatpush2.bf16.msra.mxu0 0
      %3307 = vmatprep.subr.bf16.mxu0 0
      %3308 = vmatpush2.bf16.msra.mxu0 0
      %3309 = vmatprep.subr.bf16.mxu0 0
      %3310 = vmatpush2.bf16.msra.mxu0 0
      %3311 = vmatprep.subr.bf16.mxu0 0
      %3312 = vmatpush2.bf16.msra.mxu0 0
      %3313 = vmatprep.subr.bf16.mxu0 0
      %3314 = vmatpush2.bf16.msra.mxu0 0
      %3315 = vmatprep.mubr.bf16.mxu0 0
      %3316 = vmatmul.mubr.bf16.gmra.mxu0 %v3233
      %v3317 = vpop.f32.mrf.mxu0
      %v3318 = vadd.f32 0.0, %v3317
      %v3319 = vpop.f32.mrf.mxu0
      %v3320 = vpop.f32.mrf.mxu0
      %v3321 = vadd.f32 0.0, %v3320
      %v3322 = vpop.f32.mrf.mxu0
      %3323 = vmatprep.mubr.bf16.mxu0 0
      %3324 = vmatmul.mubr.bf16.gmra.mxu0 %v3236
      %v3325 = vpop.f32.mrf.mxu0
      %v3326 = vadd.f32 0.0, %v3325
      %v3327 = vpop.f32.mrf.mxu0
      %v3328 = vpop.f32.mrf.mxu0
      %v3329 = vadd.f32 0.0, %v3328
      %v3330 = vpop.f32.mrf.mxu0
      %3331 = vmatprep.mubr.bf16.mxu0 0
      %3332 = vmatmul.mubr.bf16.gmra.mxu0 %v3239
      %v3333 = vpop.f32.mrf.mxu0
      %v3334 = vadd.f32 0.0, %v3333
      %v3335 = vpop.f32.mrf.mxu0
      %v3336 = vpop.f32.mrf.mxu0
      %v3337 = vadd.f32 0.0, %v3336
      %v3338 = vpop.f32.mrf.mxu0
      %3339 = vmatprep.mubr.bf16.mxu0 0
      %3340 = vmatmul.mubr.bf16.gmra.mxu0 %v3242
      %v3341 = vpop.f32.mrf.mxu0
      %v3342 = vadd.f32 0.0, %v3341
      %v3343 = vpop.f32.mrf.mxu0
      %v3344 = vpop.f32.mrf.mxu0
      %v3345 = vadd.f32 0.0, %v3344
      %v3346 = vpop.f32.mrf.mxu0
      %3347 = vmatprep.mubr.bf16.mxu0 0
      %3348 = vmatmul.mubr.bf16.gmra.mxu0 %v3245
      %v3349 = vpop.f32.mrf.mxu0
      %v3350 = vadd.f32 0.0, %v3349
      %v3351 = vpop.f32.mrf.mxu0
      %v3352 = vpop.f32.mrf.mxu0
      %v3353 = vadd.f32 0.0, %v3352
      %v3354 = vpop.f32.mrf.mxu0
      %3355 = vmatprep.mubr.bf16.mxu0 0
      %3356 = vmatmul.mubr.bf16.gmra.mxu0 %v3248
      %v3357 = vpop.f32.mrf.mxu0
      %v3358 = vadd.f32 0.0, %v3357
      %v3359 = vpop.f32.mrf.mxu0
      %v3360 = vpop.f32.mrf.mxu0
      %v3361 = vadd.f32 0.0, %v3360
      %v3362 = vpop.f32.mrf.mxu0
      %3363 = vmatprep.mubr.bf16.mxu0 0
      %3364 = vmatmul.mubr.bf16.gmra.mxu0 %v3251
      %v3365 = vpop.f32.mrf.mxu0
      %v3366 = vadd.f32 0.0, %v3365
      %v3367 = vpop.f32.mrf.mxu0
      %v3368 = vpop.f32.mrf.mxu0
      %v3369 = vadd.f32 0.0, %v3368
      %v3370 = vpop.f32.mrf.mxu0
      %3371 = vmatprep.mubr.bf16.mxu0 0
      %3372 = vmatmul.mubr.bf16.gmra.mxu0 %v3254
      %v3373 = vpop.f32.mrf.mxu0
      %v3374 = vadd.f32 0.0, %v3373
      %v3375 = vpop.f32.mrf.mxu0
      %v3376 = vpop.f32.mrf.mxu0
      %v3377 = vadd.f32 0.0, %v3376
      %v3378 = vpop.f32.mrf.mxu0
      %3379 = vmatprep.mubr.bf16.mxu0 0
      %3380 = vmatmul.mubr.bf16.gmra.mxu0 %v3257
      %v3381 = vpop.f32.mrf.mxu0
      %v3382 = vadd.f32 0.0, %v3381
      %v3383 = vpop.f32.mrf.mxu0
      %v3384 = vpop.f32.mrf.mxu0
      %v3385 = vadd.f32 0.0, %v3384
      %v3386 = vpop.f32.mrf.mxu0
      %3387 = vmatprep.mubr.bf16.mxu0 0
      %3388 = vmatmul.mubr.bf16.gmra.mxu0 %v3260
      %v3389 = vpop.f32.mrf.mxu0
      %v3390 = vadd.f32 0.0, %v3389
      %v3391 = vpop.f32.mrf.mxu0
      %v3392 = vpop.f32.mrf.mxu0
      %v3393 = vadd.f32 0.0, %v3392
      %v3394 = vpop.f32.mrf.mxu0
      %3395 = vmatprep.mubr.bf16.mxu0 0
      %3396 = vmatmul.mubr.bf16.gmra.mxu0 %v3263
      %v3397 = vpop.f32.mrf.mxu0
      %v3398 = vadd.f32 0.0, %v3397
      %v3399 = vpop.f32.mrf.mxu0
      %v3400 = vpop.f32.mrf.mxu0
      %v3401 = vadd.f32 0.0, %v3400
      %v3402 = vpop.f32.mrf.mxu0
      %3403 = vmatprep.mubr.bf16.mxu0 0
      %3404 = vmatmul.mubr.bf16.gmra.mxu0 %v3266
      %v3405 = vpop.f32.mrf.mxu0
      %v3406 = vadd.f32 0.0, %v3405
      %v3407 = vpop.f32.mrf.mxu0
      %v3408 = vpop.f32.mrf.mxu0
      %v3409 = vadd.f32 0.0, %v3408
      %v3410 = vpop.f32.mrf.mxu0
      %3411 = vmatprep.mubr.bf16.mxu0 0
      %3412 = vmatmul.mubr.bf16.gmra.mxu0 %v3269
      %v3413 = vpop.f32.mrf.mxu0
      %v3414 = vadd.f32 0.0, %v3413
      %v3415 = vpop.f32.mrf.mxu0
      %v3416 = vpop.f32.mrf.mxu0
      %v3417 = vadd.f32 0.0, %v3416
      %v3418 = vpop.f32.mrf.mxu0
      %3419 = vmatprep.mubr.bf16.mxu0 0
      %3420 = vmatmul.mubr.bf16.gmra.mxu0 %v3272
      %v3421 = vpop.f32.mrf.mxu0
      %v3422 = vadd.f32 0.0, %v3421
      %v3423 = vpop.f32.mrf.mxu0
      %v3424 = vpop.f32.mrf.mxu0
      %v3425 = vadd.f32 0.0, %v3424
      %v3426 = vpop.f32.mrf.mxu0
      %3427 = vmatprep.mubr.bf16.mxu0 0
      %3428 = vmatmul.mubr.bf16.gmra.mxu0 %v3275
      %v3429 = vpop.f32.mrf.mxu0
      %v3430 = vadd.f32 0.0, %v3429
      %v3431 = vpop.f32.mrf.mxu0
      %v3432 = vpop.f32.mrf.mxu0
      %v3433 = vadd.f32 0.0, %v3432
      %v3434 = vpop.f32.mrf.mxu0
      %3435 = vmatprep.mubr.bf16.mxu0 0
      %3436 = vmatmul.mubr.bf16.gmra.mxu0 %v3278
      %v3437 = vpop.f32.mrf.mxu0
      %v3438 = vadd.f32 0.0, %v3437
      %v3439 = vpop.f32.mrf.mxu0
      %v3440 = vpop.f32.mrf.mxu0
      %v3441 = vadd.f32 0.0, %v3440
      %v3442 = vpop.f32.mrf.mxu0
      %3443 = vdwg.mxu0
      %v3444 = vadd.f32 %v3182, %v3318
      %v3445 = vadd.f32 %v3183, %v3321
      %v3446 = vadd.f32 %v3184, %v3326
      %v3447 = vadd.f32 %v3185, %v3329
      %v3448 = vadd.f32 %v3186, %v3334
      %v3449 = vadd.f32 %v3187, %v3337
      %v3450 = vadd.f32 %v3188, %v3342
      %v3451 = vadd.f32 %v3189, %v3345
      %v3452 = vadd.f32 %v3190, %v3350
      %v3453 = vadd.f32 %v3191, %v3353
      %v3454 = vadd.f32 %v3192, %v3358
      %v3455 = vadd.f32 %v3193, %v3361
      %v3456 = vadd.f32 %v3194, %v3366
      %v3457 = vadd.f32 %v3195, %v3369
      %v3458 = vadd.f32 %v3196, %v3374
      %v3459 = vadd.f32 %v3197, %v3377
      %v3460 = vadd.f32 %v3198, %v3382
      %v3461 = vadd.f32 %v3199, %v3385
      %v3462 = vadd.f32 %v3200, %v3390
      %v3463 = vadd.f32 %v3201, %v3393
      %v3464 = vadd.f32 %v3202, %v3398
      %v3465 = vadd.f32 %v3203, %v3401
      %v3466 = vadd.f32 %v3204, %v3406
      %v3467 = vadd.f32 %v3205, %v3409
      %v3468 = vadd.f32 %v3206, %v3414
      %v3469 = vadd.f32 %v3207, %v3417
      %v3470 = vadd.f32 %v3208, %v3422
      %v3471 = vadd.f32 %v3209, %v3425
      %v3472 = vadd.f32 %v3210, %v3430
      %v3473 = vadd.f32 %v3211, %v3433
      %v3474 = vadd.f32 %v3212, %v3438
      %v3475 = vadd.f32 %v3213, %v3441
      %v3476 = vld [vmem:[#allocation2 + $0x19] sm:$0xff]
      %v3477 = vld [vmem:[#allocation2 + $0x21] sm:$0xff]
      %v3478 = vld [vmem:[#allocation2 + $0x29] sm:$0xff]
      %v3479 = vld [vmem:[#allocation2 + $0x31] sm:$0xff]
      %v3480 = vld [vmem:[#allocation2 + $0x39] sm:$0xff]
      %v3481 = vld [vmem:[#allocation2 + $0x41] sm:$0xff]
      %v3482 = vld [vmem:[#allocation2 + $0x49] sm:$0xff]
      %v3483 = vld [vmem:[#allocation2 + $0x51] sm:$0xff]
      %v3484 = vld [vmem:[#allocation2 + $0x59] sm:$0xff]
      %v3485 = vld [vmem:[#allocation2 + $0x61] sm:$0xff]
      %v3486 = vld [vmem:[#allocation2 + $0x69] sm:$0xff]
      %v3487 = vld [vmem:[#allocation2 + $0x71] sm:$0xff]
      %v3488 = vld [vmem:[#allocation2 + $0x79] sm:$0xff]
      %v3489 = vld [vmem:[#allocation2 + $0x81] sm:$0xff]
      %v3490 = vld [vmem:[#allocation2 + $0x89] sm:$0xff]
      %v3491 = vld [vmem:[#allocation2 + $0x91] sm:$0xff]
      %v3492 = vld [vmem:[#allocation2 + $0x99] sm:$0xff]
      %v3493 = vld [vmem:[#allocation2 + $0xa1] sm:$0xff]
      %v3494 = vld [vmem:[#allocation2 + $0xa9] sm:$0xff]
      %v3495 = vld [vmem:[#allocation2 + $0xb1] sm:$0xff]
      %v3496 = vld [vmem:[#allocation2 + $0xb9] sm:$0xff]
      %v3497 = vld [vmem:[#allocation2 + $0xc1] sm:$0xff]
      %v3498 = vld [vmem:[#allocation2 + $0xc9] sm:$0xff]
      %v3499 = vld [vmem:[#allocation2 + $0xd1] sm:$0xff]
      %v3500 = vld [vmem:[#allocation2 + $0xd9] sm:$0xff]
      %v3501 = vld [vmem:[#allocation2 + $0xe1] sm:$0xff]
      %v3502 = vld [vmem:[#allocation2 + $0xe9] sm:$0xff]
      %v3503 = vld [vmem:[#allocation2 + $0xf1] sm:$0xff]
      %v3504 = vld [vmem:[#allocation2 + $0xf9] sm:$0xff]
      %v3505 = vld [vmem:[#allocation2 + $0x101] sm:$0xff]
      %v3506 = vld [vmem:[#allocation2 + $0x109] sm:$0xff]
      %v3507 = vld [vmem:[#allocation2 + $0x111] sm:$0xff]
      %v3508 = vmul.f32 %v3476, %v568
      %v3509 = vmul.f32 %v3477, %v572
      %v3510 = vmul.f32 %v3478, %v576
      %v3511 = vmul.f32 %v3479, %v580
      %v3512 = vmul.f32 %v3480, %v584
      %v3513 = vmul.f32 %v3481, %v588
      %v3514 = vmul.f32 %v3482, %v592
      %v3515 = vmul.f32 %v3483, %v596
      %v3516 = vmul.f32 %v3484, %v600
      %v3517 = vmul.f32 %v3485, %v604
      %v3518 = vmul.f32 %v3486, %v608
      %v3519 = vmul.f32 %v3487, %v612
      %v3520 = vmul.f32 %v3488, %v616
      %v3521 = vmul.f32 %v3489, %v620
      %v3522 = vmul.f32 %v3490, %v624
      %v3523 = vmul.f32 %v3491, %v628
      %v3524 = vmul.f32 %v3492, %v632
      %v3525 = vmul.f32 %v3493, %v636
      %v3526 = vmul.f32 %v3494, %v640
      %v3527 = vmul.f32 %v3495, %v644
      %v3528 = vmul.f32 %v3496, %v648
      %v3529 = vmul.f32 %v3497, %v652
      %v3530 = vmul.f32 %v3498, %v656
      %v3531 = vmul.f32 %v3499, %v660
      %v3532 = vmul.f32 %v3500, %v664
      %v3533 = vmul.f32 %v3501, %v668
      %v3534 = vmul.f32 %v3502, %v672
      %v3535 = vmul.f32 %v3503, %v676
      %v3536 = vmul.f32 %v3504, %v680
      %v3537 = vmul.f32 %v3505, %v684
      %v3538 = vmul.f32 %v3506, %v688
      %v3539 = vmul.f32 %v3507, %v692
      %v3540 = vpack.c.bf16 %v3509, %v3508
      %v3541 = vpack.c.bf16 %v3511, %v3510
      %v3542 = vpack.c.bf16 %v3513, %v3512
      %v3543 = vpack.c.bf16 %v3515, %v3514
      %v3544 = vpack.c.bf16 %v3517, %v3516
      %v3545 = vpack.c.bf16 %v3519, %v3518
      %v3546 = vpack.c.bf16 %v3521, %v3520
      %v3547 = vpack.c.bf16 %v3523, %v3522
      %v3548 = vpack.c.bf16 %v3525, %v3524
      %v3549 = vpack.c.bf16 %v3527, %v3526
      %v3550 = vpack.c.bf16 %v3529, %v3528
      %v3551 = vpack.c.bf16 %v3531, %v3530
      %v3552 = vpack.c.bf16 %v3533, %v3532
      %v3553 = vpack.c.bf16 %v3535, %v3534
      %v3554 = vpack.c.bf16 %v3537, %v3536
      %v3555 = vpack.c.bf16 %v3539, %v3538
      %s3556 = scalar_lea.vmem %s1, 10
      %v3557 = vld [vmem:[%s3556] sm:$0x3]
      %v3559 = vsel %vm175, %v3540, 0
      %v3562 = vsel %vm175, %v3541, 0
      %v3565 = vsel %vm175, %v3542, 0
      %v3568 = vsel %vm175, %v3543, 0
      %v3571 = vsel %vm175, %v3544, 0
      %v3574 = vsel %vm175, %v3545, 0
      %v3577 = vsel %vm175, %v3546, 0
      %v3580 = vsel %vm175, %v3547, 0
      %v3583 = vsel %vm175, %v3548, 0
      %v3586 = vsel %vm175, %v3549, 0
      %v3589 = vsel %vm175, %v3550, 0
      %v3592 = vsel %vm175, %v3551, 0
      %v3595 = vsel %vm175, %v3552, 0
      %v3598 = vsel %vm175, %v3553, 0
      %v3601 = vsel %vm175, %v3554, 0
      %v3604 = vsel %vm175, %v3555, 0
      %v3607 = vsel %vm1897, %v3557, 0
      %3609 = vmatprep.subr.bf16.mxu0 0
      %3610 = vmatpush1.bf16.msra.mxu0 0
      %3611 = vmatprep.subr.bf16.mxu0 0
      %3612 = vmatpush1.bf16.msra.mxu0 0
      %3613 = vmatprep.subr.bf16.mxu0 0
      %3614 = vmatpush1.bf16.msra.mxu0 0
      %3615 = vmatprep.subr.bf16.mxu0 0
      %3616 = vmatpush1.bf16.msra.mxu0 0
      %3617 = vmatprep.subr.bf16.mxu0 0
      %3618 = vmatpush1.bf16.msra.mxu0 0
      %3619 = vmatprep.subr.bf16.mxu0 0
      %3620 = vmatpush1.bf16.msra.mxu0 0
      %3621 = vmatprep.subr.bf16.mxu0 0
      %3622 = vmatpush1.bf16.msra.mxu0 0
      %3623 = vmatprep.subr.bf16.mxu0 0
      %3624 = vmatpush1.bf16.msra.mxu0 %v3607
      %3625 = vmatprep.subr.bf16.mxu0 0
      %3626 = vmatpush2.bf16.msra.mxu0 0
      %3627 = vmatprep.subr.bf16.mxu0 0
      %3628 = vmatpush2.bf16.msra.mxu0 0
      %3629 = vmatprep.subr.bf16.mxu0 0
      %3630 = vmatpush2.bf16.msra.mxu0 0
      %3631 = vmatprep.subr.bf16.mxu0 0
      %3632 = vmatpush2.bf16.msra.mxu0 0
      %3633 = vmatprep.subr.bf16.mxu0 0
      %3634 = vmatpush2.bf16.msra.mxu0 0
      %3635 = vmatprep.subr.bf16.mxu0 0
      %3636 = vmatpush2.bf16.msra.mxu0 0
      %3637 = vmatprep.subr.bf16.mxu0 0
      %3638 = vmatpush2.bf16.msra.mxu0 0
      %3639 = vmatprep.subr.bf16.mxu0 0
      %3640 = vmatpush2.bf16.msra.mxu0 0
      %3641 = vmatprep.mubr.bf16.mxu0 0
      %3642 = vmatmul.mubr.bf16.gmra.mxu0 %v3559
      %v3643 = vpop.f32.mrf.mxu0
      %v3644 = vadd.f32 0.0, %v3643
      %v3645 = vpop.f32.mrf.mxu0
      %v3646 = vpop.f32.mrf.mxu0
      %v3647 = vadd.f32 0.0, %v3646
      %v3648 = vpop.f32.mrf.mxu0
      %3649 = vmatprep.mubr.bf16.mxu0 0
      %3650 = vmatmul.mubr.bf16.gmra.mxu0 %v3562
      %v3651 = vpop.f32.mrf.mxu0
      %v3652 = vadd.f32 0.0, %v3651
      %v3653 = vpop.f32.mrf.mxu0
      %v3654 = vpop.f32.mrf.mxu0
      %v3655 = vadd.f32 0.0, %v3654
      %v3656 = vpop.f32.mrf.mxu0
      %3657 = vmatprep.mubr.bf16.mxu0 0
      %3658 = vmatmul.mubr.bf16.gmra.mxu0 %v3565
      %v3659 = vpop.f32.mrf.mxu0
      %v3660 = vadd.f32 0.0, %v3659
      %v3661 = vpop.f32.mrf.mxu0
      %v3662 = vpop.f32.mrf.mxu0
      %v3663 = vadd.f32 0.0, %v3662
      %v3664 = vpop.f32.mrf.mxu0
      %3665 = vmatprep.mubr.bf16.mxu0 0
      %3666 = vmatmul.mubr.bf16.gmra.mxu0 %v3568
      %v3667 = vpop.f32.mrf.mxu0
      %v3668 = vadd.f32 0.0, %v3667
      %v3669 = vpop.f32.mrf.mxu0
      %v3670 = vpop.f32.mrf.mxu0
      %v3671 = vadd.f32 0.0, %v3670
      %v3672 = vpop.f32.mrf.mxu0
      %3673 = vmatprep.mubr.bf16.mxu0 0
      %3674 = vmatmul.mubr.bf16.gmra.mxu0 %v3571
      %v3675 = vpop.f32.mrf.mxu0
      %v3676 = vadd.f32 0.0, %v3675
      %v3677 = vpop.f32.mrf.mxu0
      %v3678 = vpop.f32.mrf.mxu0
      %v3679 = vadd.f32 0.0, %v3678
      %v3680 = vpop.f32.mrf.mxu0
      %3681 = vmatprep.mubr.bf16.mxu0 0
      %3682 = vmatmul.mubr.bf16.gmra.mxu0 %v3574
      %v3683 = vpop.f32.mrf.mxu0
      %v3684 = vadd.f32 0.0, %v3683
      %v3685 = vpop.f32.mrf.mxu0
      %v3686 = vpop.f32.mrf.mxu0
      %v3687 = vadd.f32 0.0, %v3686
      %v3688 = vpop.f32.mrf.mxu0
      %3689 = vmatprep.mubr.bf16.mxu0 0
      %3690 = vmatmul.mubr.bf16.gmra.mxu0 %v3577
      %v3691 = vpop.f32.mrf.mxu0
      %v3692 = vadd.f32 0.0, %v3691
      %v3693 = vpop.f32.mrf.mxu0
      %v3694 = vpop.f32.mrf.mxu0
      %v3695 = vadd.f32 0.0, %v3694
      %v3696 = vpop.f32.mrf.mxu0
      %3697 = vmatprep.mubr.bf16.mxu0 0
      %3698 = vmatmul.mubr.bf16.gmra.mxu0 %v3580
      %v3699 = vpop.f32.mrf.mxu0
      %v3700 = vadd.f32 0.0, %v3699
      %v3701 = vpop.f32.mrf.mxu0
      %v3702 = vpop.f32.mrf.mxu0
      %v3703 = vadd.f32 0.0, %v3702
      %v3704 = vpop.f32.mrf.mxu0
      %3705 = vmatprep.mubr.bf16.mxu0 0
      %3706 = vmatmul.mubr.bf16.gmra.mxu0 %v3583
      %v3707 = vpop.f32.mrf.mxu0
      %v3708 = vadd.f32 0.0, %v3707
      %v3709 = vpop.f32.mrf.mxu0
      %v3710 = vpop.f32.mrf.mxu0
      %v3711 = vadd.f32 0.0, %v3710
      %v3712 = vpop.f32.mrf.mxu0
      %3713 = vmatprep.mubr.bf16.mxu0 0
      %3714 = vmatmul.mubr.bf16.gmra.mxu0 %v3586
      %v3715 = vpop.f32.mrf.mxu0
      %v3716 = vadd.f32 0.0, %v3715
      %v3717 = vpop.f32.mrf.mxu0
      %v3718 = vpop.f32.mrf.mxu0
      %v3719 = vadd.f32 0.0, %v3718
      %v3720 = vpop.f32.mrf.mxu0
      %3721 = vmatprep.mubr.bf16.mxu0 0
      %3722 = vmatmul.mubr.bf16.gmra.mxu0 %v3589
      %v3723 = vpop.f32.mrf.mxu0
      %v3724 = vadd.f32 0.0, %v3723
      %v3725 = vpop.f32.mrf.mxu0
      %v3726 = vpop.f32.mrf.mxu0
      %v3727 = vadd.f32 0.0, %v3726
      %v3728 = vpop.f32.mrf.mxu0
      %3729 = vmatprep.mubr.bf16.mxu0 0
      %3730 = vmatmul.mubr.bf16.gmra.mxu0 %v3592
      %v3731 = vpop.f32.mrf.mxu0
      %v3732 = vadd.f32 0.0, %v3731
      %v3733 = vpop.f32.mrf.mxu0
      %v3734 = vpop.f32.mrf.mxu0
      %v3735 = vadd.f32 0.0, %v3734
      %v3736 = vpop.f32.mrf.mxu0
      %3737 = vmatprep.mubr.bf16.mxu0 0
      %3738 = vmatmul.mubr.bf16.gmra.mxu0 %v3595
      %v3739 = vpop.f32.mrf.mxu0
      %v3740 = vadd.f32 0.0, %v3739
      %v3741 = vpop.f32.mrf.mxu0
      %v3742 = vpop.f32.mrf.mxu0
      %v3743 = vadd.f32 0.0, %v3742
      %v3744 = vpop.f32.mrf.mxu0
      %3745 = vmatprep.mubr.bf16.mxu0 0
      %3746 = vmatmul.mubr.bf16.gmra.mxu0 %v3598
      %v3747 = vpop.f32.mrf.mxu0
      %v3748 = vadd.f32 0.0, %v3747
      %v3749 = vpop.f32.mrf.mxu0
      %v3750 = vpop.f32.mrf.mxu0
      %v3751 = vadd.f32 0.0, %v3750
      %v3752 = vpop.f32.mrf.mxu0
      %3753 = vmatprep.mubr.bf16.mxu0 0
      %3754 = vmatmul.mubr.bf16.gmra.mxu0 %v3601
      %v3755 = vpop.f32.mrf.mxu0
      %v3756 = vadd.f32 0.0, %v3755
      %v3757 = vpop.f32.mrf.mxu0
      %v3758 = vpop.f32.mrf.mxu0
      %v3759 = vadd.f32 0.0, %v3758
      %v3760 = vpop.f32.mrf.mxu0
      %3761 = vmatprep.mubr.bf16.mxu0 0
      %3762 = vmatmul.mubr.bf16.gmra.mxu0 %v3604
      %v3763 = vpop.f32.mrf.mxu0
      %v3764 = vadd.f32 0.0, %v3763
      %v3765 = vpop.f32.mrf.mxu0
      %v3766 = vpop.f32.mrf.mxu0
      %v3767 = vadd.f32 0.0, %v3766
      %v3768 = vpop.f32.mrf.mxu0
      %3769 = vdwg.mxu0
      %v3770 = vadd.f32 %v3444, %v3644
      %v3771 = vadd.f32 %v3445, %v3647
      %v3772 = vadd.f32 %v3446, %v3652
      %v3773 = vadd.f32 %v3447, %v3655
      %v3774 = vadd.f32 %v3448, %v3660
      %v3775 = vadd.f32 %v3449, %v3663
      %v3776 = vadd.f32 %v3450, %v3668
      %v3777 = vadd.f32 %v3451, %v3671
      %v3778 = vadd.f32 %v3452, %v3676
      %v3779 = vadd.f32 %v3453, %v3679
      %v3780 = vadd.f32 %v3454, %v3684
      %v3781 = vadd.f32 %v3455, %v3687
      %v3782 = vadd.f32 %v3456, %v3692
      %v3783 = vadd.f32 %v3457, %v3695
      %v3784 = vadd.f32 %v3458, %v3700
      %v3785 = vadd.f32 %v3459, %v3703
      %v3786 = vadd.f32 %v3460, %v3708
      %v3787 = vadd.f32 %v3461, %v3711
      %v3788 = vadd.f32 %v3462, %v3716
      %v3789 = vadd.f32 %v3463, %v3719
      %v3790 = vadd.f32 %v3464, %v3724
      %v3791 = vadd.f32 %v3465, %v3727
      %v3792 = vadd.f32 %v3466, %v3732
      %v3793 = vadd.f32 %v3467, %v3735
      %v3794 = vadd.f32 %v3468, %v3740
      %v3795 = vadd.f32 %v3469, %v3743
      %v3796 = vadd.f32 %v3470, %v3748
      %v3797 = vadd.f32 %v3471, %v3751
      %v3798 = vadd.f32 %v3472, %v3756
      %v3799 = vadd.f32 %v3473, %v3759
      %v3800 = vadd.f32 %v3474, %v3764
      %v3801 = vadd.f32 %v3475, %v3767
      %3802 = vrot.lane.b32.xlu0 %v182, 3
      %v3803 = vpop.permute.xlu0 %3802
      %3804 = vrot.lane.b32.xlu0 %v183, 3
      %v3805 = vpop.permute.xlu0 %3804
      %3806 = vrot.lane.b32.xlu0 %v184, 3
      %v3807 = vpop.permute.xlu0 %3806
      %3808 = vrot.lane.b32.xlu0 %v185, 3
      %v3809 = vpop.permute.xlu0 %3808
      %3810 = vrot.lane.b32.xlu0 %v186, 3
      %v3811 = vpop.permute.xlu0 %3810
      %3812 = vrot.lane.b32.xlu0 %v187, 3
      %v3813 = vpop.permute.xlu0 %3812
      %3814 = vrot.lane.b32.xlu0 %v188, 3
      %v3815 = vpop.permute.xlu0 %3814
      %3816 = vrot.lane.b32.xlu0 %v189, 3
      %v3817 = vpop.permute.xlu0 %3816
      %3818 = vrot.lane.b32.xlu0 %v190, 3
      %v3819 = vpop.permute.xlu0 %3818
      %3820 = vrot.lane.b32.xlu0 %v191, 3
      %v3821 = vpop.permute.xlu0 %3820
      %3822 = vrot.lane.b32.xlu0 %v192, 3
      %v3823 = vpop.permute.xlu0 %3822
      %3824 = vrot.lane.b32.xlu0 %v193, 3
      %v3825 = vpop.permute.xlu0 %3824
      %3826 = vrot.lane.b32.xlu0 %v194, 3
      %v3827 = vpop.permute.xlu0 %3826
      %3828 = vrot.lane.b32.xlu0 %v195, 3
      %v3829 = vpop.permute.xlu0 %3828
      %3830 = vrot.lane.b32.xlu0 %v196, 3
      %v3831 = vpop.permute.xlu0 %3830
      %3832 = vrot.lane.b32.xlu0 %v197, 3
      %v3833 = vpop.permute.xlu0 %3832
      %3834 = vrot.lane.b32.xlu0 %v198, 3
      %v3835 = vpop.permute.xlu0 %3834
      %3836 = vrot.lane.b32.xlu0 %v199, 3
      %v3837 = vpop.permute.xlu0 %3836
      %3838 = vrot.lane.b32.xlu0 %v200, 3
      %v3839 = vpop.permute.xlu0 %3838
      %3840 = vrot.lane.b32.xlu0 %v201, 3
      %v3841 = vpop.permute.xlu0 %3840
      %3842 = vrot.lane.b32.xlu0 %v202, 3
      %v3843 = vpop.permute.xlu0 %3842
      %3844 = vrot.lane.b32.xlu0 %v203, 3
      %v3845 = vpop.permute.xlu0 %3844
      %3846 = vrot.lane.b32.xlu0 %v204, 3
      %v3847 = vpop.permute.xlu0 %3846
      %3848 = vrot.lane.b32.xlu0 %v205, 3
      %v3849 = vpop.permute.xlu0 %3848
      %3850 = vrot.lane.b32.xlu0 %v206, 3
      %v3851 = vpop.permute.xlu0 %3850
      %3852 = vrot.lane.b32.xlu0 %v207, 3
      %v3853 = vpop.permute.xlu0 %3852
      %3854 = vrot.lane.b32.xlu0 %v208, 3
      %v3855 = vpop.permute.xlu0 %3854
      %3856 = vrot.lane.b32.xlu0 %v209, 3
      %v3857 = vpop.permute.xlu0 %3856
      %3858 = vrot.lane.b32.xlu0 %v210, 3
      %v3859 = vpop.permute.xlu0 %3858
      %3860 = vrot.lane.b32.xlu0 %v211, 3
      %v3861 = vpop.permute.xlu0 %3860
      %3862 = vrot.lane.b32.xlu0 %v212, 3
      %v3863 = vpop.permute.xlu0 %3862
      %3864 = vrot.lane.b32.xlu0 %v213, 3
      %v3865 = vpop.permute.xlu0 %3864
      %v3898 = vmul.f32 %v182, %v3803
      %v3899 = vmul.f32 %v183, %v3805
      %v3900 = vmul.f32 %v184, %v3807
      %v3901 = vmul.f32 %v185, %v3809
      %v3902 = vmul.f32 %v186, %v3811
      %v3903 = vmul.f32 %v187, %v3813
      %v3904 = vmul.f32 %v188, %v3815
      %v3905 = vmul.f32 %v189, %v3817
      %v3906 = vmul.f32 %v190, %v3819
      %v3907 = vmul.f32 %v191, %v3821
      %v3908 = vmul.f32 %v192, %v3823
      %v3909 = vmul.f32 %v193, %v3825
      %v3910 = vmul.f32 %v194, %v3827
      %v3911 = vmul.f32 %v195, %v3829
      %v3912 = vmul.f32 %v196, %v3831
      %v3913 = vmul.f32 %v197, %v3833
      %v3914 = vmul.f32 %v198, %v3835
      %v3915 = vmul.f32 %v199, %v3837
      %v3916 = vmul.f32 %v200, %v3839
      %v3917 = vmul.f32 %v201, %v3841
      %v3918 = vmul.f32 %v202, %v3843
      %v3919 = vmul.f32 %v203, %v3845
      %v3920 = vmul.f32 %v204, %v3847
      %v3921 = vmul.f32 %v205, %v3849
      %v3922 = vmul.f32 %v206, %v3851
      %v3923 = vmul.f32 %v207, %v3853
      %v3924 = vmul.f32 %v208, %v3855
      %v3925 = vmul.f32 %v209, %v3857
      %v3926 = vmul.f32 %v210, %v3859
      %v3927 = vmul.f32 %v211, %v3861
      %v3928 = vmul.f32 %v212, %v3863
      %v3929 = vmul.f32 %v213, %v3865
      %v3930 = vld [vmem:[#allocation2 + $0x27] sm:$0xff]
      %v3931 = vld [vmem:[#allocation2 + $0x2f] sm:$0xff]
      %v3932 = vld [vmem:[#allocation2 + $0x37] sm:$0xff]
      %v3933 = vld [vmem:[#allocation2 + $0x3f] sm:$0xff]
      %v3934 = vld [vmem:[#allocation2 + $0x47] sm:$0xff]
      %v3935 = vld [vmem:[#allocation2 + $0x4f] sm:$0xff]
      %v3936 = vld [vmem:[#allocation2 + $0x57] sm:$0xff]
      %v3937 = vld [vmem:[#allocation2 + $0x5f] sm:$0xff]
      %v3938 = vld [vmem:[#allocation2 + $0x67] sm:$0xff]
      %v3939 = vld [vmem:[#allocation2 + $0x6f] sm:$0xff]
      %v3940 = vld [vmem:[#allocation2 + $0x77] sm:$0xff]
      %v3941 = vld [vmem:[#allocation2 + $0x7f] sm:$0xff]
      %v3942 = vld [vmem:[#allocation2 + $0x87] sm:$0xff]
      %v3943 = vld [vmem:[#allocation2 + $0x8f] sm:$0xff]
      %v3944 = vld [vmem:[#allocation2 + $0x97] sm:$0xff]
      %v3945 = vld [vmem:[#allocation2 + $0x9f] sm:$0xff]
      %v3946 = vld [vmem:[#allocation2 + $0xa7] sm:$0xff]
      %v3947 = vld [vmem:[#allocation2 + $0xaf] sm:$0xff]
      %v3948 = vld [vmem:[#allocation2 + $0xb7] sm:$0xff]
      %v3949 = vld [vmem:[#allocation2 + $0xbf] sm:$0xff]
      %v3950 = vld [vmem:[#allocation2 + $0xc7] sm:$0xff]
      %v3951 = vld [vmem:[#allocation2 + $0xcf] sm:$0xff]
      %v3952 = vld [vmem:[#allocation2 + $0xd7] sm:$0xff]
      %v3953 = vld [vmem:[#allocation2 + $0xdf] sm:$0xff]
      %v3954 = vld [vmem:[#allocation2 + $0xe7] sm:$0xff]
      %v3955 = vld [vmem:[#allocation2 + $0xef] sm:$0xff]
      %v3956 = vld [vmem:[#allocation2 + $0xf7] sm:$0xff]
      %v3957 = vld [vmem:[#allocation2 + $0xff] sm:$0xff]
      %v3958 = vld [vmem:[#allocation2 + $0x107] sm:$0xff]
      %v3959 = vld [vmem:[#allocation2 + $0x10f] sm:$0xff]
      %v3960 = vld [vmem:[#allocation2 + $0x117] sm:$0xff]
      %v3961 = vld [vmem:[#allocation2 + $0x11f] sm:$0xff]
      %3963 = vset.pattern.permute.xlu0 3
      %3964 = vperm.xlu0 %3963, %v3898
      %v3965 = vpop.permute.xlu0 %3964
      %3968 = vset.pattern.permute.xlu0 3
      %3969 = vperm.xlu0 %3968, %v3899
      %v3970 = vpop.permute.xlu0 %3969
      %3973 = vset.pattern.permute.xlu0 3
      %3974 = vperm.xlu0 %3973, %v3900
      %v3975 = vpop.permute.xlu0 %3974
      %3978 = vset.pattern.permute.xlu0 3
      %3979 = vperm.xlu0 %3978, %v3901
      %v3980 = vpop.permute.xlu0 %3979
      %3983 = vset.pattern.permute.xlu0 3
      %3984 = vperm.xlu0 %3983, %v3902
      %v3985 = vpop.permute.xlu0 %3984
      %3988 = vset.pattern.permute.xlu0 3
      %3989 = vperm.xlu0 %3988, %v3903
      %v3990 = vpop.permute.xlu0 %3989
      %3993 = vset.pattern.permute.xlu0 3
      %3994 = vperm.xlu0 %3993, %v3904
      %v3995 = vpop.permute.xlu0 %3994
      %3998 = vset.pattern.permute.xlu0 3
      %3999 = vperm.xlu0 %3998, %v3905
      %v4000 = vpop.permute.xlu0 %3999
      %4003 = vset.pattern.permute.xlu0 3
      %4004 = vperm.xlu0 %4003, %v3906
      %v4005 = vpop.permute.xlu0 %4004
      %4008 = vset.pattern.permute.xlu0 3
      %4009 = vperm.xlu0 %4008, %v3907
      %v4010 = vpop.permute.xlu0 %4009
      %4013 = vset.pattern.permute.xlu0 3
      %4014 = vperm.xlu0 %4013, %v3908
      %v4015 = vpop.permute.xlu0 %4014
      %4018 = vset.pattern.permute.xlu0 3
      %4019 = vperm.xlu0 %4018, %v3909
      %v4020 = vpop.permute.xlu0 %4019
      %4023 = vset.pattern.permute.xlu0 3
      %4024 = vperm.xlu0 %4023, %v3910
      %v4025 = vpop.permute.xlu0 %4024
      %4028 = vset.pattern.permute.xlu0 3
      %4029 = vperm.xlu0 %4028, %v3911
      %v4030 = vpop.permute.xlu0 %4029
      %4033 = vset.pattern.permute.xlu0 3
      %4034 = vperm.xlu0 %4033, %v3912
      %v4035 = vpop.permute.xlu0 %4034
      %4038 = vset.pattern.permute.xlu0 3
      %4039 = vperm.xlu0 %4038, %v3913
      %v4040 = vpop.permute.xlu0 %4039
      %4043 = vset.pattern.permute.xlu0 3
      %4044 = vperm.xlu0 %4043, %v3914
      %v4045 = vpop.permute.xlu0 %4044
      %4048 = vset.pattern.permute.xlu0 3
      %4049 = vperm.xlu0 %4048, %v3915
      %v4050 = vpop.permute.xlu0 %4049
      %4053 = vset.pattern.permute.xlu0 3
      %4054 = vperm.xlu0 %4053, %v3916
      %v4055 = vpop.permute.xlu0 %4054
      %4058 = vset.pattern.permute.xlu0 3
      %4059 = vperm.xlu0 %4058, %v3917
      %v4060 = vpop.permute.xlu0 %4059
      %4063 = vset.pattern.permute.xlu0 3
      %4064 = vperm.xlu0 %4063, %v3918
      %v4065 = vpop.permute.xlu0 %4064
      %4068 = vset.pattern.permute.xlu0 3
      %4069 = vperm.xlu0 %4068, %v3919
      %v4070 = vpop.permute.xlu0 %4069
      %4073 = vset.pattern.permute.xlu0 3
      %4074 = vperm.xlu0 %4073, %v3920
      %v4075 = vpop.permute.xlu0 %4074
      %4078 = vset.pattern.permute.xlu0 3
      %4079 = vperm.xlu0 %4078, %v3921
      %v4080 = vpop.permute.xlu0 %4079
      %4083 = vset.pattern.permute.xlu0 3
      %4084 = vperm.xlu0 %4083, %v3922
      %v4085 = vpop.permute.xlu0 %4084
      %4088 = vset.pattern.permute.xlu0 3
      %4089 = vperm.xlu0 %4088, %v3923
      %v4090 = vpop.permute.xlu0 %4089
      %4093 = vset.pattern.permute.xlu0 3
      %4094 = vperm.xlu0 %4093, %v3924
      %v4095 = vpop.permute.xlu0 %4094
      %4098 = vset.pattern.permute.xlu0 3
      %4099 = vperm.xlu0 %4098, %v3925
      %v4100 = vpop.permute.xlu0 %4099
      %4103 = vset.pattern.permute.xlu0 3
      %4104 = vperm.xlu0 %4103, %v3926
      %v4105 = vpop.permute.xlu0 %4104
      %4108 = vset.pattern.permute.xlu0 3
      %4109 = vperm.xlu0 %4108, %v3927
      %v4110 = vpop.permute.xlu0 %4109
      %4113 = vset.pattern.permute.xlu0 3
      %4114 = vperm.xlu0 %4113, %v3928
      %v4115 = vpop.permute.xlu0 %4114
      %4118 = vset.pattern.permute.xlu0 3
      %4119 = vperm.xlu0 %4118, %v3929
      %v4120 = vpop.permute.xlu0 %4119
      %v4122 = vmul.f32 %v3930, %v3965
      %v4123 = vmul.f32 %v3931, %v3970
      %v4124 = vmul.f32 %v3932, %v3975
      %v4125 = vmul.f32 %v3933, %v3980
      %v4126 = vmul.f32 %v3934, %v3985
      %v4127 = vmul.f32 %v3935, %v3990
      %v4128 = vmul.f32 %v3936, %v3995
      %v4129 = vmul.f32 %v3937, %v4000
      %v4130 = vmul.f32 %v3938, %v4005
      %v4131 = vmul.f32 %v3939, %v4010
      %v4132 = vmul.f32 %v3940, %v4015
      %v4133 = vmul.f32 %v3941, %v4020
      %v4134 = vmul.f32 %v3942, %v4025
      %v4135 = vmul.f32 %v3943, %v4030
      %v4136 = vmul.f32 %v3944, %v4035
      %v4137 = vmul.f32 %v3945, %v4040
      %v4138 = vmul.f32 %v3946, %v4045
      %v4139 = vmul.f32 %v3947, %v4050
      %v4140 = vmul.f32 %v3948, %v4055
      %v4141 = vmul.f32 %v3949, %v4060
      %v4142 = vmul.f32 %v3950, %v4065
      %v4143 = vmul.f32 %v3951, %v4070
      %v4144 = vmul.f32 %v3952, %v4075
      %v4145 = vmul.f32 %v3953, %v4080
      %v4146 = vmul.f32 %v3954, %v4085
      %v4147 = vmul.f32 %v3955, %v4090
      %v4148 = vmul.f32 %v3956, %v4095
      %v4149 = vmul.f32 %v3957, %v4100
      %v4150 = vmul.f32 %v3958, %v4105
      %v4151 = vmul.f32 %v3959, %v4110
      %v4152 = vmul.f32 %v3960, %v4115
      %v4153 = vmul.f32 %v3961, %v4120
      %v4154 = vpack.c.bf16 %v4123, %v4122
      %v4155 = vpack.c.bf16 %v4125, %v4124
      %v4156 = vpack.c.bf16 %v4127, %v4126
      %v4157 = vpack.c.bf16 %v4129, %v4128
      %v4158 = vpack.c.bf16 %v4131, %v4130
      %v4159 = vpack.c.bf16 %v4133, %v4132
      %v4160 = vpack.c.bf16 %v4135, %v4134
      %v4161 = vpack.c.bf16 %v4137, %v4136
      %v4162 = vpack.c.bf16 %v4139, %v4138
      %v4163 = vpack.c.bf16 %v4141, %v4140
      %v4164 = vpack.c.bf16 %v4143, %v4142
      %v4165 = vpack.c.bf16 %v4145, %v4144
      %v4166 = vpack.c.bf16 %v4147, %v4146
      %v4167 = vpack.c.bf16 %v4149, %v4148
      %v4168 = vpack.c.bf16 %v4151, %v4150
      %v4169 = vpack.c.bf16 %v4153, %v4152
      %s4170 = scalar_lea.vmem %s1, 12
      %v4171 = vld [vmem:[%s4170] sm:$0x3]
      %v4173 = vsel %vm175, %v4154, 0
      %v4176 = vsel %vm175, %v4155, 0
      %v4179 = vsel %vm175, %v4156, 0
      %v4182 = vsel %vm175, %v4157, 0
      %v4185 = vsel %vm175, %v4158, 0
      %v4188 = vsel %vm175, %v4159, 0
      %v4191 = vsel %vm175, %v4160, 0
      %v4194 = vsel %vm175, %v4161, 0
      %v4197 = vsel %vm175, %v4162, 0
      %v4200 = vsel %vm175, %v4163, 0
      %v4203 = vsel %vm175, %v4164, 0
      %v4206 = vsel %vm175, %v4165, 0
      %v4209 = vsel %vm175, %v4166, 0
      %v4212 = vsel %vm175, %v4167, 0
      %v4215 = vsel %vm175, %v4168, 0
      %v4218 = vsel %vm175, %v4169, 0
      %v4221 = vsel %vm1897, %v4171, 0
      %4223 = vmatprep.subr.bf16.mxu0 0
      %4224 = vmatpush1.bf16.msra.mxu0 0
      %4225 = vmatprep.subr.bf16.mxu0 0
      %4226 = vmatpush1.bf16.msra.mxu0 0
      %4227 = vmatprep.subr.bf16.mxu0 0
      %4228 = vmatpush1.bf16.msra.mxu0 0
      %4229 = vmatprep.subr.bf16.mxu0 0
      %4230 = vmatpush1.bf16.msra.mxu0 0
      %4231 = vmatprep.subr.bf16.mxu0 0
      %4232 = vmatpush1.bf16.msra.mxu0 0
      %4233 = vmatprep.subr.bf16.mxu0 0
      %4234 = vmatpush1.bf16.msra.mxu0 0
      %4235 = vmatprep.subr.bf16.mxu0 0
      %4236 = vmatpush1.bf16.msra.mxu0 0
      %4237 = vmatprep.subr.bf16.mxu0 0
      %4238 = vmatpush1.bf16.msra.mxu0 %v4221
      %4239 = vmatprep.subr.bf16.mxu0 0
      %4240 = vmatpush2.bf16.msra.mxu0 0
      %4241 = vmatprep.subr.bf16.mxu0 0
      %4242 = vmatpush2.bf16.msra.mxu0 0
      %4243 = vmatprep.subr.bf16.mxu0 0
      %4244 = vmatpush2.bf16.msra.mxu0 0
      %4245 = vmatprep.subr.bf16.mxu0 0
      %4246 = vmatpush2.bf16.msra.mxu0 0
      %4247 = vmatprep.subr.bf16.mxu0 0
      %4248 = vmatpush2.bf16.msra.mxu0 0
      %4249 = vmatprep.subr.bf16.mxu0 0
      %4250 = vmatpush2.bf16.msra.mxu0 0
      %4251 = vmatprep.subr.bf16.mxu0 0
      %4252 = vmatpush2.bf16.msra.mxu0 0
      %4253 = vmatprep.subr.bf16.mxu0 0
      %4254 = vmatpush2.bf16.msra.mxu0 0
      %4255 = vmatprep.mubr.bf16.mxu0 0
      %4256 = vmatmul.mubr.bf16.gmra.mxu0 %v4173
      %v4257 = vpop.f32.mrf.mxu0
      %v4258 = vadd.f32 0.0, %v4257
      %v4259 = vpop.f32.mrf.mxu0
      %v4260 = vpop.f32.mrf.mxu0
      %v4261 = vadd.f32 0.0, %v4260
      %v4262 = vpop.f32.mrf.mxu0
      %4263 = vmatprep.mubr.bf16.mxu0 0
      %4264 = vmatmul.mubr.bf16.gmra.mxu0 %v4176
      %v4265 = vpop.f32.mrf.mxu0
      %v4266 = vadd.f32 0.0, %v4265
      %v4267 = vpop.f32.mrf.mxu0
      %v4268 = vpop.f32.mrf.mxu0
      %v4269 = vadd.f32 0.0, %v4268
      %v4270 = vpop.f32.mrf.mxu0
      %4271 = vmatprep.mubr.bf16.mxu0 0
      %4272 = vmatmul.mubr.bf16.gmra.mxu0 %v4179
      %v4273 = vpop.f32.mrf.mxu0
      %v4274 = vadd.f32 0.0, %v4273
      %v4275 = vpop.f32.mrf.mxu0
      %v4276 = vpop.f32.mrf.mxu0
      %v4277 = vadd.f32 0.0, %v4276
      %v4278 = vpop.f32.mrf.mxu0
      %4279 = vmatprep.mubr.bf16.mxu0 0
      %4280 = vmatmul.mubr.bf16.gmra.mxu0 %v4182
      %v4281 = vpop.f32.mrf.mxu0
      %v4282 = vadd.f32 0.0, %v4281
      %v4283 = vpop.f32.mrf.mxu0
      %v4284 = vpop.f32.mrf.mxu0
      %v4285 = vadd.f32 0.0, %v4284
      %v4286 = vpop.f32.mrf.mxu0
      %4287 = vmatprep.mubr.bf16.mxu0 0
      %4288 = vmatmul.mubr.bf16.gmra.mxu0 %v4185
      %v4289 = vpop.f32.mrf.mxu0
      %v4290 = vadd.f32 0.0, %v4289
      %v4291 = vpop.f32.mrf.mxu0
      %v4292 = vpop.f32.mrf.mxu0
      %v4293 = vadd.f32 0.0, %v4292
      %v4294 = vpop.f32.mrf.mxu0
      %4295 = vmatprep.mubr.bf16.mxu0 0
      %4296 = vmatmul.mubr.bf16.gmra.mxu0 %v4188
      %v4297 = vpop.f32.mrf.mxu0
      %v4298 = vadd.f32 0.0, %v4297
      %v4299 = vpop.f32.mrf.mxu0
      %v4300 = vpop.f32.mrf.mxu0
      %v4301 = vadd.f32 0.0, %v4300
      %v4302 = vpop.f32.mrf.mxu0
      %4303 = vmatprep.mubr.bf16.mxu0 0
      %4304 = vmatmul.mubr.bf16.gmra.mxu0 %v4191
      %v4305 = vpop.f32.mrf.mxu0
      %v4306 = vadd.f32 0.0, %v4305
      %v4307 = vpop.f32.mrf.mxu0
      %v4308 = vpop.f32.mrf.mxu0
      %v4309 = vadd.f32 0.0, %v4308
      %v4310 = vpop.f32.mrf.mxu0
      %4311 = vmatprep.mubr.bf16.mxu0 0
      %4312 = vmatmul.mubr.bf16.gmra.mxu0 %v4194
      %v4313 = vpop.f32.mrf.mxu0
      %v4314 = vadd.f32 0.0, %v4313
      %v4315 = vpop.f32.mrf.mxu0
      %v4316 = vpop.f32.mrf.mxu0
      %v4317 = vadd.f32 0.0, %v4316
      %v4318 = vpop.f32.mrf.mxu0
      %4319 = vmatprep.mubr.bf16.mxu0 0
      %4320 = vmatmul.mubr.bf16.gmra.mxu0 %v4197
      %v4321 = vpop.f32.mrf.mxu0
      %v4322 = vadd.f32 0.0, %v4321
      %v4323 = vpop.f32.mrf.mxu0
      %v4324 = vpop.f32.mrf.mxu0
      %v4325 = vadd.f32 0.0, %v4324
      %v4326 = vpop.f32.mrf.mxu0
      %4327 = vmatprep.mubr.bf16.mxu0 0
      %4328 = vmatmul.mubr.bf16.gmra.mxu0 %v4200
      %v4329 = vpop.f32.mrf.mxu0
      %v4330 = vadd.f32 0.0, %v4329
      %v4331 = vpop.f32.mrf.mxu0
      %v4332 = vpop.f32.mrf.mxu0
      %v4333 = vadd.f32 0.0, %v4332
      %v4334 = vpop.f32.mrf.mxu0
      %4335 = vmatprep.mubr.bf16.mxu0 0
      %4336 = vmatmul.mubr.bf16.gmra.mxu0 %v4203
      %v4337 = vpop.f32.mrf.mxu0
      %v4338 = vadd.f32 0.0, %v4337
      %v4339 = vpop.f32.mrf.mxu0
      %v4340 = vpop.f32.mrf.mxu0
      %v4341 = vadd.f32 0.0, %v4340
      %v4342 = vpop.f32.mrf.mxu0
      %4343 = vmatprep.mubr.bf16.mxu0 0
      %4344 = vmatmul.mubr.bf16.gmra.mxu0 %v4206
      %v4345 = vpop.f32.mrf.mxu0
      %v4346 = vadd.f32 0.0, %v4345
      %v4347 = vpop.f32.mrf.mxu0
      %v4348 = vpop.f32.mrf.mxu0
      %v4349 = vadd.f32 0.0, %v4348
      %v4350 = vpop.f32.mrf.mxu0
      %4351 = vmatprep.mubr.bf16.mxu0 0
      %4352 = vmatmul.mubr.bf16.gmra.mxu0 %v4209
      %v4353 = vpop.f32.mrf.mxu0
      %v4354 = vadd.f32 0.0, %v4353
      %v4355 = vpop.f32.mrf.mxu0
      %v4356 = vpop.f32.mrf.mxu0
      %v4357 = vadd.f32 0.0, %v4356
      %v4358 = vpop.f32.mrf.mxu0
      %4359 = vmatprep.mubr.bf16.mxu0 0
      %4360 = vmatmul.mubr.bf16.gmra.mxu0 %v4212
      %v4361 = vpop.f32.mrf.mxu0
      %v4362 = vadd.f32 0.0, %v4361
      %v4363 = vpop.f32.mrf.mxu0
      %v4364 = vpop.f32.mrf.mxu0
      %v4365 = vadd.f32 0.0, %v4364
      %v4366 = vpop.f32.mrf.mxu0
      %4367 = vmatprep.mubr.bf16.mxu0 0
      %4368 = vmatmul.mubr.bf16.gmra.mxu0 %v4215
      %v4369 = vpop.f32.mrf.mxu0
      %v4370 = vadd.f32 0.0, %v4369
      %v4371 = vpop.f32.mrf.mxu0
      %v4372 = vpop.f32.mrf.mxu0
      %v4373 = vadd.f32 0.0, %v4372
      %v4374 = vpop.f32.mrf.mxu0
      %4375 = vmatprep.mubr.bf16.mxu0 0
      %4376 = vmatmul.mubr.bf16.gmra.mxu0 %v4218
      %v4377 = vpop.f32.mrf.mxu0
      %v4378 = vadd.f32 0.0, %v4377
      %v4379 = vpop.f32.mrf.mxu0
      %v4380 = vpop.f32.mrf.mxu0
      %v4381 = vadd.f32 0.0, %v4380
      %v4382 = vpop.f32.mrf.mxu0
      %4383 = vdwg.mxu0
      %v4384 = vadd.f32 %v3770, %v4258
      %v4385 = vadd.f32 %v3771, %v4261
      %v4386 = vadd.f32 %v3772, %v4266
      %v4387 = vadd.f32 %v3773, %v4269
      %v4388 = vadd.f32 %v3774, %v4274
      %v4389 = vadd.f32 %v3775, %v4277
      %v4390 = vadd.f32 %v3776, %v4282
      %v4391 = vadd.f32 %v3777, %v4285
      %v4392 = vadd.f32 %v3778, %v4290
      %v4393 = vadd.f32 %v3779, %v4293
      %v4394 = vadd.f32 %v3780, %v4298
      %v4395 = vadd.f32 %v3781, %v4301
      %v4396 = vadd.f32 %v3782, %v4306
      %v4397 = vadd.f32 %v3783, %v4309
      %v4398 = vadd.f32 %v3784, %v4314
      %v4399 = vadd.f32 %v3785, %v4317
      %v4400 = vadd.f32 %v3786, %v4322
      %v4401 = vadd.f32 %v3787, %v4325
      %v4402 = vadd.f32 %v3788, %v4330
      %v4403 = vadd.f32 %v3789, %v4333
      %v4404 = vadd.f32 %v3790, %v4338
      %v4405 = vadd.f32 %v3791, %v4341
      %v4406 = vadd.f32 %v3792, %v4346
      %v4407 = vadd.f32 %v3793, %v4349
      %v4408 = vadd.f32 %v3794, %v4354
      %v4409 = vadd.f32 %v3795, %v4357
      %v4410 = vadd.f32 %v3796, %v4362
      %v4411 = vadd.f32 %v3797, %v4365
      %v4412 = vadd.f32 %v3798, %v4370
      %v4413 = vadd.f32 %v3799, %v4373
      %v4414 = vadd.f32 %v3800, %v4378
      %v4415 = vadd.f32 %v3801, %v4381
      %v4416 = vld [vmem:[#allocation2 + $0x28] sm:$0xff]
      %v4417 = vld [vmem:[#allocation2 + $0x30] sm:$0xff]
      %v4418 = vld [vmem:[#allocation2 + $0x38] sm:$0xff]
      %v4419 = vld [vmem:[#allocation2 + $0x40] sm:$0xff]
      %v4420 = vld [vmem:[#allocation2 + $0x48] sm:$0xff]
      %v4421 = vld [vmem:[#allocation2 + $0x50] sm:$0xff]
      %v4422 = vld [vmem:[#allocation2 + $0x58] sm:$0xff]
      %v4423 = vld [vmem:[#allocation2 + $0x60] sm:$0xff]
      %v4424 = vld [vmem:[#allocation2 + $0x68] sm:$0xff]
      %v4425 = vld [vmem:[#allocation2 + $0x70] sm:$0xff]
      %v4426 = vld [vmem:[#allocation2 + $0x78] sm:$0xff]
      %v4427 = vld [vmem:[#allocation2 + $0x80] sm:$0xff]
      %v4428 = vld [vmem:[#allocation2 + $0x88] sm:$0xff]
      %v4429 = vld [vmem:[#allocation2 + $0x90] sm:$0xff]
      %v4430 = vld [vmem:[#allocation2 + $0x98] sm:$0xff]
      %v4431 = vld [vmem:[#allocation2 + $0xa0] sm:$0xff]
      %v4432 = vld [vmem:[#allocation2 + $0xa8] sm:$0xff]
      %v4433 = vld [vmem:[#allocation2 + $0xb0] sm:$0xff]
      %v4434 = vld [vmem:[#allocation2 + $0xb8] sm:$0xff]
      %v4435 = vld [vmem:[#allocation2 + $0xc0] sm:$0xff]
      %v4436 = vld [vmem:[#allocation2 + $0xc8] sm:$0xff]
      %v4437 = vld [vmem:[#allocation2 + $0xd0] sm:$0xff]
      %v4438 = vld [vmem:[#allocation2 + $0xd8] sm:$0xff]
      %v4439 = vld [vmem:[#allocation2 + $0xe0] sm:$0xff]
      %v4440 = vld [vmem:[#allocation2 + $0xe8] sm:$0xff]
      %v4441 = vld [vmem:[#allocation2 + $0xf0] sm:$0xff]
      %v4442 = vld [vmem:[#allocation2 + $0xf8] sm:$0xff]
      %v4443 = vld [vmem:[#allocation2 + $0x100] sm:$0xff]
      %v4444 = vld [vmem:[#allocation2 + $0x108] sm:$0xff]
      %v4445 = vld [vmem:[#allocation2 + $0x110] sm:$0xff]
      %v4446 = vld [vmem:[#allocation2 + $0x118] sm:$0xff]
      %v4447 = vld [vmem:[#allocation2 + $0x120] sm:$0xff]
      %v4448 = vmul.f32 %v4416, %v1112
      %v4449 = vmul.f32 %v4417, %v1116
      %v4450 = vmul.f32 %v4418, %v1120
      %v4451 = vmul.f32 %v4419, %v1124
      %v4452 = vmul.f32 %v4420, %v1128
      %v4453 = vmul.f32 %v4421, %v1132
      %v4454 = vmul.f32 %v4422, %v1136
      %v4455 = vmul.f32 %v4423, %v1140
      %v4456 = vmul.f32 %v4424, %v1144
      %v4457 = vmul.f32 %v4425, %v1148
      %v4458 = vmul.f32 %v4426, %v1152
      %v4459 = vmul.f32 %v4427, %v1156
      %v4460 = vmul.f32 %v4428, %v1160
      %v4461 = vmul.f32 %v4429, %v1164
      %v4462 = vmul.f32 %v4430, %v1168
      %v4463 = vmul.f32 %v4431, %v1172
      %v4464 = vmul.f32 %v4432, %v1176
      %v4465 = vmul.f32 %v4433, %v1180
      %v4466 = vmul.f32 %v4434, %v1184
      %v4467 = vmul.f32 %v4435, %v1188
      %v4468 = vmul.f32 %v4436, %v1192
      %v4469 = vmul.f32 %v4437, %v1196
      %v4470 = vmul.f32 %v4438, %v1200
      %v4471 = vmul.f32 %v4439, %v1204
      %v4472 = vmul.f32 %v4440, %v1208
      %v4473 = vmul.f32 %v4441, %v1212
      %v4474 = vmul.f32 %v4442, %v1216
      %v4475 = vmul.f32 %v4443, %v1220
      %v4476 = vmul.f32 %v4444, %v1224
      %v4477 = vmul.f32 %v4445, %v1228
      %v4478 = vmul.f32 %v4446, %v1232
      %v4479 = vmul.f32 %v4447, %v1236
      %v4480 = vpack.c.bf16 %v4449, %v4448
      %v4481 = vpack.c.bf16 %v4451, %v4450
      %v4482 = vpack.c.bf16 %v4453, %v4452
      %v4483 = vpack.c.bf16 %v4455, %v4454
      %v4484 = vpack.c.bf16 %v4457, %v4456
      %v4485 = vpack.c.bf16 %v4459, %v4458
      %v4486 = vpack.c.bf16 %v4461, %v4460
      %v4487 = vpack.c.bf16 %v4463, %v4462
      %v4488 = vpack.c.bf16 %v4465, %v4464
      %v4489 = vpack.c.bf16 %v4467, %v4466
      %v4490 = vpack.c.bf16 %v4469, %v4468
      %v4491 = vpack.c.bf16 %v4471, %v4470
      %v4492 = vpack.c.bf16 %v4473, %v4472
      %v4493 = vpack.c.bf16 %v4475, %v4474
      %v4494 = vpack.c.bf16 %v4477, %v4476
      %v4495 = vpack.c.bf16 %v4479, %v4478
      %s4496 = scalar_lea.vmem %s1, 14
      %v4497 = vld [vmem:[%s4496] sm:$0x3]
      %v4499 = vsel %vm175, %v4480, 0
      %v4502 = vsel %vm175, %v4481, 0
      %v4505 = vsel %vm175, %v4482, 0
      %v4508 = vsel %vm175, %v4483, 0
      %v4511 = vsel %vm175, %v4484, 0
      %v4514 = vsel %vm175, %v4485, 0
      %v4517 = vsel %vm175, %v4486, 0
      %v4520 = vsel %vm175, %v4487, 0
      %v4523 = vsel %vm175, %v4488, 0
      %v4526 = vsel %vm175, %v4489, 0
      %v4529 = vsel %vm175, %v4490, 0
      %v4532 = vsel %vm175, %v4491, 0
      %v4535 = vsel %vm175, %v4492, 0
      %v4538 = vsel %vm175, %v4493, 0
      %v4541 = vsel %vm175, %v4494, 0
      %v4544 = vsel %vm175, %v4495, 0
      %v4547 = vsel %vm1897, %v4497, 0
      %4549 = vmatprep.subr.bf16.mxu0 0
      %4550 = vmatpush1.bf16.msra.mxu0 0
      %4551 = vmatprep.subr.bf16.mxu0 0
      %4552 = vmatpush1.bf16.msra.mxu0 0
      %4553 = vmatprep.subr.bf16.mxu0 0
      %4554 = vmatpush1.bf16.msra.mxu0 0
      %4555 = vmatprep.subr.bf16.mxu0 0
      %4556 = vmatpush1.bf16.msra.mxu0 0
      %4557 = vmatprep.subr.bf16.mxu0 0
      %4558 = vmatpush1.bf16.msra.mxu0 0
      %4559 = vmatprep.subr.bf16.mxu0 0
      %4560 = vmatpush1.bf16.msra.mxu0 0
      %4561 = vmatprep.subr.bf16.mxu0 0
      %4562 = vmatpush1.bf16.msra.mxu0 0
      %4563 = vmatprep.subr.bf16.mxu0 0
      %4564 = vmatpush1.bf16.msra.mxu0 %v4547
      %4565 = vmatprep.subr.bf16.mxu0 0
      %4566 = vmatpush2.bf16.msra.mxu0 0
      %4567 = vmatprep.subr.bf16.mxu0 0
      %4568 = vmatpush2.bf16.msra.mxu0 0
      %4569 = vmatprep.subr.bf16.mxu0 0
      %4570 = vmatpush2.bf16.msra.mxu0 0
      %4571 = vmatprep.subr.bf16.mxu0 0
      %4572 = vmatpush2.bf16.msra.mxu0 0
      %4573 = vmatprep.subr.bf16.mxu0 0
      %4574 = vmatpush2.bf16.msra.mxu0 0
      %4575 = vmatprep.subr.bf16.mxu0 0
      %4576 = vmatpush2.bf16.msra.mxu0 0
      %4577 = vmatprep.subr.bf16.mxu0 0
      %4578 = vmatpush2.bf16.msra.mxu0 0
      %4579 = vmatprep.subr.bf16.mxu0 0
      %4580 = vmatpush2.bf16.msra.mxu0 0
      %4581 = vmatprep.mubr.bf16.mxu0 0
      %4582 = vmatmul.mubr.bf16.gmra.mxu0 %v4499
      %v4583 = vpop.f32.mrf.mxu0
      %v4584 = vadd.f32 0.0, %v4583
      %v4585 = vpop.f32.mrf.mxu0
      %v4586 = vpop.f32.mrf.mxu0
      %v4587 = vadd.f32 0.0, %v4586
      %v4588 = vpop.f32.mrf.mxu0
      %4589 = vmatprep.mubr.bf16.mxu0 0
      %4590 = vmatmul.mubr.bf16.gmra.mxu0 %v4502
      %v4591 = vpop.f32.mrf.mxu0
      %v4592 = vadd.f32 0.0, %v4591
      %v4593 = vpop.f32.mrf.mxu0
      %v4594 = vpop.f32.mrf.mxu0
      %v4595 = vadd.f32 0.0, %v4594
      %v4596 = vpop.f32.mrf.mxu0
      %4597 = vmatprep.mubr.bf16.mxu0 0
      %4598 = vmatmul.mubr.bf16.gmra.mxu0 %v4505
      %v4599 = vpop.f32.mrf.mxu0
      %v4600 = vadd.f32 0.0, %v4599
      %v4601 = vpop.f32.mrf.mxu0
      %v4602 = vpop.f32.mrf.mxu0
      %v4603 = vadd.f32 0.0, %v4602
      %v4604 = vpop.f32.mrf.mxu0
      %4605 = vmatprep.mubr.bf16.mxu0 0
      %4606 = vmatmul.mubr.bf16.gmra.mxu0 %v4508
      %v4607 = vpop.f32.mrf.mxu0
      %v4608 = vadd.f32 0.0, %v4607
      %v4609 = vpop.f32.mrf.mxu0
      %v4610 = vpop.f32.mrf.mxu0
      %v4611 = vadd.f32 0.0, %v4610
      %v4612 = vpop.f32.mrf.mxu0
      %4613 = vmatprep.mubr.bf16.mxu0 0
      %4614 = vmatmul.mubr.bf16.gmra.mxu0 %v4511
      %v4615 = vpop.f32.mrf.mxu0
      %v4616 = vadd.f32 0.0, %v4615
      %v4617 = vpop.f32.mrf.mxu0
      %v4618 = vpop.f32.mrf.mxu0
      %v4619 = vadd.f32 0.0, %v4618
      %v4620 = vpop.f32.mrf.mxu0
      %4621 = vmatprep.mubr.bf16.mxu0 0
      %4622 = vmatmul.mubr.bf16.gmra.mxu0 %v4514
      %v4623 = vpop.f32.mrf.mxu0
      %v4624 = vadd.f32 0.0, %v4623
      %v4625 = vpop.f32.mrf.mxu0
      %v4626 = vpop.f32.mrf.mxu0
      %v4627 = vadd.f32 0.0, %v4626
      %v4628 = vpop.f32.mrf.mxu0
      %4629 = vmatprep.mubr.bf16.mxu0 0
      %4630 = vmatmul.mubr.bf16.gmra.mxu0 %v4517
      %v4631 = vpop.f32.mrf.mxu0
      %v4632 = vadd.f32 0.0, %v4631
      %v4633 = vpop.f32.mrf.mxu0
      %v4634 = vpop.f32.mrf.mxu0
      %v4635 = vadd.f32 0.0, %v4634
      %v4636 = vpop.f32.mrf.mxu0
      %4637 = vmatprep.mubr.bf16.mxu0 0
      %4638 = vmatmul.mubr.bf16.gmra.mxu0 %v4520
      %v4639 = vpop.f32.mrf.mxu0
      %v4640 = vadd.f32 0.0, %v4639
      %v4641 = vpop.f32.mrf.mxu0
      %v4642 = vpop.f32.mrf.mxu0
      %v4643 = vadd.f32 0.0, %v4642
      %v4644 = vpop.f32.mrf.mxu0
      %4645 = vmatprep.mubr.bf16.mxu0 0
      %4646 = vmatmul.mubr.bf16.gmra.mxu0 %v4523
      %v4647 = vpop.f32.mrf.mxu0
      %v4648 = vadd.f32 0.0, %v4647
      %v4649 = vpop.f32.mrf.mxu0
      %v4650 = vpop.f32.mrf.mxu0
      %v4651 = vadd.f32 0.0, %v4650
      %v4652 = vpop.f32.mrf.mxu0
      %4653 = vmatprep.mubr.bf16.mxu0 0
      %4654 = vmatmul.mubr.bf16.gmra.mxu0 %v4526
      %v4655 = vpop.f32.mrf.mxu0
      %v4656 = vadd.f32 0.0, %v4655
      %v4657 = vpop.f32.mrf.mxu0
      %v4658 = vpop.f32.mrf.mxu0
      %v4659 = vadd.f32 0.0, %v4658
      %v4660 = vpop.f32.mrf.mxu0
      %4661 = vmatprep.mubr.bf16.mxu0 0
      %4662 = vmatmul.mubr.bf16.gmra.mxu0 %v4529
      %v4663 = vpop.f32.mrf.mxu0
      %v4664 = vadd.f32 0.0, %v4663
      %v4665 = vpop.f32.mrf.mxu0
      %v4666 = vpop.f32.mrf.mxu0
      %v4667 = vadd.f32 0.0, %v4666
      %v4668 = vpop.f32.mrf.mxu0
      %4669 = vmatprep.mubr.bf16.mxu0 0
      %4670 = vmatmul.mubr.bf16.gmra.mxu0 %v4532
      %v4671 = vpop.f32.mrf.mxu0
      %v4672 = vadd.f32 0.0, %v4671
      %v4673 = vpop.f32.mrf.mxu0
      %v4674 = vpop.f32.mrf.mxu0
      %v4675 = vadd.f32 0.0, %v4674
      %v4676 = vpop.f32.mrf.mxu0
      %4677 = vmatprep.mubr.bf16.mxu0 0
      %4678 = vmatmul.mubr.bf16.gmra.mxu0 %v4535
      %v4679 = vpop.f32.mrf.mxu0
      %v4680 = vadd.f32 0.0, %v4679
      %v4681 = vpop.f32.mrf.mxu0
      %v4682 = vpop.f32.mrf.mxu0
      %v4683 = vadd.f32 0.0, %v4682
      %v4684 = vpop.f32.mrf.mxu0
      %4685 = vmatprep.mubr.bf16.mxu0 0
      %4686 = vmatmul.mubr.bf16.gmra.mxu0 %v4538
      %v4687 = vpop.f32.mrf.mxu0
      %v4688 = vadd.f32 0.0, %v4687
      %v4689 = vpop.f32.mrf.mxu0
      %v4690 = vpop.f32.mrf.mxu0
      %v4691 = vadd.f32 0.0, %v4690
      %v4692 = vpop.f32.mrf.mxu0
      %4693 = vmatprep.mubr.bf16.mxu0 0
      %4694 = vmatmul.mubr.bf16.gmra.mxu0 %v4541
      %v4695 = vpop.f32.mrf.mxu0
      %v4696 = vadd.f32 0.0, %v4695
      %v4697 = vpop.f32.mrf.mxu0
      %v4698 = vpop.f32.mrf.mxu0
      %v4699 = vadd.f32 0.0, %v4698
      %v4700 = vpop.f32.mrf.mxu0
      %4701 = vmatprep.mubr.bf16.mxu0 0
      %4702 = vmatmul.mubr.bf16.gmra.mxu0 %v4544
      %v4703 = vpop.f32.mrf.mxu0
      %v4704 = vadd.f32 0.0, %v4703
      %v4705 = vpop.f32.mrf.mxu0
      %v4706 = vpop.f32.mrf.mxu0
      %v4707 = vadd.f32 0.0, %v4706
      %v4708 = vpop.f32.mrf.mxu0
      %4709 = vdwg.mxu0
      %v4710 = vadd.f32 %v4384, %v4584
      %v4711 = vadd.f32 %v4385, %v4587
      %v4712 = vadd.f32 %v4386, %v4592
      %v4713 = vadd.f32 %v4387, %v4595
      %v4714 = vadd.f32 %v4388, %v4600
      %v4715 = vadd.f32 %v4389, %v4603
      %v4716 = vadd.f32 %v4390, %v4608
      %v4717 = vadd.f32 %v4391, %v4611
      %v4718 = vadd.f32 %v4392, %v4616
      %v4719 = vadd.f32 %v4393, %v4619
      %v4720 = vadd.f32 %v4394, %v4624
      %v4721 = vadd.f32 %v4395, %v4627
      %v4722 = vadd.f32 %v4396, %v4632
      %v4723 = vadd.f32 %v4397, %v4635
      %v4724 = vadd.f32 %v4398, %v4640
      %v4725 = vadd.f32 %v4399, %v4643
      %v4726 = vadd.f32 %v4400, %v4648
      %v4727 = vadd.f32 %v4401, %v4651
      %v4728 = vadd.f32 %v4402, %v4656
      %v4729 = vadd.f32 %v4403, %v4659
      %v4730 = vadd.f32 %v4404, %v4664
      %v4731 = vadd.f32 %v4405, %v4667
      %v4732 = vadd.f32 %v4406, %v4672
      %v4733 = vadd.f32 %v4407, %v4675
      %v4734 = vadd.f32 %v4408, %v4680
      %v4735 = vadd.f32 %v4409, %v4683
      %v4736 = vadd.f32 %v4410, %v4688
      %v4737 = vadd.f32 %v4411, %v4691
      %v4738 = vadd.f32 %v4412, %v4696
      %v4739 = vadd.f32 %v4413, %v4699
      %v4740 = vadd.f32 %v4414, %v4704
      %v4741 = vadd.f32 %v4415, %v4707
      %v4742 = vld [vmem:[#allocation2 + $0x29] sm:$0xff]
      %v4743 = vld [vmem:[#allocation2 + $0x31] sm:$0xff]
      %v4744 = vld [vmem:[#allocation2 + $0x39] sm:$0xff]
      %v4745 = vld [vmem:[#allocation2 + $0x41] sm:$0xff]
      %v4746 = vld [vmem:[#allocation2 + $0x49] sm:$0xff]
      %v4747 = vld [vmem:[#allocation2 + $0x51] sm:$0xff]
      %v4748 = vld [vmem:[#allocation2 + $0x59] sm:$0xff]
      %v4749 = vld [vmem:[#allocation2 + $0x61] sm:$0xff]
      %v4750 = vld [vmem:[#allocation2 + $0x69] sm:$0xff]
      %v4751 = vld [vmem:[#allocation2 + $0x71] sm:$0xff]
      %v4752 = vld [vmem:[#allocation2 + $0x79] sm:$0xff]
      %v4753 = vld [vmem:[#allocation2 + $0x81] sm:$0xff]
      %v4754 = vld [vmem:[#allocation2 + $0x89] sm:$0xff]
      %v4755 = vld [vmem:[#allocation2 + $0x91] sm:$0xff]
      %v4756 = vld [vmem:[#allocation2 + $0x99] sm:$0xff]
      %v4757 = vld [vmem:[#allocation2 + $0xa1] sm:$0xff]
      %v4758 = vld [vmem:[#allocation2 + $0xa9] sm:$0xff]
      %v4759 = vld [vmem:[#allocation2 + $0xb1] sm:$0xff]
      %v4760 = vld [vmem:[#allocation2 + $0xb9] sm:$0xff]
      %v4761 = vld [vmem:[#allocation2 + $0xc1] sm:$0xff]
      %v4762 = vld [vmem:[#allocation2 + $0xc9] sm:$0xff]
      %v4763 = vld [vmem:[#allocation2 + $0xd1] sm:$0xff]
      %v4764 = vld [vmem:[#allocation2 + $0xd9] sm:$0xff]
      %v4765 = vld [vmem:[#allocation2 + $0xe1] sm:$0xff]
      %v4766 = vld [vmem:[#allocation2 + $0xe9] sm:$0xff]
      %v4767 = vld [vmem:[#allocation2 + $0xf1] sm:$0xff]
      %v4768 = vld [vmem:[#allocation2 + $0xf9] sm:$0xff]
      %v4769 = vld [vmem:[#allocation2 + $0x101] sm:$0xff]
      %v4770 = vld [vmem:[#allocation2 + $0x109] sm:$0xff]
      %v4771 = vld [vmem:[#allocation2 + $0x111] sm:$0xff]
      %v4772 = vld [vmem:[#allocation2 + $0x119] sm:$0xff]
      %v4773 = vld [vmem:[#allocation2 + $0x121] sm:$0xff]
      %4774 = vset.pattern.permute.xlu0 3
      %4775 = vperm.xlu0 %4774, %v1494
      %v4776 = vpop.permute.xlu0 %4775
      %4778 = vset.pattern.permute.xlu0 3
      %4779 = vperm.xlu0 %4778, %v1495
      %v4780 = vpop.permute.xlu0 %4779
      %4782 = vset.pattern.permute.xlu0 3
      %4783 = vperm.xlu0 %4782, %v1496
      %v4784 = vpop.permute.xlu0 %4783
      %4786 = vset.pattern.permute.xlu0 3
      %4787 = vperm.xlu0 %4786, %v1497
      %v4788 = vpop.permute.xlu0 %4787
      %4790 = vset.pattern.permute.xlu0 3
      %4791 = vperm.xlu0 %4790, %v1498
      %v4792 = vpop.permute.xlu0 %4791
      %4794 = vset.pattern.permute.xlu0 3
      %4795 = vperm.xlu0 %4794, %v1499
      %v4796 = vpop.permute.xlu0 %4795
      %4798 = vset.pattern.permute.xlu0 3
      %4799 = vperm.xlu0 %4798, %v1500
      %v4800 = vpop.permute.xlu0 %4799
      %4802 = vset.pattern.permute.xlu0 3
      %4803 = vperm.xlu0 %4802, %v1501
      %v4804 = vpop.permute.xlu0 %4803
      %4806 = vset.pattern.permute.xlu0 3
      %4807 = vperm.xlu0 %4806, %v1502
      %v4808 = vpop.permute.xlu0 %4807
      %4810 = vset.pattern.permute.xlu0 3
      %4811 = vperm.xlu0 %4810, %v1503
      %v4812 = vpop.permute.xlu0 %4811
      %4814 = vset.pattern.permute.xlu0 3
      %4815 = vperm.xlu0 %4814, %v1504
      %v4816 = vpop.permute.xlu0 %4815
      %4818 = vset.pattern.permute.xlu0 3
      %4819 = vperm.xlu0 %4818, %v1505
      %v4820 = vpop.permute.xlu0 %4819
      %4822 = vset.pattern.permute.xlu0 3
      %4823 = vperm.xlu0 %4822, %v1506
      %v4824 = vpop.permute.xlu0 %4823
      %4826 = vset.pattern.permute.xlu0 3
      %4827 = vperm.xlu0 %4826, %v1507
      %v4828 = vpop.permute.xlu0 %4827
      %4830 = vset.pattern.permute.xlu0 3
      %4831 = vperm.xlu0 %4830, %v1508
      %v4832 = vpop.permute.xlu0 %4831
      %4834 = vset.pattern.permute.xlu0 3
      %4835 = vperm.xlu0 %4834, %v1509
      %v4836 = vpop.permute.xlu0 %4835
      %4838 = vset.pattern.permute.xlu0 3
      %4839 = vperm.xlu0 %4838, %v1510
      %v4840 = vpop.permute.xlu0 %4839
      %4842 = vset.pattern.permute.xlu0 3
      %4843 = vperm.xlu0 %4842, %v1511
      %v4844 = vpop.permute.xlu0 %4843
      %4846 = vset.pattern.permute.xlu0 3
      %4847 = vperm.xlu0 %4846, %v1512
      %v4848 = vpop.permute.xlu0 %4847
      %4850 = vset.pattern.permute.xlu0 3
      %4851 = vperm.xlu0 %4850, %v1513
      %v4852 = vpop.permute.xlu0 %4851
      %4854 = vset.pattern.permute.xlu0 3
      %4855 = vperm.xlu0 %4854, %v1514
      %v4856 = vpop.permute.xlu0 %4855
      %4858 = vset.pattern.permute.xlu0 3
      %4859 = vperm.xlu0 %4858, %v1515
      %v4860 = vpop.permute.xlu0 %4859
      %4862 = vset.pattern.permute.xlu0 3
      %4863 = vperm.xlu0 %4862, %v1516
      %v4864 = vpop.permute.xlu0 %4863
      %4866 = vset.pattern.permute.xlu0 3
      %4867 = vperm.xlu0 %4866, %v1517
      %v4868 = vpop.permute.xlu0 %4867
      %4870 = vset.pattern.permute.xlu0 3
      %4871 = vperm.xlu0 %4870, %v1518
      %v4872 = vpop.permute.xlu0 %4871
      %4874 = vset.pattern.permute.xlu0 3
      %4875 = vperm.xlu0 %4874, %v1519
      %v4876 = vpop.permute.xlu0 %4875
      %4878 = vset.pattern.permute.xlu0 3
      %4879 = vperm.xlu0 %4878, %v1520
      %v4880 = vpop.permute.xlu0 %4879
      %4882 = vset.pattern.permute.xlu0 3
      %4883 = vperm.xlu0 %4882, %v1521
      %v4884 = vpop.permute.xlu0 %4883
      %4886 = vset.pattern.permute.xlu0 3
      %4887 = vperm.xlu0 %4886, %v1522
      %v4888 = vpop.permute.xlu0 %4887
      %4890 = vset.pattern.permute.xlu0 3
      %4891 = vperm.xlu0 %4890, %v1523
      %v4892 = vpop.permute.xlu0 %4891
      %4894 = vset.pattern.permute.xlu0 3
      %4895 = vperm.xlu0 %4894, %v1524
      %v4896 = vpop.permute.xlu0 %4895
      %4898 = vset.pattern.permute.xlu0 3
      %4899 = vperm.xlu0 %4898, %v1525
      %v4900 = vpop.permute.xlu0 %4899
      %v4902 = vmul.f32 %v4742, %v4776
      %v4903 = vmul.f32 %v4743, %v4780
      %v4904 = vmul.f32 %v4744, %v4784
      %v4905 = vmul.f32 %v4745, %v4788
      %v4906 = vmul.f32 %v4746, %v4792
      %v4907 = vmul.f32 %v4747, %v4796
      %v4908 = vmul.f32 %v4748, %v4800
      %v4909 = vmul.f32 %v4749, %v4804
      %v4910 = vmul.f32 %v4750, %v4808
      %v4911 = vmul.f32 %v4751, %v4812
      %v4912 = vmul.f32 %v4752, %v4816
      %v4913 = vmul.f32 %v4753, %v4820
      %v4914 = vmul.f32 %v4754, %v4824
      %v4915 = vmul.f32 %v4755, %v4828
      %v4916 = vmul.f32 %v4756, %v4832
      %v4917 = vmul.f32 %v4757, %v4836
      %v4918 = vmul.f32 %v4758, %v4840
      %v4919 = vmul.f32 %v4759, %v4844
      %v4920 = vmul.f32 %v4760, %v4848
      %v4921 = vmul.f32 %v4761, %v4852
      %v4922 = vmul.f32 %v4762, %v4856
      %v4923 = vmul.f32 %v4763, %v4860
      %v4924 = vmul.f32 %v4764, %v4864
      %v4925 = vmul.f32 %v4765, %v4868
      %v4926 = vmul.f32 %v4766, %v4872
      %v4927 = vmul.f32 %v4767, %v4876
      %v4928 = vmul.f32 %v4768, %v4880
      %v4929 = vmul.f32 %v4769, %v4884
      %v4930 = vmul.f32 %v4770, %v4888
      %v4931 = vmul.f32 %v4771, %v4892
      %v4932 = vmul.f32 %v4772, %v4896
      %v4933 = vmul.f32 %v4773, %v4900
      %v4934 = vpack.c.bf16 %v4903, %v4902
      %v4935 = vpack.c.bf16 %v4905, %v4904
      %v4936 = vpack.c.bf16 %v4907, %v4906
      %v4937 = vpack.c.bf16 %v4909, %v4908
      %v4938 = vpack.c.bf16 %v4911, %v4910
      %v4939 = vpack.c.bf16 %v4913, %v4912
      %v4940 = vpack.c.bf16 %v4915, %v4914
      %v4941 = vpack.c.bf16 %v4917, %v4916
      %v4942 = vpack.c.bf16 %v4919, %v4918
      %v4943 = vpack.c.bf16 %v4921, %v4920
      %v4944 = vpack.c.bf16 %v4923, %v4922
      %v4945 = vpack.c.bf16 %v4925, %v4924
      %v4946 = vpack.c.bf16 %v4927, %v4926
      %v4947 = vpack.c.bf16 %v4929, %v4928
      %v4948 = vpack.c.bf16 %v4931, %v4930
      %v4949 = vpack.c.bf16 %v4933, %v4932
      %s4950 = scalar_lea.vmem %s1, 16
      %v4951 = vld [vmem:[%s4950] sm:$0x3]
      %v4953 = vsel %vm175, %v4934, 0
      %v4956 = vsel %vm175, %v4935, 0
      %v4959 = vsel %vm175, %v4936, 0
      %v4962 = vsel %vm175, %v4937, 0
      %v4965 = vsel %vm175, %v4938, 0
      %v4968 = vsel %vm175, %v4939, 0
      %v4971 = vsel %vm175, %v4940, 0
      %v4974 = vsel %vm175, %v4941, 0
      %v4977 = vsel %vm175, %v4942, 0
      %v4980 = vsel %vm175, %v4943, 0
      %v4983 = vsel %vm175, %v4944, 0
      %v4986 = vsel %vm175, %v4945, 0
      %v4989 = vsel %vm175, %v4946, 0
      %v4992 = vsel %vm175, %v4947, 0
      %v4995 = vsel %vm175, %v4948, 0
      %v4998 = vsel %vm175, %v4949, 0
      %v5001 = vsel %vm1897, %v4951, 0
      %5003 = vmatprep.subr.bf16.mxu0 0
      %5004 = vmatpush1.bf16.msra.mxu0 0
      %5005 = vmatprep.subr.bf16.mxu0 0
      %5006 = vmatpush1.bf16.msra.mxu0 0
      %5007 = vmatprep.subr.bf16.mxu0 0
      %5008 = vmatpush1.bf16.msra.mxu0 0
      %5009 = vmatprep.subr.bf16.mxu0 0
      %5010 = vmatpush1.bf16.msra.mxu0 0
      %5011 = vmatprep.subr.bf16.mxu0 0
      %5012 = vmatpush1.bf16.msra.mxu0 0
      %5013 = vmatprep.subr.bf16.mxu0 0
      %5014 = vmatpush1.bf16.msra.mxu0 0
      %5015 = vmatprep.subr.bf16.mxu0 0
      %5016 = vmatpush1.bf16.msra.mxu0 0
      %5017 = vmatprep.subr.bf16.mxu0 0
      %5018 = vmatpush1.bf16.msra.mxu0 %v5001
      %5019 = vmatprep.subr.bf16.mxu0 0
      %5020 = vmatpush2.bf16.msra.mxu0 0
      %5021 = vmatprep.subr.bf16.mxu0 0
      %5022 = vmatpush2.bf16.msra.mxu0 0
      %5023 = vmatprep.subr.bf16.mxu0 0
      %5024 = vmatpush2.bf16.msra.mxu0 0
      %5025 = vmatprep.subr.bf16.mxu0 0
      %5026 = vmatpush2.bf16.msra.mxu0 0
      %5027 = vmatprep.subr.bf16.mxu0 0
      %5028 = vmatpush2.bf16.msra.mxu0 0
      %5029 = vmatprep.subr.bf16.mxu0 0
      %5030 = vmatpush2.bf16.msra.mxu0 0
      %5031 = vmatprep.subr.bf16.mxu0 0
      %5032 = vmatpush2.bf16.msra.mxu0 0
      %5033 = vmatprep.subr.bf16.mxu0 0
      %5034 = vmatpush2.bf16.msra.mxu0 0
      %5035 = vmatprep.mubr.bf16.mxu0 0
      %5036 = vmatmul.mubr.bf16.gmra.mxu0 %v4953
      %v5037 = vpop.f32.mrf.mxu0
      %v5038 = vadd.f32 0.0, %v5037
      %v5039 = vpop.f32.mrf.mxu0
      %v5040 = vpop.f32.mrf.mxu0
      %v5041 = vadd.f32 0.0, %v5040
      %v5042 = vpop.f32.mrf.mxu0
      %5043 = vmatprep.mubr.bf16.mxu0 0
      %5044 = vmatmul.mubr.bf16.gmra.mxu0 %v4956
      %v5045 = vpop.f32.mrf.mxu0
      %v5046 = vadd.f32 0.0, %v5045
      %v5047 = vpop.f32.mrf.mxu0
      %v5048 = vpop.f32.mrf.mxu0
      %v5049 = vadd.f32 0.0, %v5048
      %v5050 = vpop.f32.mrf.mxu0
      %5051 = vmatprep.mubr.bf16.mxu0 0
      %5052 = vmatmul.mubr.bf16.gmra.mxu0 %v4959
      %v5053 = vpop.f32.mrf.mxu0
      %v5054 = vadd.f32 0.0, %v5053
      %v5055 = vpop.f32.mrf.mxu0
      %v5056 = vpop.f32.mrf.mxu0
      %v5057 = vadd.f32 0.0, %v5056
      %v5058 = vpop.f32.mrf.mxu0
      %5059 = vmatprep.mubr.bf16.mxu0 0
      %5060 = vmatmul.mubr.bf16.gmra.mxu0 %v4962
      %v5061 = vpop.f32.mrf.mxu0
      %v5062 = vadd.f32 0.0, %v5061
      %v5063 = vpop.f32.mrf.mxu0
      %v5064 = vpop.f32.mrf.mxu0
      %v5065 = vadd.f32 0.0, %v5064
      %v5066 = vpop.f32.mrf.mxu0
      %5067 = vmatprep.mubr.bf16.mxu0 0
      %5068 = vmatmul.mubr.bf16.gmra.mxu0 %v4965
      %v5069 = vpop.f32.mrf.mxu0
      %v5070 = vadd.f32 0.0, %v5069
      %v5071 = vpop.f32.mrf.mxu0
      %v5072 = vpop.f32.mrf.mxu0
      %v5073 = vadd.f32 0.0, %v5072
      %v5074 = vpop.f32.mrf.mxu0
      %5075 = vmatprep.mubr.bf16.mxu0 0
      %5076 = vmatmul.mubr.bf16.gmra.mxu0 %v4968
      %v5077 = vpop.f32.mrf.mxu0
      %v5078 = vadd.f32 0.0, %v5077
      %v5079 = vpop.f32.mrf.mxu0
      %v5080 = vpop.f32.mrf.mxu0
      %v5081 = vadd.f32 0.0, %v5080
      %v5082 = vpop.f32.mrf.mxu0
      %5083 = vmatprep.mubr.bf16.mxu0 0
      %5084 = vmatmul.mubr.bf16.gmra.mxu0 %v4971
      %v5085 = vpop.f32.mrf.mxu0
      %v5086 = vadd.f32 0.0, %v5085
      %v5087 = vpop.f32.mrf.mxu0
      %v5088 = vpop.f32.mrf.mxu0
      %v5089 = vadd.f32 0.0, %v5088
      %v5090 = vpop.f32.mrf.mxu0
      %5091 = vmatprep.mubr.bf16.mxu0 0
      %5092 = vmatmul.mubr.bf16.gmra.mxu0 %v4974
      %v5093 = vpop.f32.mrf.mxu0
      %v5094 = vadd.f32 0.0, %v5093
      %v5095 = vpop.f32.mrf.mxu0
      %v5096 = vpop.f32.mrf.mxu0
      %v5097 = vadd.f32 0.0, %v5096
      %v5098 = vpop.f32.mrf.mxu0
      %5099 = vmatprep.mubr.bf16.mxu0 0
      %5100 = vmatmul.mubr.bf16.gmra.mxu0 %v4977
      %v5101 = vpop.f32.mrf.mxu0
      %v5102 = vadd.f32 0.0, %v5101
      %v5103 = vpop.f32.mrf.mxu0
      %v5104 = vpop.f32.mrf.mxu0
      %v5105 = vadd.f32 0.0, %v5104
      %v5106 = vpop.f32.mrf.mxu0
      %5107 = vmatprep.mubr.bf16.mxu0 0
      %5108 = vmatmul.mubr.bf16.gmra.mxu0 %v4980
      %v5109 = vpop.f32.mrf.mxu0
      %v5110 = vadd.f32 0.0, %v5109
      %v5111 = vpop.f32.mrf.mxu0
      %v5112 = vpop.f32.mrf.mxu0
      %v5113 = vadd.f32 0.0, %v5112
      %v5114 = vpop.f32.mrf.mxu0
      %5115 = vmatprep.mubr.bf16.mxu0 0
      %5116 = vmatmul.mubr.bf16.gmra.mxu0 %v4983
      %v5117 = vpop.f32.mrf.mxu0
      %v5118 = vadd.f32 0.0, %v5117
      %v5119 = vpop.f32.mrf.mxu0
      %v5120 = vpop.f32.mrf.mxu0
      %v5121 = vadd.f32 0.0, %v5120
      %v5122 = vpop.f32.mrf.mxu0
      %5123 = vmatprep.mubr.bf16.mxu0 0
      %5124 = vmatmul.mubr.bf16.gmra.mxu0 %v4986
      %v5125 = vpop.f32.mrf.mxu0
      %v5126 = vadd.f32 0.0, %v5125
      %v5127 = vpop.f32.mrf.mxu0
      %v5128 = vpop.f32.mrf.mxu0
      %v5129 = vadd.f32 0.0, %v5128
      %v5130 = vpop.f32.mrf.mxu0
      %5131 = vmatprep.mubr.bf16.mxu0 0
      %5132 = vmatmul.mubr.bf16.gmra.mxu0 %v4989
      %v5133 = vpop.f32.mrf.mxu0
      %v5134 = vadd.f32 0.0, %v5133
      %v5135 = vpop.f32.mrf.mxu0
      %v5136 = vpop.f32.mrf.mxu0
      %v5137 = vadd.f32 0.0, %v5136
      %v5138 = vpop.f32.mrf.mxu0
      %5139 = vmatprep.mubr.bf16.mxu0 0
      %5140 = vmatmul.mubr.bf16.gmra.mxu0 %v4992
      %v5141 = vpop.f32.mrf.mxu0
      %v5142 = vadd.f32 0.0, %v5141
      %v5143 = vpop.f32.mrf.mxu0
      %v5144 = vpop.f32.mrf.mxu0
      %v5145 = vadd.f32 0.0, %v5144
      %v5146 = vpop.f32.mrf.mxu0
      %5147 = vmatprep.mubr.bf16.mxu0 0
      %5148 = vmatmul.mubr.bf16.gmra.mxu0 %v4995
      %v5149 = vpop.f32.mrf.mxu0
      %v5150 = vadd.f32 0.0, %v5149
      %v5151 = vpop.f32.mrf.mxu0
      %v5152 = vpop.f32.mrf.mxu0
      %v5153 = vadd.f32 0.0, %v5152
      %v5154 = vpop.f32.mrf.mxu0
      %5155 = vmatprep.mubr.bf16.mxu0 0
      %5156 = vmatmul.mubr.bf16.gmra.mxu0 %v4998
      %v5157 = vpop.f32.mrf.mxu0
      %v5158 = vadd.f32 0.0, %v5157
      %v5159 = vpop.f32.mrf.mxu0
      %v5160 = vpop.f32.mrf.mxu0
      %v5161 = vadd.f32 0.0, %v5160
      %v5162 = vpop.f32.mrf.mxu0
      %5163 = vdwg.mxu0
      %v5164 = vadd.f32 %v4710, %v5038
      %v5165 = vadd.f32 %v4711, %v5041
      %v5166 = vadd.f32 %v4712, %v5046
      %v5167 = vadd.f32 %v4713, %v5049
      %v5168 = vadd.f32 %v4714, %v5054
      %v5169 = vadd.f32 %v4715, %v5057
      %v5170 = vadd.f32 %v4716, %v5062
      %v5171 = vadd.f32 %v4717, %v5065
      %v5172 = vadd.f32 %v4718, %v5070
      %v5173 = vadd.f32 %v4719, %v5073
      %v5174 = vadd.f32 %v4720, %v5078
      %v5175 = vadd.f32 %v4721, %v5081
      %v5176 = vadd.f32 %v4722, %v5086
      %v5177 = vadd.f32 %v4723, %v5089
      %v5178 = vadd.f32 %v4724, %v5094
      %v5179 = vadd.f32 %v4725, %v5097
      %v5180 = vadd.f32 %v4726, %v5102
      %v5181 = vadd.f32 %v4727, %v5105
      %v5182 = vadd.f32 %v4728, %v5110
      %v5183 = vadd.f32 %v4729, %v5113
      %v5184 = vadd.f32 %v4730, %v5118
      %v5185 = vadd.f32 %v4731, %v5121
      %v5186 = vadd.f32 %v4732, %v5126
      %v5187 = vadd.f32 %v4733, %v5129
      %v5188 = vadd.f32 %v4734, %v5134
      %v5189 = vadd.f32 %v4735, %v5137
      %v5190 = vadd.f32 %v4736, %v5142
      %v5191 = vadd.f32 %v4737, %v5145
      %v5192 = vadd.f32 %v4738, %v5150
      %v5193 = vadd.f32 %v4739, %v5153
      %v5194 = vadd.f32 %v4740, %v5158
      %v5195 = vadd.f32 %v4741, %v5161
      %vm5196 = vcmask 64512
      %5197 = vst.msk [vmem:[%s172] sm:$0xff] %vm5196, %v5164
      %5198 = vst.msk [vmem:[%s172 + $0x8] sm:$0xff] %vm5196, %v5165
      %5199 = vst.msk [vmem:[%s172 + $0x10] sm:$0xff] %vm5196, %v5166
      %5200 = vst.msk [vmem:[%s172 + $0x18] sm:$0xff] %vm5196, %v5167
      %5201 = vst.msk [vmem:[%s172 + $0x20] sm:$0xff] %vm5196, %v5168
      %5202 = vst.msk [vmem:[%s172 + $0x28] sm:$0xff] %vm5196, %v5169
      %5203 = vst.msk [vmem:[%s172 + $0x30] sm:$0xff] %vm5196, %v5170
      %5204 = vst.msk [vmem:[%s172 + $0x38] sm:$0xff] %vm5196, %v5171
      %5205 = vst.msk [vmem:[%s172 + $0x40] sm:$0xff] %vm5196, %v5172
      %5206 = vst.msk [vmem:[%s172 + $0x48] sm:$0xff] %vm5196, %v5173
      %5207 = vst.msk [vmem:[%s172 + $0x50] sm:$0xff] %vm5196, %v5174
      %5208 = vst.msk [vmem:[%s172 + $0x58] sm:$0xff] %vm5196, %v5175
      %5209 = vst.msk [vmem:[%s172 + $0x60] sm:$0xff] %vm5196, %v5176
      %5210 = vst.msk [vmem:[%s172 + $0x68] sm:$0xff] %vm5196, %v5177
      %5211 = vst.msk [vmem:[%s172 + $0x70] sm:$0xff] %vm5196, %v5178
      %5212 = vst.msk [vmem:[%s172 + $0x78] sm:$0xff] %vm5196, %v5179
      %5213 = vst.msk [vmem:[%s172 + $0x80] sm:$0xff] %vm5196, %v5180
      %5214 = vst.msk [vmem:[%s172 + $0x88] sm:$0xff] %vm5196, %v5181
      %5215 = vst.msk [vmem:[%s172 + $0x90] sm:$0xff] %vm5196, %v5182
      %5216 = vst.msk [vmem:[%s172 + $0x98] sm:$0xff] %vm5196, %v5183
      %5217 = vst.msk [vmem:[%s172 + $0xa0] sm:$0xff] %vm5196, %v5184
      %5218 = vst.msk [vmem:[%s172 + $0xa8] sm:$0xff] %vm5196, %v5185
      %5219 = vst.msk [vmem:[%s172 + $0xb0] sm:$0xff] %vm5196, %v5186
      %5220 = vst.msk [vmem:[%s172 + $0xb8] sm:$0xff] %vm5196, %v5187
      %5221 = vst.msk [vmem:[%s172 + $0xc0] sm:$0xff] %vm5196, %v5188
      %5222 = vst.msk [vmem:[%s172 + $0xc8] sm:$0xff] %vm5196, %v5189
      %5223 = vst.msk [vmem:[%s172 + $0xd0] sm:$0xff] %vm5196, %v5190
      %5224 = vst.msk [vmem:[%s172 + $0xd8] sm:$0xff] %vm5196, %v5191
      %5225 = vst.msk [vmem:[%s172 + $0xe0] sm:$0xff] %vm5196, %v5192
      %5226 = vst.msk [vmem:[%s172 + $0xe8] sm:$0xff] %vm5196, %v5193
      %5227 = vst.msk [vmem:[%s172 + $0xf0] sm:$0xff] %vm5196, %v5194
      %5228 = vst.msk [vmem:[%s172 + $0xf8] sm:$0xff] %vm5196, %v5195
      %s5229 = smul.u32 32, %s14
      %p5230 = scmp.lt.s32.totalorder %s5229, 63
      %s5231 = scalar_select %p5230, %s5229, 63
      %s5232 = smul.addr %s5231, 8
      %s5233 = scalar_lea.vmem %s3, %s5232
      // Predicated region
      $region33: #{tpu_custom_call.1} parent=31 // pred_check
        %p5234 = pneg %p100
      $region34: #{tpu_custom_call.1} parent=31 // pred_check_branch
        %5236 = sbr.rel (%p5234) target = $region36
      $region35: #{tpu_custom_call.1} parent=31 // pred_region
        %s5237 = smul.u32 32, %s14
      $region36: #{tpu_custom_call.1} parent=31 // pred_fallthru
        _
    $region32: #{tpu_custom_call.1} parent=5 // pred_fallthru
      _
    %p5238 = scmp.le.s32.totalorder 2, %s9
    // Predicated region
    $region37: #{tpu_custom_call.1} parent=5 // pred_check
      %p5239 = pneg %p5238
    $region38: #{tpu_custom_call.1} parent=5 // pred_check_branch
      %5241 = sbr.rel (%p5239) target = $region40
    $region39: #{tpu_custom_call.1} parent=5 // pred_region
      %s5242 = ssub.s32 %s9, 2
      // Predicated region
      $region41: #{tpu_custom_call.1} parent=39 // pred_check
        %p5243 = pneg %p106
      $region42: #{tpu_custom_call.1} parent=39 // pred_check_branch
        %5245 = sbr.rel (%p5243) target = $region44
      $region43: #{tpu_custom_call.1} parent=39 // pred_region
        %s5246 = smul.u32 32, %s15
        %p5247 = scmp.lt.s32.totalorder %s5246, 63
        %s5248 = scalar_select %p5247, %s5246, 63
        %s5249 = smul.addr %s5248, 8
        %s5250 = scalar_lea.vmem %s3, %s5249
      $region44: #{tpu_custom_call.1} parent=39 // pred_fallthru
        _
    $region40: #{tpu_custom_call.1} parent=5 // pred_fallthru
      _
  $region6: #{tpu_custom_call.1} parent=0 // loop_footer
    %s13 = sadd.s32 1, %s9
  $region7: #{tpu_custom_call.1} parent=0 // loop_footer_branch
    %8 = sbr.rel target = $region3
  $region8: #{tpu_custom_call.1} parent=0 // loop_exit
    _

</llo_original>
